<compile_context>
chip_gen: v7x
topology: tpu7x:2x2x1
jax: 0.10.0
libtpu: 0.0.40
codegen_flags: <defaults>
</compile_context>

<pallas_src>
import jax
import jax.numpy as jnp
from jax.experimental import pallas as pl
from jax.experimental.pallas import tpu as pltpu


# ---------------------------------------------------------------------------
# Tiling helpers
# ---------------------------------------------------------------------------
def _largest_divisor(total, unit, cap):
    """Largest divisor of `total` that is a multiple of `unit` and <= cap (or None)."""
    best = None
    cap = min(cap, total)
    t = unit
    while t <= cap:
        if total % t == 0:
            best = t
        t += unit
    return best


def _pick_excite_tiles(R, P, itemsize, target_bytes):
    """Block (TR, TP) for the (R, P) = (N*C_out, Hb*Wb) excite stream.

    Byte-budget policy (>= several MiB per block, independent of C_out) so the
    ~0.35us per-grid-step overhead is amortized; full rows preferred (contiguous DMA).
    """
    if R * P * itemsize <= target_bytes:
        return R, P                                   # single block covers everything
    row_bytes = P * itemsize
    if 8 * row_bytes <= target_bytes:
        # Full-width rows, tile only the row axis.
        cap_rows = target_bytes // row_bytes
        TR = _largest_divisor(R, 8, cap_rows)
        return (TR if TR is not None else R), P
    # Rows are very long: minimal 8-row slab, tile the lane axis as well.
    TR = 8 if R % 8 == 0 else R
    cap_lanes = max(128, target_bytes // (TR * itemsize))
    TP = _largest_divisor(P, 128, cap_lanes)
    return TR, (TP if TP is not None else P)


def _pick_channel_tile(C_in, per_channel_bytes, target_bytes):
    """Channel tile for the gate kernel's contraction axis (K = 16*C_in)."""
    if C_in < 16 or C_in * per_channel_bytes <= target_bytes:
        return C_in
    cap = max(8, target_bytes // max(per_channel_bytes, 1))
    t = _largest_divisor(C_in, 8, cap)
    return t if t is not None else C_in


# ---------------------------------------------------------------------------
# Kernel 1: squeeze path -> per-(batch, channel) f32 gate.
# ---------------------------------------------------------------------------
def se_gate_kernel(xs_ref, w1_ref, w2_ref, g_ref, acc_ref):
    # xs_ref : (N, TC, H, W)       native-NCHW channel tile of feat_small
    # w1_ref : (4, 4, TC, C_out)   spectrally-normed 4x4 conv weight, (kh, kw, ci, co)
    # w2_ref : (C_out, C_out)      spectrally-normed 1x1 conv weight, (ci, co)
    # g_ref  : (N, C_out) f32      sigmoid gate (written on the last channel tile)
    # acc_ref: (N, C_out) f32      VMEM accumulator across channel tiles
    c = pl.program_id(0)

    @pl.when(c == 0)
    def _():
        acc_ref[...] = jnp.zeros_like(acc_ref)

    H = xs_ref.shape[2]
    W = xs_ref.shape[3]
    H4, W4 = H // 4, W // 4
    inv = 1.0 / float(H4 * W4)

    acc = acc_ref[...]
    # AdaptiveAvgPool2d(4) + Conv2d(ch_in, ch_out, 4, 1, 0): for each of the 16 output
    # bins, mean-pool the bin (reduce over the last two dims) and accumulate a small
    # (N, TC) @ (TC, C_out) matmul.  No reshapes/transposes of feat_small required.
    for i in range(4):
        for j in range(4):
            blk = xs_ref[:, :, pl.ds(i * H4, H4), pl.ds(j * W4, W4)]
            blk = blk.astype(jnp.float32)                      # (N, TC, H4, W4)
            pooled = blk.sum(axis=3).sum(axis=2) * inv         # (N, TC)
            w_ij = w1_ref[i, j, :, :].astype(jnp.float32)      # (TC, C_out)
            acc = acc + jnp.dot(pooled, w_ij, preferred_element_type=jnp.float32)
    acc_ref[...] = acc

    @pl.when(c == pl.num_programs(0) - 1)
    def _():
        z1 = acc_ref[...]
        h = jnp.where(z1 > 0, z1, 0.1 * z1)                    # LeakyReLU(0.1)
        z2 = jnp.dot(h, w2_ref[...].astype(jnp.float32),
                     preferred_element_type=jnp.float32)       # Conv2d(ch_out, ch_out, 1)
        g_ref[...] = 1.0 / (1.0 + jnp.exp(-z2))                # Sigmoid, kept in f32


# ---------------------------------------------------------------------------
# Kernel 2: excite -> feat_big * gate, 2D lane/sublane-dense tiles.
# ---------------------------------------------------------------------------
def se_excite_kernel(g_ref, fb_ref, out_ref):
    # g_ref  : (TR, 1)  f32 gate rows (row = flattened (n, c_out))
    # fb_ref : (TR, TP) tile of feat_big
    out_ref[...] = (fb_ref[...] * g_ref[...]).astype(out_ref.dtype)


# ---------------------------------------------------------------------------
# Wrapper
# ---------------------------------------------------------------------------
def se_block(feat_small, feat_big, w1, w2):
    """feat_small: (N, C_in, H, W); feat_big: (N, C_out, Hb, Wb); NCHW."""
    N, C_in, H, W = feat_small.shape
    Nb, C_out, Hb, Wb = feat_big.shape
    assert N == Nb
    # TODO(synk): general AdaptiveAvgPool2d with H or W not divisible by 4 uses
    # unequal bins; here we require divisibility (exact blockwise mean).
    assert H % 4 == 0 and W % 4 == 0

    x_isz = jnp.dtype(feat_small.dtype).itemsize
    w_isz = jnp.dtype(w1.dtype).itemsize
    b_isz = jnp.dtype(feat_big.dtype).itemsize

    # ---- squeeze: gate = sigmoid(W2 . lrelu(W1 . avgpool4(feat_small))) ----------
    # Tiny one-off weight relayouts (no feature-map copies).
    w1_t = jnp.transpose(w1, (2, 3, 1, 0))                     # (4, 4, C_in, C_out)
    w2_t = w2.reshape(C_out, C_out).T                          # (C_out_in, C_out)

    per_channel_bytes = N * H * W * x_isz + 16 * C_out * w_isz
    TC = _pick_channel_tile(C_in, per_channel_bytes, target_bytes=6 << 20)
    num_c = C_in // TC

    gate_block_bytes = N * TC * H * W * x_isz + 16 * TC * C_out * w_isz
    gate_vmem = (2 * gate_block_bytes + 2 * C_out * C_out * w_isz
                 + 3 * N * C_out * 4 + (2 << 20))
    gate_vmem = int(min(max(gate_vmem, 8 << 20), 48 << 20))

    gate = pl.pallas_call(
        se_gate_kernel,
        out_shape=jax.ShapeDtypeStruct((N, C_out), jnp.float32),
        grid_spec=pltpu.PrefetchScalarGridSpec(
            num_scalar_prefetch=0,
            grid=(num_c,),
            in_specs=[
                pl.BlockSpec((N, TC, H, W), lambda c: (0, c, 0, 0)),
                pl.BlockSpec((4, 4, TC, C_out), lambda c: (0, 0, c, 0)),
                pl.BlockSpec((C_out, C_out), lambda c: (0, 0)),
            ],
            out_specs=pl.BlockSpec((N, C_out), lambda c: (0, 0)),
            scratch_shapes=[pltpu.VMEM((N, C_out), jnp.float32)],
        ),
        compiler_params=pltpu.CompilerParams(
            dimension_semantics=("arbitrary",),
            vmem_limit_bytes=gate_vmem),
    )(feat_small, w1_t, w2_t)

    # ---- excite: feat_big * gate -------------------------------------------------
    # Flatten to 2D so sublanes are fully packed even for small C_out and the block
    # can grow in both dims.  Reshapes of contiguous NCHW dims are free (no copy).
    R = N * C_out
    P = Hb * Wb
    fb2 = feat_big.reshape(R, P)
    g2 = gate.reshape(R, 1)

    # ~8 MiB blocks amortize the per-grid-step overhead (also small tax vs v7x's
    # 3.2 TB/s HBM); 4 double-buffered blocks + gate + headroom stays < 48 MiB,
    # safe on v7x (64 MiB physical VMEM) as well as v5e/v6e (128 MiB).
    TR, TP = _pick_excite_tiles(R, P, b_isz, target_bytes=8 << 20)
    num_r = R // TR
    num_p = P // TP

    block_bytes = TR * TP * b_isz
    excite_vmem = 4 * block_bytes + 4 * TR * 4 + (2 << 20)
    excite_vmem = int(min(max(excite_vmem, 8 << 20), 48 << 20))

    # TODO(synk): on v7x (2 TCs/chip) the leading grid axis could be marked
    # pltpu.CORE_PARALLEL after a chip-version check for an up-to-2x split.
    out = pl.pallas_call(
        se_excite_kernel,
        out_shape=jax.ShapeDtypeStruct((R, P), feat_big.dtype),
        grid_spec=pltpu.PrefetchScalarGridSpec(
            num_scalar_prefetch=0,
            grid=(num_r, num_p),
            in_specs=[
                pl.BlockSpec((TR, 1), lambda r, p: (r, 0)),
                pl.BlockSpec((TR, TP), lambda r, p: (r, p)),
            ],
            out_specs=pl.BlockSpec((TR, TP), lambda r, p: (r, p)),
        ),
        compiler_params=pltpu.CompilerParams(
            dimension_semantics=("parallel", "parallel"),
            vmem_limit_bytes=excite_vmem),
    )(g2, fb2)
    return out.reshape(N, C_out, Hb, Wb)


# ---------------------------------------------------------------------------
# Parameter prep & pure-JAX reference (validation only)
# ---------------------------------------------------------------------------
def spectral_normalize(w, n_iters=30):
    """Spectral norm of the conv weight viewed as (out, -1), like torch spectral_norm.

    Note: PyTorch runs 1 power iteration per forward from a persistent random u;
    since this is a synthetic (non-checkpoint) setup we run power iteration to
    convergence with a deterministic start (its fixed point)."""
    w_mat = w.reshape(w.shape[0], -1).astype(jnp.float32)
    v = jnp.ones((w_mat.shape[1],), jnp.float32) / jnp.sqrt(w_mat.shape[1] * 1.0)

    def body(_, v):
        u = w_mat @ v
        u = u / (jnp.linalg.norm(u) + 1e-12)
        v = w_mat.T @ u
        v = v / (jnp.linalg.norm(v) + 1e-12)
        return v

    v = jax.lax.fori_loop(0, n_iters, body, v)
    u = w_mat @ v
    u = u / (jnp.linalg.norm(u) + 1e-12)
    sigma = jnp.dot(u, w_mat @ v)
    return (w / sigma).astype(w.dtype)


def ref_forward(feat_small, feat_big, w1, w2):
    """Pure-JAX reference mirroring the PyTorch forward."""
    N, C, H, W = feat_small.shape
    C_out = w1.shape[0]
    pooled = feat_small.reshape(N, C, 4, H // 4, 4, W // 4).mean(axis=(3, 5))  # (N,C,4,4)
    z1 = jnp.einsum('ncij,ocij->no', pooled, w1)
    h = jnp.where(z1 > 0, z1, 0.1 * z1)
    z2 = jnp.einsum('no,po->np', h, w2.reshape(C_out, C_out))
    g = jax.nn.sigmoid(z2)
    return feat_big * g[:, :, None, None]


if __name__ == "__main__":
    key = jax.random.PRNGKey(0)
    k_small, k_big, k_w1, k_w2 = jax.random.split(key, 4)

    N, C_in, C_out = 2, 4, 8
    H = W = 16          # feat_small spatial
    Hb = Wb = 32        # feat_big spatial

    feat_small = jax.random.normal(k_small, (N, C_in, H, W), jnp.float32)
    feat_big = jax.random.normal(k_big, (N, C_out, Hb, Wb), jnp.float32)

    # Deterministic synthetic parameters (shapes from nn.Conv2d in __init__).
    w1_raw = jax.random.normal(k_w1, (C_out, C_in, 4, 4), jnp.float32) * 0.2
    w2_raw = jax.random.normal(k_w2, (C_out, C_out, 1, 1), jnp.float32) * 0.2
    w1 = spectral_normalize(w1_raw)
    w2 = spectral_normalize(w2_raw)

    out = se_block(feat_small, feat_big, w1, w2)
    out = jax.block_until_ready(out)

    expected = ref_forward(feat_small, feat_big, w1, w2)
    assert out.shape == (N, C_out, Hb, Wb)
    assert jnp.allclose(out, expected, rtol=1e-5, atol=1e-5), (
        float(jnp.max(jnp.abs(out - expected))))

    print("KERNEL_OK")
</pallas_src>

<mosaic_0001>
module attributes {stable_mosaic.version = 11 : i64} {
  func.func @se_gate_kernel(%arg0: i32, %arg1: memref<2x4x16x16xf32, #tpu.memory_space<vmem>>, %arg2: memref<4x4x4x8xf32, #tpu.memory_space<vmem>>, %arg3: memref<8x8xf32, #tpu.memory_space<vmem>>, %arg4: memref<2x8xf32, #tpu.memory_space<vmem>>, %arg5: memref<2x8xf32, #tpu.memory_space<vmem>>) attributes {dimension_semantics = [#tpu.dimension_semantics<arbitrary>], iteration_bounds = array<i64: 1>, scalar_prefetch = 0 : i64, scratch_operands = 1 : i64, tpu.core_type = #tpu.core_type<tc>, window_params = [{transform_indices = @transform_0, window_bounds = array<i64: 2, 4, 16, 16>}, {transform_indices = @transform_1, window_bounds = array<i64: 4, 4, 4, 8>}, {pipeline_mode = #tpu.pipeline_mode<synchronous>, transform_indices = @transform_2, window_bounds = array<i64: 8, 8>}, {pipeline_mode = #tpu.pipeline_mode<synchronous>, transform_indices = @transform_3, window_bounds = array<i64: 2, 8>}]} {
    %c0_i32 = arith.constant 0 : i32
    %0 = arith.cmpi eq, %arg0, %c0_i32 : i32
    %1 = arith.extui %0 : i1 to i32
    %c0_i32_0 = arith.constant 0 : i32
    %2 = arith.cmpi ne, %1, %c0_i32_0 : i32
    scf.if %2 {
      %cst_191 = arith.constant 0.000000e+00 : f32
      %152 = vector.broadcast %cst_191 : f32 to vector<2x8xf32>
      %c0_192 = arith.constant 0 : index
      %c0_193 = arith.constant 0 : index
      %153 = vector.load %arg5[%c0_192, %c0_193] : memref<2x8xf32, #tpu.memory_space<vmem>>, vector<2x8xf32>
      tpu.vector_store %arg5[%c0_192, %c0_193], %152 {strides = array<i32>} : memref<2x8xf32, #tpu.memory_space<vmem>>, vector<2x8xf32>,
    } else {
    }
    %c0 = arith.constant 0 : index
    %c0_1 = arith.constant 0 : index
    %3 = vector.load %arg5[%c0, %c0_1] : memref<2x8xf32, #tpu.memory_space<vmem>>, vector<2x8xf32>
    %c0_2 = arith.constant 0 : index
    %c0_3 = arith.constant 0 : index
    %c0_4 = arith.constant 0 : index
    %c0_5 = arith.constant 0 : index
    %4 = vector.load %arg1[%c0_2, %c0_3, %c0_4, %c0_5] : memref<2x4x16x16xf32, #tpu.memory_space<vmem>>, vector<2x4x4x4xf32>
    %cst = arith.constant dense<0.000000e+00> : vector<2x4x4xf32>
    %5 = vector.multi_reduction <add>, %4, %cst [3] : vector<2x4x4x4xf32> to vector<2x4x4xf32>
    %cst_6 = arith.constant dense<0.000000e+00> : vector<2x4xf32>
    %6 = vector.multi_reduction <add>, %5, %cst_6 [2] : vector<2x4x4xf32> to vector<2x4xf32>
    %cst_7 = arith.constant 6.250000e-02 : f32
    %7 = vector.broadcast %cst_7 : f32 to vector<2x4xf32>
    %8 = arith.mulf %6, %7 : vector<2x4xf32>
    %c0_8 = arith.constant 0 : index
    %c0_9 = arith.constant 0 : index
    %c0_10 = arith.constant 0 : index
    %c0_11 = arith.constant 0 : index
    %9 = vector.load %arg2[%c0_8, %c0_9, %c0_10, %c0_11] : memref<4x4x4x8xf32, #tpu.memory_space<vmem>>, vector<1x1x4x8xf32>
    %10 = vector.shape_cast %9 : vector<1x1x4x8xf32> to vector<4x8xf32>
    %cst_12 = arith.constant dense<0.000000e+00> : vector<2x8xf32>
    %11 = tpu.matmul %8, %10, %cst_12 {dimension_numbers = #tpu.dot_dimension_numbers<[1], [0], [0], [1], [0, 0, 1, 1], [], []>} : vector<2x4xf32>, vector<4x8xf32>, vector<2x8xf32> -> vector<2x8xf32>
    %12 = arith.addf %3, %11 : vector<2x8xf32>
    %c0_13 = arith.constant 0 : index
    %c0_14 = arith.constant 0 : index
    %c0_15 = arith.constant 0 : index
    %c4 = arith.constant 4 : index
    %13 = vector.load %arg1[%c0_13, %c0_14, %c0_15, %c4] : memref<2x4x16x16xf32, #tpu.memory_space<vmem>>, vector<2x4x4x4xf32>
    %cst_16 = arith.constant dense<0.000000e+00> : vector<2x4x4xf32>
    %14 = vector.multi_reduction <add>, %13, %cst_16 [3] : vector<2x4x4x4xf32> to vector<2x4x4xf32>
    %cst_17 = arith.constant dense<0.000000e+00> : vector<2x4xf32>
    %15 = vector.multi_reduction <add>, %14, %cst_17 [2] : vector<2x4x4xf32> to vector<2x4xf32>
    %cst_18 = arith.constant 6.250000e-02 : f32
    %16 = vector.broadcast %cst_18 : f32 to vector<2x4xf32>
    %17 = arith.mulf %15, %16 : vector<2x4xf32>
    %c0_19 = arith.constant 0 : index
    %c1 = arith.constant 1 : index
    %c0_20 = arith.constant 0 : index
    %c0_21 = arith.constant 0 : index
    %18 = vector.load %arg2[%c0_19, %c1, %c0_20, %c0_21] : memref<4x4x4x8xf32, #tpu.memory_space<vmem>>, vector<1x1x4x8xf32>
    %19 = vector.shape_cast %18 : vector<1x1x4x8xf32> to vector<4x8xf32>
    %cst_22 = arith.constant dense<0.000000e+00> : vector<2x8xf32>
    %20 = tpu.matmul %17, %19, %cst_22 {dimension_numbers = #tpu.dot_dimension_numbers<[1], [0], [0], [1], [0, 0, 1, 1], [], []>} : vector<2x4xf32>, vector<4x8xf32>, vector<2x8xf32> -> vector<2x8xf32>
    %21 = arith.addf %12, %20 : vector<2x8xf32>
    %c0_23 = arith.constant 0 : index
    %c0_24 = arith.constant 0 : index
    %c0_25 = arith.constant 0 : index
    %c8 = arith.constant 8 : index
    %22 = vector.load %arg1[%c0_23, %c0_24, %c0_25, %c8] : memref<2x4x16x16xf32, #tpu.memory_space<vmem>>, vector<2x4x4x4xf32>
    %cst_26 = arith.constant dense<0.000000e+00> : vector<2x4x4xf32>
    %23 = vector.multi_reduction <add>, %22, %cst_26 [3] : vector<2x4x4x4xf32> to vector<2x4x4xf32>
    %cst_27 = arith.constant dense<0.000000e+00> : vector<2x4xf32>
    %24 = vector.multi_reduction <add>, %23, %cst_27 [2] : vector<2x4x4xf32> to vector<2x4xf32>
    %cst_28 = arith.constant 6.250000e-02 : f32
    %25 = vector.broadcast %cst_28 : f32 to vector<2x4xf32>
    %26 = arith.mulf %24, %25 : vector<2x4xf32>
    %c0_29 = arith.constant 0 : index
    %c2 = arith.constant 2 : index
    %c0_30 = arith.constant 0 : index
    %c0_31 = arith.constant 0 : index
    %27 = vector.load %arg2[%c0_29, %c2, %c0_30, %c0_31] : memref<4x4x4x8xf32, #tpu.memory_space<vmem>>, vector<1x1x4x8xf32>
    %28 = vector.shape_cast %27 : vector<1x1x4x8xf32> to vector<4x8xf32>
    %cst_32 = arith.constant dense<0.000000e+00> : vector<2x8xf32>
    %29 = tpu.matmul %26, %28, %cst_32 {dimension_numbers = #tpu.dot_dimension_numbers<[1], [0], [0], [1], [0, 0, 1, 1], [], []>} : vector<2x4xf32>, vector<4x8xf32>, vector<2x8xf32> -> vector<2x8xf32>
    %30 = arith.addf %21, %29 : vector<2x8xf32>
    %c0_33 = arith.constant 0 : index
    %c0_34 = arith.constant 0 : index
    %c0_35 = arith.constant 0 : index
    %c12 = arith.constant 12 : index
    %31 = vector.load %arg1[%c0_33, %c0_34, %c0_35, %c12] : memref<2x4x16x16xf32, #tpu.memory_space<vmem>>, vector<2x4x4x4xf32>
    %cst_36 = arith.constant dense<0.000000e+00> : vector<2x4x4xf32>
    %32 = vector.multi_reduction <add>, %31, %cst_36 [3] : vector<2x4x4x4xf32> to vector<2x4x4xf32>
    %cst_37 = arith.constant dense<0.000000e+00> : vector<2x4xf32>
    %33 = vector.multi_reduction <add>, %32, %cst_37 [2] : vector<2x4x4xf32> to vector<2x4xf32>
    %cst_38 = arith.constant 6.250000e-02 : f32
    %34 = vector.broadcast %cst_38 : f32 to vector<2x4xf32>
    %35 = arith.mulf %33, %34 : vector<2x4xf32>
    %c0_39 = arith.constant 0 : index
    %c3 = arith.constant 3 : index
    %c0_40 = arith.constant 0 : index
    %c0_41 = arith.constant 0 : index
    %36 = vector.load %arg2[%c0_39, %c3, %c0_40, %c0_41] : memref<4x4x4x8xf32, #tpu.memory_space<vmem>>, vector<1x1x4x8xf32>
    %37 = vector.shape_cast %36 : vector<1x1x4x8xf32> to vector<4x8xf32>
    %cst_42 = arith.constant dense<0.000000e+00> : vector<2x8xf32>
    %38 = tpu.matmul %35, %37, %cst_42 {dimension_numbers = #tpu.dot_dimension_numbers<[1], [0], [0], [1], [0, 0, 1, 1], [], []>} : vector<2x4xf32>, vector<4x8xf32>, vector<2x8xf32> -> vector<2x8xf32>
    %39 = arith.addf %30, %38 : vector<2x8xf32>
    %c0_43 = arith.constant 0 : index
    %c0_44 = arith.constant 0 : index
    %c4_45 = arith.constant 4 : index
    %c0_46 = arith.constant 0 : index
    %40 = vector.load %arg1[%c0_43, %c0_44, %c4_45, %c0_46] : memref<2x4x16x16xf32, #tpu.memory_space<vmem>>, vector<2x4x4x4xf32>
    %cst_47 = arith.constant dense<0.000000e+00> : vector<2x4x4xf32>
    %41 = vector.multi_reduction <add>, %40, %cst_47 [3] : vector<2x4x4x4xf32> to vector<2x4x4xf32>
    %cst_48 = arith.constant dense<0.000000e+00> : vector<2x4xf32>
    %42 = vector.multi_reduction <add>, %41, %cst_48 [2] : vector<2x4x4xf32> to vector<2x4xf32>
    %cst_49 = arith.constant 6.250000e-02 : f32
    %43 = vector.broadcast %cst_49 : f32 to vector<2x4xf32>
    %44 = arith.mulf %42, %43 : vector<2x4xf32>
    %c1_50 = arith.constant 1 : index
    %c0_51 = arith.constant 0 : index
    %c0_52 = arith.constant 0 : index
    %c0_53 = arith.constant 0 : index
    %45 = vector.load %arg2[%c1_50, %c0_51, %c0_52, %c0_53] : memref<4x4x4x8xf32, #tpu.memory_space<vmem>>, vector<1x1x4x8xf32>
    %46 = vector.shape_cast %45 : vector<1x1x4x8xf32> to vector<4x8xf32>
    %cst_54 = arith.constant dense<0.000000e+00> : vector<2x8xf32>
    %47 = tpu.matmul %44, %46, %cst_54 {dimension_numbers = #tpu.dot_dimension_numbers<[1], [0], [0], [1], [0, 0, 1, 1], [], []>} : vector<2x4xf32>, vector<4x8xf32>, vector<2x8xf32> -> vector<2x8xf32>
    %48 = arith.addf %39, %47 : vector<2x8xf32>
    %c0_55 = arith.constant 0 : index
    %c0_56 = arith.constant 0 : index
    %c4_57 = arith.constant 4 : index
    %c4_58 = arith.constant 4 : index
    %49 = vector.load %arg1[%c0_55, %c0_56, %c4_57, %c4_58] : memref<2x4x16x16xf32, #tpu.memory_space<vmem>>, vector<2x4x4x4xf32>
    %cst_59 = arith.constant dense<0.000000e+00> : vector<2x4x4xf32>
    %50 = vector.multi_reduction <add>, %49, %cst_59 [3] : vector<2x4x4x4xf32> to vector<2x4x4xf32>
    %cst_60 = arith.constant dense<0.000000e+00> : vector<2x4xf32>
    %51 = vector.multi_reduction <add>, %50, %cst_60 [2] : vector<2x4x4xf32> to vector<2x4xf32>
    %cst_61 = arith.constant 6.250000e-02 : f32
    %52 = vector.broadcast %cst_61 : f32 to vector<2x4xf32>
    %53 = arith.mulf %51, %52 : vector<2x4xf32>
    %c1_62 = arith.constant 1 : index
    %c1_63 = arith.constant 1 : index
    %c0_64 = arith.constant 0 : index
    %c0_65 = arith.constant 0 : index
    %54 = vector.load %arg2[%c1_62, %c1_63, %c0_64, %c0_65] : memref<4x4x4x8xf32, #tpu.memory_space<vmem>>, vector<1x1x4x8xf32>
    %55 = vector.shape_cast %54 : vector<1x1x4x8xf32> to vector<4x8xf32>
    %cst_66 = arith.constant dense<0.000000e+00> : vector<2x8xf32>
    %56 = tpu.matmul %53, %55, %cst_66 {dimension_numbers = #tpu.dot_dimension_numbers<[1], [0], [0], [1], [0, 0, 1, 1], [], []>} : vector<2x4xf32>, vector<4x8xf32>, vector<2x8xf32> -> vector<2x8xf32>
    %57 = arith.addf %48, %56 : vector<2x8xf32>
    %c0_67 = arith.constant 0 : index
    %c0_68 = arith.constant 0 : index
    %c4_69 = arith.constant 4 : index
    %c8_70 = arith.constant 8 : index
    %58 = vector.load %arg1[%c0_67, %c0_68, %c4_69, %c8_70] : memref<2x4x16x16xf32, #tpu.memory_space<vmem>>, vector<2x4x4x4xf32>
    %cst_71 = arith.constant dense<0.000000e+00> : vector<2x4x4xf32>
    %59 = vector.multi_reduction <add>, %58, %cst_71 [3] : vector<2x4x4x4xf32> to vector<2x4x4xf32>
    %cst_72 = arith.constant dense<0.000000e+00> : vector<2x4xf32>
    %60 = vector.multi_reduction <add>, %59, %cst_72 [2] : vector<2x4x4xf32> to vector<2x4xf32>
    %cst_73 = arith.constant 6.250000e-02 : f32
    %61 = vector.broadcast %cst_73 : f32 to vector<2x4xf32>
    %62 = arith.mulf %60, %61 : vector<2x4xf32>
    %c1_74 = arith.constant 1 : index
    %c2_75 = arith.constant 2 : index
    %c0_76 = arith.constant 0 : index
    %c0_77 = arith.constant 0 : index
    %63 = vector.load %arg2[%c1_74, %c2_75, %c0_76, %c0_77] : memref<4x4x4x8xf32, #tpu.memory_space<vmem>>, vector<1x1x4x8xf32>
    %64 = vector.shape_cast %63 : vector<1x1x4x8xf32> to vector<4x8xf32>
    %cst_78 = arith.constant dense<0.000000e+00> : vector<2x8xf32>
    %65 = tpu.matmul %62, %64, %cst_78 {dimension_numbers = #tpu.dot_dimension_numbers<[1], [0], [0], [1], [0, 0, 1, 1], [], []>} : vector<2x4xf32>, vector<4x8xf32>, vector<2x8xf32> -> vector<2x8xf32>
    %66 = arith.addf %57, %65 : vector<2x8xf32>
    %c0_79 = arith.constant 0 : index
    %c0_80 = arith.constant 0 : index
    %c4_81 = arith.constant 4 : index
    %c12_82 = arith.constant 12 : index
    %67 = vector.load %arg1[%c0_79, %c0_80, %c4_81, %c12_82] : memref<2x4x16x16xf32, #tpu.memory_space<vmem>>, vector<2x4x4x4xf32>
    %cst_83 = arith.constant dense<0.000000e+00> : vector<2x4x4xf32>
    %68 = vector.multi_reduction <add>, %67, %cst_83 [3] : vector<2x4x4x4xf32> to vector<2x4x4xf32>
    %cst_84 = arith.constant dense<0.000000e+00> : vector<2x4xf32>
    %69 = vector.multi_reduction <add>, %68, %cst_84 [2] : vector<2x4x4xf32> to vector<2x4xf32>
    %cst_85 = arith.constant 6.250000e-02 : f32
    %70 = vector.broadcast %cst_85 : f32 to vector<2x4xf32>
    %71 = arith.mulf %69, %70 : vector<2x4xf32>
    %c1_86 = arith.constant 1 : index
    %c3_87 = arith.constant 3 : index
    %c0_88 = arith.constant 0 : index
    %c0_89 = arith.constant 0 : index
    %72 = vector.load %arg2[%c1_86, %c3_87, %c0_88, %c0_89] : memref<4x4x4x8xf32, #tpu.memory_space<vmem>>, vector<1x1x4x8xf32>
    %73 = vector.shape_cast %72 : vector<1x1x4x8xf32> to vector<4x8xf32>
    %cst_90 = arith.constant dense<0.000000e+00> : vector<2x8xf32>
    %74 = tpu.matmul %71, %73, %cst_90 {dimension_numbers = #tpu.dot_dimension_numbers<[1], [0], [0], [1], [0, 0, 1, 1], [], []>} : vector<2x4xf32>, vector<4x8xf32>, vector<2x8xf32> -> vector<2x8xf32>
    %75 = arith.addf %66, %74 : vector<2x8xf32>
    %c0_91 = arith.constant 0 : index
    %c0_92 = arith.constant 0 : index
    %c8_93 = arith.constant 8 : index
    %c0_94 = arith.constant 0 : index
    %76 = vector.load %arg1[%c0_91, %c0_92, %c8_93, %c0_94] : memref<2x4x16x16xf32, #tpu.memory_space<vmem>>, vector<2x4x4x4xf32>
    %cst_95 = arith.constant dense<0.000000e+00> : vector<2x4x4xf32>
    %77 = vector.multi_reduction <add>, %76, %cst_95 [3] : vector<2x4x4x4xf32> to vector<2x4x4xf32>
    %cst_96 = arith.constant dense<0.000000e+00> : vector<2x4xf32>
    %78 = vector.multi_reduction <add>, %77, %cst_96 [2] : vector<2x4x4xf32> to vector<2x4xf32>
    %cst_97 = arith.constant 6.250000e-02 : f32
    %79 = vector.broadcast %cst_97 : f32 to vector<2x4xf32>
    %80 = arith.mulf %78, %79 : vector<2x4xf32>
    %c2_98 = arith.constant 2 : index
    %c0_99 = arith.constant 0 : index
    %c0_100 = arith.constant 0 : index
    %c0_101 = arith.constant 0 : index
    %81 = vector.load %arg2[%c2_98, %c0_99, %c0_100, %c0_101] : memref<4x4x4x8xf32, #tpu.memory_space<vmem>>, vector<1x1x4x8xf32>
    %82 = vector.shape_cast %81 : vector<1x1x4x8xf32> to vector<4x8xf32>
    %cst_102 = arith.constant dense<0.000000e+00> : vector<2x8xf32>
    %83 = tpu.matmul %80, %82, %cst_102 {dimension_numbers = #tpu.dot_dimension_numbers<[1], [0], [0], [1], [0, 0, 1, 1], [], []>} : vector<2x4xf32>, vector<4x8xf32>, vector<2x8xf32> -> vector<2x8xf32>
    %84 = arith.addf %75, %83 : vector<2x8xf32>
    %c0_103 = arith.constant 0 : index
    %c0_104 = arith.constant 0 : index
    %c8_105 = arith.constant 8 : index
    %c4_106 = arith.constant 4 : index
    %85 = vector.load %arg1[%c0_103, %c0_104, %c8_105, %c4_106] : memref<2x4x16x16xf32, #tpu.memory_space<vmem>>, vector<2x4x4x4xf32>
    %cst_107 = arith.constant dense<0.000000e+00> : vector<2x4x4xf32>
    %86 = vector.multi_reduction <add>, %85, %cst_107 [3] : vector<2x4x4x4xf32> to vector<2x4x4xf32>
    %cst_108 = arith.constant dense<0.000000e+00> : vector<2x4xf32>
    %87 = vector.multi_reduction <add>, %86, %cst_108 [2] : vector<2x4x4xf32> to vector<2x4xf32>
    %cst_109 = arith.constant 6.250000e-02 : f32
    %88 = vector.broadcast %cst_109 : f32 to vector<2x4xf32>
    %89 = arith.mulf %87, %88 : vector<2x4xf32>
    %c2_110 = arith.constant 2 : index
    %c1_111 = arith.constant 1 : index
    %c0_112 = arith.constant 0 : index
    %c0_113 = arith.constant 0 : index
    %90 = vector.load %arg2[%c2_110, %c1_111, %c0_112, %c0_113] : memref<4x4x4x8xf32, #tpu.memory_space<vmem>>, vector<1x1x4x8xf32>
    %91 = vector.shape_cast %90 : vector<1x1x4x8xf32> to vector<4x8xf32>
    %cst_114 = arith.constant dense<0.000000e+00> : vector<2x8xf32>
    %92 = tpu.matmul %89, %91, %cst_114 {dimension_numbers = #tpu.dot_dimension_numbers<[1], [0], [0], [1], [0, 0, 1, 1], [], []>} : vector<2x4xf32>, vector<4x8xf32>, vector<2x8xf32> -> vector<2x8xf32>
    %93 = arith.addf %84, %92 : vector<2x8xf32>
    %c0_115 = arith.constant 0 : index
    %c0_116 = arith.constant 0 : index
    %c8_117 = arith.constant 8 : index
    %c8_118 = arith.constant 8 : index
    %94 = vector.load %arg1[%c0_115, %c0_116, %c8_117, %c8_118] : memref<2x4x16x16xf32, #tpu.memory_space<vmem>>, vector<2x4x4x4xf32>
    %cst_119 = arith.constant dense<0.000000e+00> : vector<2x4x4xf32>
    %95 = vector.multi_reduction <add>, %94, %cst_119 [3] : vector<2x4x4x4xf32> to vector<2x4x4xf32>
    %cst_120 = arith.constant dense<0.000000e+00> : vector<2x4xf32>
    %96 = vector.multi_reduction <add>, %95, %cst_120 [2] : vector<2x4x4xf32> to vector<2x4xf32>
    %cst_121 = arith.constant 6.250000e-02 : f32
    %97 = vector.broadcast %cst_121 : f32 to vector<2x4xf32>
    %98 = arith.mulf %96, %97 : vector<2x4xf32>
    %c2_122 = arith.constant 2 : index
    %c2_123 = arith.constant 2 : index
    %c0_124 = arith.constant 0 : index
    %c0_125 = arith.constant 0 : index
    %99 = vector.load %arg2[%c2_122, %c2_123, %c0_124, %c0_125] : memref<4x4x4x8xf32, #tpu.memory_space<vmem>>, vector<1x1x4x8xf32>
    %100 = vector.shape_cast %99 : vector<1x1x4x8xf32> to vector<4x8xf32>
    %cst_126 = arith.constant dense<0.000000e+00> : vector<2x8xf32>
    %101 = tpu.matmul %98, %100, %cst_126 {dimension_numbers = #tpu.dot_dimension_numbers<[1], [0], [0], [1], [0, 0, 1, 1], [], []>} : vector<2x4xf32>, vector<4x8xf32>, vector<2x8xf32> -> vector<2x8xf32>
    %102 = arith.addf %93, %101 : vector<2x8xf32>
    %c0_127 = arith.constant 0 : index
    %c0_128 = arith.constant 0 : index
    %c8_129 = arith.constant 8 : index
    %c12_130 = arith.constant 12 : index
    %103 = vector.load %arg1[%c0_127, %c0_128, %c8_129, %c12_130] : memref<2x4x16x16xf32, #tpu.memory_space<vmem>>, vector<2x4x4x4xf32>
    %cst_131 = arith.constant dense<0.000000e+00> : vector<2x4x4xf32>
    %104 = vector.multi_reduction <add>, %103, %cst_131 [3] : vector<2x4x4x4xf32> to vector<2x4x4xf32>
    %cst_132 = arith.constant dense<0.000000e+00> : vector<2x4xf32>
    %105 = vector.multi_reduction <add>, %104, %cst_132 [2] : vector<2x4x4xf32> to vector<2x4xf32>
    %cst_133 = arith.constant 6.250000e-02 : f32
    %106 = vector.broadcast %cst_133 : f32 to vector<2x4xf32>
    %107 = arith.mulf %105, %106 : vector<2x4xf32>
    %c2_134 = arith.constant 2 : index
    %c3_135 = arith.constant 3 : index
    %c0_136 = arith.constant 0 : index
    %c0_137 = arith.constant 0 : index
    %108 = vector.load %arg2[%c2_134, %c3_135, %c0_136, %c0_137] : memref<4x4x4x8xf32, #tpu.memory_space<vmem>>, vector<1x1x4x8xf32>
    %109 = vector.shape_cast %108 : vector<1x1x4x8xf32> to vector<4x8xf32>
    %cst_138 = arith.constant dense<0.000000e+00> : vector<2x8xf32>
    %110 = tpu.matmul %107, %109, %cst_138 {dimension_numbers = #tpu.dot_dimension_numbers<[1], [0], [0], [1], [0, 0, 1, 1], [], []>} : vector<2x4xf32>, vector<4x8xf32>, vector<2x8xf32> -> vector<2x8xf32>
    %111 = arith.addf %102, %110 : vector<2x8xf32>
    %c0_139 = arith.constant 0 : index
    %c0_140 = arith.constant 0 : index
    %c12_141 = arith.constant 12 : index
    %c0_142 = arith.constant 0 : index
    %112 = vector.load %arg1[%c0_139, %c0_140, %c12_141, %c0_142] : memref<2x4x16x16xf32, #tpu.memory_space<vmem>>, vector<2x4x4x4xf32>
    %cst_143 = arith.constant dense<0.000000e+00> : vector<2x4x4xf32>
    %113 = vector.multi_reduction <add>, %112, %cst_143 [3] : vector<2x4x4x4xf32> to vector<2x4x4xf32>
    %cst_144 = arith.constant dense<0.000000e+00> : vector<2x4xf32>
    %114 = vector.multi_reduction <add>, %113, %cst_144 [2] : vector<2x4x4xf32> to vector<2x4xf32>
    %cst_145 = arith.constant 6.250000e-02 : f32
    %115 = vector.broadcast %cst_145 : f32 to vector<2x4xf32>
    %116 = arith.mulf %114, %115 : vector<2x4xf32>
    %c3_146 = arith.constant 3 : index
    %c0_147 = arith.constant 0 : index
    %c0_148 = arith.constant 0 : index
    %c0_149 = arith.constant 0 : index
    %117 = vector.load %arg2[%c3_146, %c0_147, %c0_148, %c0_149] : memref<4x4x4x8xf32, #tpu.memory_space<vmem>>, vector<1x1x4x8xf32>
    %118 = vector.shape_cast %117 : vector<1x1x4x8xf32> to vector<4x8xf32>
    %cst_150 = arith.constant dense<0.000000e+00> : vector<2x8xf32>
    %119 = tpu.matmul %116, %118, %cst_150 {dimension_numbers = #tpu.dot_dimension_numbers<[1], [0], [0], [1], [0, 0, 1, 1], [], []>} : vector<2x4xf32>, vector<4x8xf32>, vector<2x8xf32> -> vector<2x8xf32>
    %120 = arith.addf %111, %119 : vector<2x8xf32>
    %c0_151 = arith.constant 0 : index
    %c0_152 = arith.constant 0 : index
    %c12_153 = arith.constant 12 : index
    %c4_154 = arith.constant 4 : index
    %121 = vector.load %arg1[%c0_151, %c0_152, %c12_153, %c4_154] : memref<2x4x16x16xf32, #tpu.memory_space<vmem>>, vector<2x4x4x4xf32>
    %cst_155 = arith.constant dense<0.000000e+00> : vector<2x4x4xf32>
    %122 = vector.multi_reduction <add>, %121, %cst_155 [3] : vector<2x4x4x4xf32> to vector<2x4x4xf32>
    %cst_156 = arith.constant dense<0.000000e+00> : vector<2x4xf32>
    %123 = vector.multi_reduction <add>, %122, %cst_156 [2] : vector<2x4x4xf32> to vector<2x4xf32>
    %cst_157 = arith.constant 6.250000e-02 : f32
    %124 = vector.broadcast %cst_157 : f32 to vector<2x4xf32>
    %125 = arith.mulf %123, %124 : vector<2x4xf32>
    %c3_158 = arith.constant 3 : index
    %c1_159 = arith.constant 1 : index
    %c0_160 = arith.constant 0 : index
    %c0_161 = arith.constant 0 : index
    %126 = vector.load %arg2[%c3_158, %c1_159, %c0_160, %c0_161] : memref<4x4x4x8xf32, #tpu.memory_space<vmem>>, vector<1x1x4x8xf32>
    %127 = vector.shape_cast %126 : vector<1x1x4x8xf32> to vector<4x8xf32>
    %cst_162 = arith.constant dense<0.000000e+00> : vector<2x8xf32>
    %128 = tpu.matmul %125, %127, %cst_162 {dimension_numbers = #tpu.dot_dimension_numbers<[1], [0], [0], [1], [0, 0, 1, 1], [], []>} : vector<2x4xf32>, vector<4x8xf32>, vector<2x8xf32> -> vector<2x8xf32>
    %129 = arith.addf %120, %128 : vector<2x8xf32>
    %c0_163 = arith.constant 0 : index
    %c0_164 = arith.constant 0 : index
    %c12_165 = arith.constant 12 : index
    %c8_166 = arith.constant 8 : index
    %130 = vector.load %arg1[%c0_163, %c0_164, %c12_165, %c8_166] : memref<2x4x16x16xf32, #tpu.memory_space<vmem>>, vector<2x4x4x4xf32>
    %cst_167 = arith.constant dense<0.000000e+00> : vector<2x4x4xf32>
    %131 = vector.multi_reduction <add>, %130, %cst_167 [3] : vector<2x4x4x4xf32> to vector<2x4x4xf32>
    %cst_168 = arith.constant dense<0.000000e+00> : vector<2x4xf32>
    %132 = vector.multi_reduction <add>, %131, %cst_168 [2] : vector<2x4x4xf32> to vector<2x4xf32>
    %cst_169 = arith.constant 6.250000e-02 : f32
    %133 = vector.broadcast %cst_169 : f32 to vector<2x4xf32>
    %134 = arith.mulf %132, %133 : vector<2x4xf32>
    %c3_170 = arith.constant 3 : index
    %c2_171 = arith.constant 2 : index
    %c0_172 = arith.constant 0 : index
    %c0_173 = arith.constant 0 : index
    %135 = vector.load %arg2[%c3_170, %c2_171, %c0_172, %c0_173] : memref<4x4x4x8xf32, #tpu.memory_space<vmem>>, vector<1x1x4x8xf32>
    %136 = vector.shape_cast %135 : vector<1x1x4x8xf32> to vector<4x8xf32>
    %cst_174 = arith.constant dense<0.000000e+00> : vector<2x8xf32>
    %137 = tpu.matmul %134, %136, %cst_174 {dimension_numbers = #tpu.dot_dimension_numbers<[1], [0], [0], [1], [0, 0, 1, 1], [], []>} : vector<2x4xf32>, vector<4x8xf32>, vector<2x8xf32> -> vector<2x8xf32>
    %138 = arith.addf %129, %137 : vector<2x8xf32>
    %c0_175 = arith.constant 0 : index
    %c0_176 = arith.constant 0 : index
    %c12_177 = arith.constant 12 : index
    %c12_178 = arith.constant 12 : index
    %139 = vector.load %arg1[%c0_175, %c0_176, %c12_177, %c12_178] : memref<2x4x16x16xf32, #tpu.memory_space<vmem>>, vector<2x4x4x4xf32>
    %cst_179 = arith.constant dense<0.000000e+00> : vector<2x4x4xf32>
    %140 = vector.multi_reduction <add>, %139, %cst_179 [3] : vector<2x4x4x4xf32> to vector<2x4x4xf32>
    %cst_180 = arith.constant dense<0.000000e+00> : vector<2x4xf32>
    %141 = vector.multi_reduction <add>, %140, %cst_180 [2] : vector<2x4x4xf32> to vector<2x4xf32>
    %cst_181 = arith.constant 6.250000e-02 : f32
    %142 = vector.broadcast %cst_181 : f32 to vector<2x4xf32>
    %143 = arith.mulf %141, %142 : vector<2x4xf32>
    %c3_182 = arith.constant 3 : index
    %c3_183 = arith.constant 3 : index
    %c0_184 = arith.constant 0 : index
    %c0_185 = arith.constant 0 : index
    %144 = vector.load %arg2[%c3_182, %c3_183, %c0_184, %c0_185] : memref<4x4x4x8xf32, #tpu.memory_space<vmem>>, vector<1x1x4x8xf32>
    %145 = vector.shape_cast %144 : vector<1x1x4x8xf32> to vector<4x8xf32>
    %cst_186 = arith.constant dense<0.000000e+00> : vector<2x8xf32>
    %146 = tpu.matmul %143, %145, %cst_186 {dimension_numbers = #tpu.dot_dimension_numbers<[1], [0], [0], [1], [0, 0, 1, 1], [], []>} : vector<2x4xf32>, vector<4x8xf32>, vector<2x8xf32> -> vector<2x8xf32>
    %147 = arith.addf %138, %146 : vector<2x8xf32>
    %c0_187 = arith.constant 0 : index
    %c0_188 = arith.constant 0 : index
    %148 = vector.load %arg5[%c0_187, %c0_188] : memref<2x8xf32, #tpu.memory_space<vmem>>, vector<2x8xf32>
    tpu.vector_store %arg5[%c0_187, %c0_188], %147 {strides = array<i32>} : memref<2x8xf32, #tpu.memory_space<vmem>>, vector<2x8xf32>,
    %c0_i32_189 = arith.constant 0 : i32
    %149 = arith.cmpi eq, %arg0, %c0_i32_189 : i32
    %150 = arith.extui %149 : i1 to i32
    %c0_i32_190 = arith.constant 0 : i32
    %151 = arith.cmpi ne, %150, %c0_i32_190 : i32
    scf.if %151 {
      %c0_191 = arith.constant 0 : index
      %c0_192 = arith.constant 0 : index
      %152 = vector.load %arg5[%c0_191, %c0_192] : memref<2x8xf32, #tpu.memory_space<vmem>>, vector<2x8xf32>
      %cst_193 = arith.constant 0.000000e+00 : f32
      %153 = vector.broadcast %cst_193 : f32 to vector<2x8xf32>
      %154 = arith.cmpf ogt, %152, %153 : vector<2x8xf32>
      %cst_194 = arith.constant 1.000000e-01 : f32
      %155 = vector.broadcast %cst_194 : f32 to vector<2x8xf32>
      %156 = arith.mulf %155, %152 : vector<2x8xf32>
      %157 = arith.select %154, %152, %156 : vector<2x8xi1>, vector<2x8xf32>
      %c0_195 = arith.constant 0 : index
      %c0_196 = arith.constant 0 : index
      %158 = vector.load %arg3[%c0_195, %c0_196] : memref<8x8xf32, #tpu.memory_space<vmem>>, vector<8x8xf32>
      %cst_197 = arith.constant dense<0.000000e+00> : vector<2x8xf32>
      %159 = tpu.matmul %157, %158, %cst_197 {dimension_numbers = #tpu.dot_dimension_numbers<[1], [0], [0], [1], [0, 0, 1, 1], [], []>} : vector<2x8xf32>, vector<8x8xf32>, vector<2x8xf32> -> vector<2x8xf32>
      %cst_198 = arith.constant 0.000000e+00 : f32
      %160 = vector.broadcast %cst_198 : f32 to vector<2x8xf32>
      %161 = arith.subf %160, %159 : vector<2x8xf32>
      %162 = math.exp %161 : vector<2x8xf32>
      %cst_199 = arith.constant 1.000000e+00 : f32
      %163 = vector.broadcast %cst_199 : f32 to vector<2x8xf32>
      %164 = arith.addf %163, %162 : vector<2x8xf32>
      %cst_200 = arith.constant 1.000000e+00 : f32
      %165 = vector.broadcast %cst_200 : f32 to vector<2x8xf32>
      %166 = arith.divf %165, %164 : vector<2x8xf32>
      %c0_201 = arith.constant 0 : index
      %c0_202 = arith.constant 0 : index
      %167 = vector.load %arg4[%c0_201, %c0_202] : memref<2x8xf32, #tpu.memory_space<vmem>>, vector<2x8xf32>
      tpu.vector_store %arg4[%c0_201, %c0_202], %166 {strides = array<i32>} : memref<2x8xf32, #tpu.memory_space<vmem>>, vector<2x8xf32>,
    } else {
    }
    return
  }
  func.func @transform_0(%arg0: i32) -> (i32, i32, i32, i32) {
    %c0_i32 = arith.constant 0 : i32
    %c0_i32_0 = arith.constant 0 : i32
    %c0_i32_1 = arith.constant 0 : i32
    %c0_i32_2 = arith.constant 0 : i32
    return %c0_i32, %arg0, %c0_i32_0, %c0_i32_1 : i32, i32, i32, i32
  }
  func.func @transform_1(%arg0: i32) -> (i32, i32, i32, i32) {
    %c0_i32 = arith.constant 0 : i32
    %c0_i32_0 = arith.constant 0 : i32
    %c0_i32_1 = arith.constant 0 : i32
    %c0_i32_2 = arith.constant 0 : i32
    return %c0_i32, %c0_i32_0, %arg0, %c0_i32_1 : i32, i32, i32, i32
  }
  func.func @transform_2(%arg0: i32) -> (i32, i32) {
    %c0_i32 = arith.constant 0 : i32
    %c0_i32_0 = arith.constant 0 : i32
    %c0_i32_1 = arith.constant 0 : i32
    return %c0_i32, %c0_i32_0 : i32, i32
  }
  func.func @transform_3(%arg0: i32) -> (i32, i32) {
    %c0_i32 = arith.constant 0 : i32
    %c0_i32_0 = arith.constant 0 : i32
    %c0_i32_1 = arith.constant 0 : i32
    return %c0_i32, %c0_i32_0 : i32, i32
  }
}

</mosaic_0001>

<llo_original>
// kernel: tpu_custom_call.1
$region0: #{tpu_custom_call.1}
  #allocation0 [shape = 'u32[]', space=smem, size = 0x4, offset = 0x4, fixed_abs, tag = 'smem constant byte address 0x4 - core index']
  #allocation1 [shape = 'u32[144,128]{1,0:T(1,128)}', space=vmem, size = 0x12000, scoped, tag = 'internal scratch']
  #allocation2 [shape = 'f32[2,8]{1,0:T(2,128)}', space=vmem, size = 0x400, scoped, tag = 'scratch operand']
  %s0 = inlined_call_operand.hbm [shape: f32[2,4,16,16], index: 0, kind: input, shape index: {}]
  %s1 = inlined_call_operand.hbm [shape: f32[4,4,4,8], index: 1, kind: input, shape index: {}]
  %s2 = inlined_call_operand.hbm [shape: f32[8,8], index: 2, kind: input, shape index: {}]
  %s3 = inlined_call_operand.hbm [shape: f32[2,8], index: 3, kind: output, shape index: {}]
  %s4 = sld [smem:[#allocation0]]
  $region42: #{tpu_custom_call.1} parent=0
    _
  %s6 = ssub.s32 1, %s4
  %s7 = scalar_select 0, %s6, %s4
  $region1: #{tpu_custom_call.1} parent=0
    #allocation3 [shape = 'u8[65536]{0}', space=vmem, size = 0x10000, scoped, tag = 'input window, operand 0, single buffered']
    #allocation4 [shape = 's32[1]{0}', space=sflag, size = 0x4, scoped, tag = 'scoped memory for tpu_custom_call.1']
    #allocation5 [shape = 's32[1]{0}', space=sflag, size = 0x4, scoped, tag = 'scoped memory for tpu_custom_call.1']
    #allocation6 [shape = 'u8[32768]{0}', space=vmem, size = 0x8000, scoped, tag = 'input window, operand 1, single buffered']
    #allocation7 [shape = 's32[1]{0}', space=sflag, size = 0x4, scoped, tag = 'scoped memory for tpu_custom_call.1']
    #allocation8 [shape = 'u8[4096]{0}', space=vmem, size = 0x1000, scoped, tag = 'input window, operand 2, single buffered']
    #allocation9 [shape = 'u8[1024]{0}', space=vmem, size = 0x400, scoped, tag = 'output window, operand 0, single buffered']
    %8 = vsyncpa [#allocation4], 0
    %9 = vsyncpa [#allocation7], 0
    %10 = vsyncpa [#allocation5], 0
    // Predicated region
    $region2: #{tpu_custom_call.1} parent=1 // pred_check
      _
    $region3: #{tpu_custom_call.1} parent=1 // pred_check_branch
      %12 = sbr.rel (0) target = $region5
    $region4: #{tpu_custom_call.1} parent=1 // pred_region
      %s14 = ssub.s32 2048, 2048
      %15 = vsyncadd [#allocation4], %s14
      %s16 = sshll.u32 [#allocation3], 4
      %s17 = int_to_ptr.vmem [resolvable:$true] %s16
      %22 = dma.hbm_to_vmem [thread:$0]  %s0, 2048, %s17, [#allocation4], 128, 128, 8
    $region5: #{tpu_custom_call.1} parent=1 // pred_fallthru
      _
    // Predicated region
    $region6: #{tpu_custom_call.1} parent=1 // pred_check
      _
    $region7: #{tpu_custom_call.1} parent=1 // pred_check_branch
      %24 = sbr.rel (0) target = $region9
    $region8: #{tpu_custom_call.1} parent=1 // pred_region
      %s26 = ssub.s32 1024, 1024
      %27 = vsyncadd [#allocation7], %s26
      %s28 = sshll.u32 [#allocation6], 4
      %s29 = int_to_ptr.vmem [resolvable:$true] %s28
      %34 = dma.hbm_to_vmem [thread:$0]  %s1, 1024, %s29, [#allocation7], 64, 64, 4
    $region9: #{tpu_custom_call.1} parent=1 // pred_fallthru
      _
    // Predicated region
    $region10: #{tpu_custom_call.1} parent=1 // pred_check
      _
    $region11: #{tpu_custom_call.1} parent=1 // pred_check_branch
      %36 = sbr.rel (0) target = $region13
    $region12: #{tpu_custom_call.1} parent=1 // pred_region
      %s38 = ssub.s32 128, 128
      %39 = vsyncadd [#allocation7], %s38
      %s41 = sshll.u32 [#allocation8], 4
      %s42 = int_to_ptr.vmem [resolvable:$true] %s41
      %44 = dma.hbm_to_vmem [thread:$0]  %s2, 128, %s42, [#allocation7]
    $region13: #{tpu_custom_call.1} parent=1 // pred_fallthru
      _
    // Predicated region
    $region14: #{tpu_custom_call.1} parent=1 // pred_check
      _
    $region15: #{tpu_custom_call.1} parent=1 // pred_check_branch
      %46 = sbr.rel (0) target = $region17
    $region16: #{tpu_custom_call.1} parent=1 // pred_region
      %47 = dma.done [#allocation4], 2048
    $region17: #{tpu_custom_call.1} parent=1 // pred_fallthru
      _
    // Predicated region
    $region18: #{tpu_custom_call.1} parent=1 // pred_check
      _
    $region19: #{tpu_custom_call.1} parent=1 // pred_check_branch
      %49 = sbr.rel (0) target = $region21
    $region20: #{tpu_custom_call.1} parent=1 // pred_region
      %50 = dma.done [#allocation7], 1024
    $region21: #{tpu_custom_call.1} parent=1 // pred_fallthru
      _
    // Predicated region
    $region22: #{tpu_custom_call.1} parent=1 // pred_check
      _
    $region23: #{tpu_custom_call.1} parent=1 // pred_check_branch
      %52 = sbr.rel (0) target = $region25
    $region24: #{tpu_custom_call.1} parent=1 // pred_region
      %53 = dma.done [#allocation7], 128
    $region25: #{tpu_custom_call.1} parent=1 // pred_fallthru
      _
    %p54 = scmp.eq.s32.totalorder 0, 0
    // Predicated region
    $region26: #{tpu_custom_call.1} parent=1 // pred_check
      %p55 = pneg %p54
    $region27: #{tpu_custom_call.1} parent=1 // pred_check_branch
      %57 = sbr.rel (%p55) target = $region29
    $region28: #{tpu_custom_call.1} parent=1 // pred_region
      %vm58 = vcmask 58368
      %59 = vst.msk [vmem:[#allocation2] sm:$0x3] %vm58, 0.0
    $region29: #{tpu_custom_call.1} parent=1 // pred_fallthru
      _
    %v60 = vld [vmem:[#allocation2] sm:$0x3]
    %v61 = vld [vmem:[#allocation3] sm:$0xf]
    %v62 = vld [vmem:[#allocation3 + $0x10] sm:$0xf]
    %v63 = vld [vmem:[#allocation3 + $0x20] sm:$0xf]
    %v64 = vld [vmem:[#allocation3 + $0x30] sm:$0xf]
    %v65 = vld [vmem:[#allocation3 + $0x40] sm:$0xf]
    %v66 = vld [vmem:[#allocation3 + $0x50] sm:$0xf]
    %v67 = vld [vmem:[#allocation3 + $0x60] sm:$0xf]
    %v68 = vld [vmem:[#allocation3 + $0x70] sm:$0xf]
    %vm69 = vcmask 27648
    %v70 = vsel %vm69, %v61, 0.0
    %71 = vadd.xlane.f32.xlu0 %v70
    %v72 = vpop.xlane.xlu0 %71
    %v73 = vsel %vm69, %v62, 0.0
    %74 = vadd.xlane.f32.xlu0 %v73
    %v75 = vpop.xlane.xlu0 %74
    %v76 = vsel %vm69, %v63, 0.0
    %77 = vadd.xlane.f32.xlu0 %v76
    %v78 = vpop.xlane.xlu0 %77
    %v79 = vsel %vm69, %v64, 0.0
    %80 = vadd.xlane.f32.xlu0 %v79
    %v81 = vpop.xlane.xlu0 %80
    %v82 = vsel %vm69, %v65, 0.0
    %83 = vadd.xlane.f32.xlu0 %v82
    %v84 = vpop.xlane.xlu0 %83
    %v85 = vsel %vm69, %v66, 0.0
    %86 = vadd.xlane.f32.xlu0 %v85
    %v87 = vpop.xlane.xlu0 %86
    %v88 = vsel %vm69, %v67, 0.0
    %89 = vadd.xlane.f32.xlu0 %v88
    %v90 = vpop.xlane.xlu0 %89
    %v91 = vsel %vm69, %v68, 0.0
    %92 = vadd.xlane.f32.xlu0 %v91
    %v93 = vpop.xlane.xlu0 %92
    %v102 = vlaneseq
    %v103 = vand.u32 %v102, 127
    %v104 = vlaneseq
    %v105 = vshrl.u32 %v104, 7
    %v106 = vsub.s32 %v103, %v105
    %v107 = vrot.slane %v72, %v106
    %v108 = vlaneseq
    %v109 = vshrl.u32 %v108, 7
    %v110 = vsub.s32 %v103, %v109
    %v111 = vrot.slane %v75, %v110
    %v112 = vlaneseq
    %v113 = vshrl.u32 %v112, 7
    %v114 = vsub.s32 %v103, %v113
    %v115 = vrot.slane %v78, %v114
    %v116 = vlaneseq
    %v117 = vshrl.u32 %v116, 7
    %v118 = vsub.s32 %v103, %v117
    %v119 = vrot.slane %v81, %v118
    %v120 = vlaneseq
    %v121 = vshrl.u32 %v120, 7
    %v122 = vsub.s32 %v103, %v121
    %v123 = vrot.slane %v84, %v122
    %v124 = vlaneseq
    %v125 = vshrl.u32 %v124, 7
    %v126 = vsub.s32 %v103, %v125
    %v127 = vrot.slane %v87, %v126
    %v128 = vlaneseq
    %v129 = vshrl.u32 %v128, 7
    %v130 = vsub.s32 %v103, %v129
    %v131 = vrot.slane %v90, %v130
    %v132 = vlaneseq
    %v133 = vshrl.u32 %v132, 7
    %v134 = vsub.s32 %v103, %v133
    %v135 = vrot.slane %v93, %v134
    %vm136 = vcmask 1041409
    %v137 = vsel %vm136, %v111, %v107
    %vm138 = vcmask 1042434
    %v139 = vsel %vm138, %v115, %v137
    %vm140 = vcmask 1043459
    %v141 = vsel %vm140, %v119, %v139
    %v142 = vsel %vm136, %v127, %v123
    %v143 = vsel %vm138, %v131, %v142
    %v144 = vsel %vm140, %v135, %v143
    %v147 = vsel %vm69, %v141, 0.0
    %148 = vadd.xlane.f32.xlu0 %v147
    %v149 = vpop.xlane.xlu0 %148
    %v150 = vsel %vm69, %v144, 0.0
    %151 = vadd.xlane.f32.xlu0 %v150
    %v152 = vpop.xlane.xlu0 %151
    %v153 = vmul.f32 %v149, 0.0625
    %v154 = vmul.f32 %v152, 0.0625
    %v155 = vld [vmem:[#allocation6] sm:$0xf]
    %v158 = vlaneseq
    %v159 = vshrl.u32 %v158, 7
    %v160 = vsub.s32 %v103, %v159
    %v161 = vrot.slane %v153, %v160
    %v162 = vlaneseq
    %v163 = vshrl.u32 %v162, 7
    %v164 = vsub.s32 %v103, %v163
    %v165 = vrot.slane %v154, %v164
    %v166 = vsel %vm136, %v165, %v161
    %vm167 = vcmask 31744
    %v168 = vsel %vm167, %v166, 0
    %vm170 = vcmask 1043456
    %v172 = vsel %vm170, %v155, 0
    %174 = vmatprep.subr.mxu0 0.0
    %175 = vmatpush1.msra.mxu0 %v172
    %176 = vmatprep.subr.mxu0 0.0
    %177 = vmatpush1.msra.mxu0 0.0
    %178 = vmatprep.subr.mxu0 0.0
    %179 = vmatpush1.msra.mxu0 0.0
    %180 = vmatprep.subr.mxu0 0.0
    %181 = vmatpush1.msra.mxu0 0.0
    %182 = vmatprep.subr.mxu0 0.0
    %183 = vmatpush1.msra.mxu0 0.0
    %184 = vmatprep.subr.mxu0 0.0
    %185 = vmatpush1.msra.mxu0 0.0
    %186 = vmatprep.subr.mxu0 0.0
    %187 = vmatpush1.msra.mxu0 0.0
    %188 = vmatprep.subr.mxu0 0.0
    %189 = vmatpush1.msra.mxu0 0.0
    %190 = vmatprep.subr.mxu0 0.0
    %191 = vmatpush1.msra.mxu0 0.0
    %192 = vmatprep.subr.mxu0 0.0
    %193 = vmatpush1.msra.mxu0 0.0
    %194 = vmatprep.subr.mxu0 0.0
    %195 = vmatpush1.msra.mxu0 0.0
    %196 = vmatprep.subr.mxu0 0.0
    %197 = vmatpush1.msra.mxu0 0.0
    %198 = vmatprep.subr.mxu0 0.0
    %199 = vmatpush1.msra.mxu0 0.0
    %200 = vmatprep.subr.mxu0 0.0
    %201 = vmatpush1.msra.mxu0 0.0
    %202 = vmatprep.subr.mxu0 0.0
    %203 = vmatpush1.msra.mxu0 0.0
    %204 = vmatprep.subr.mxu0 0.0
    %205 = vmatpush1.msra.mxu0 0.0
    %206 = vmatprep.subr.mxu0 0.0
    %207 = vmatpush1.msra.mxu0 0.0
    %208 = vmatprep.subr.mxu0 0.0
    %209 = vmatpush1.msra.mxu0 0.0
    %210 = vmatprep.subr.mxu0 0.0
    %211 = vmatpush1.msra.mxu0 0.0
    %212 = vmatprep.subr.mxu0 0.0
    %213 = vmatpush1.msra.mxu0 0.0
    %214 = vmatprep.subr.mxu0 0.0
    %215 = vmatpush1.msra.mxu0 0.0
    %216 = vmatprep.subr.mxu0 0.0
    %217 = vmatpush1.msra.mxu0 0.0
    %218 = vmatprep.subr.mxu0 0.0
    %219 = vmatpush1.msra.mxu0 0.0
    %220 = vmatprep.subr.mxu0 0.0
    %221 = vmatpush1.msra.mxu0 0.0
    %222 = vmatprep.subr.mxu0 0.0
    %223 = vmatpush1.msra.mxu0 0.0
    %224 = vmatprep.subr.mxu0 0.0
    %225 = vmatpush1.msra.mxu0 0.0
    %226 = vmatprep.subr.mxu0 0.0
    %227 = vmatpush1.msra.mxu0 0.0
    %228 = vmatprep.subr.mxu0 0.0
    %229 = vmatpush1.msra.mxu0 0.0
    %230 = vmatprep.subr.mxu0 0.0
    %231 = vmatpush1.msra.mxu0 0.0
    %232 = vmatprep.subr.mxu0 0.0
    %233 = vmatpush1.msra.mxu0 0.0
    %234 = vmatprep.subr.mxu0 0.0
    %235 = vmatpush1.msra.mxu0 0.0
    %236 = vmatprep.subr.mxu0 0.0
    %237 = vmatpush1.msra.mxu0 0.0
    %238 = vmatprep.mubr.f32.mxu0 0.0
    %239 = vmatmul.mubr.f32.gmra.mrb[0].mxu0 %v168
    %v240 = vpop.f32.mrb[0].mxu0
    %v241 = vadd.f32 0.0, %v240
    %v242 = vpop.f32.mrb[0].mxu0
    %243 = vdwg.mxu0
    %v244 = vadd.f32 %v60, %v241
    %253 = vrot.lane.b32.xlu0 %v61, 124
    %v254 = vpop.permute.xlu0 %253
    %255 = vrot.lane.b32.xlu0 %v62, 124
    %v256 = vpop.permute.xlu0 %255
    %257 = vrot.lane.b32.xlu0 %v63, 124
    %v258 = vpop.permute.xlu0 %257
    %259 = vrot.lane.b32.xlu0 %v64, 124
    %v260 = vpop.permute.xlu0 %259
    %261 = vrot.lane.b32.xlu0 %v65, 124
    %v262 = vpop.permute.xlu0 %261
    %263 = vrot.lane.b32.xlu0 %v66, 124
    %v264 = vpop.permute.xlu0 %263
    %265 = vrot.lane.b32.xlu0 %v67, 124
    %v266 = vpop.permute.xlu0 %265
    %267 = vrot.lane.b32.xlu0 %v68, 124
    %v268 = vpop.permute.xlu0 %267
    %v277 = vsel %vm69, %v254, 0.0
    %278 = vadd.xlane.f32.xlu0 %v277
    %v279 = vpop.xlane.xlu0 %278
    %v280 = vsel %vm69, %v256, 0.0
    %281 = vadd.xlane.f32.xlu0 %v280
    %v282 = vpop.xlane.xlu0 %281
    %v283 = vsel %vm69, %v258, 0.0
    %284 = vadd.xlane.f32.xlu0 %v283
    %v285 = vpop.xlane.xlu0 %284
    %v286 = vsel %vm69, %v260, 0.0
    %287 = vadd.xlane.f32.xlu0 %v286
    %v288 = vpop.xlane.xlu0 %287
    %v289 = vsel %vm69, %v262, 0.0
    %290 = vadd.xlane.f32.xlu0 %v289
    %v291 = vpop.xlane.xlu0 %290
    %v292 = vsel %vm69, %v264, 0.0
    %293 = vadd.xlane.f32.xlu0 %v292
    %v294 = vpop.xlane.xlu0 %293
    %v295 = vsel %vm69, %v266, 0.0
    %296 = vadd.xlane.f32.xlu0 %v295
    %v297 = vpop.xlane.xlu0 %296
    %v298 = vsel %vm69, %v268, 0.0
    %299 = vadd.xlane.f32.xlu0 %v298
    %v300 = vpop.xlane.xlu0 %299
    %v309 = vlaneseq
    %v310 = vshrl.u32 %v309, 7
    %v311 = vsub.s32 %v103, %v310
    %v312 = vrot.slane %v279, %v311
    %v313 = vlaneseq
    %v314 = vshrl.u32 %v313, 7
    %v315 = vsub.s32 %v103, %v314
    %v316 = vrot.slane %v282, %v315
    %v317 = vlaneseq
    %v318 = vshrl.u32 %v317, 7
    %v319 = vsub.s32 %v103, %v318
    %v320 = vrot.slane %v285, %v319
    %v321 = vlaneseq
    %v322 = vshrl.u32 %v321, 7
    %v323 = vsub.s32 %v103, %v322
    %v324 = vrot.slane %v288, %v323
    %v325 = vlaneseq
    %v326 = vshrl.u32 %v325, 7
    %v327 = vsub.s32 %v103, %v326
    %v328 = vrot.slane %v291, %v327
    %v329 = vlaneseq
    %v330 = vshrl.u32 %v329, 7
    %v331 = vsub.s32 %v103, %v330
    %v332 = vrot.slane %v294, %v331
    %v333 = vlaneseq
    %v334 = vshrl.u32 %v333, 7
    %v335 = vsub.s32 %v103, %v334
    %v336 = vrot.slane %v297, %v335
    %v337 = vlaneseq
    %v338 = vshrl.u32 %v337, 7
    %v339 = vsub.s32 %v103, %v338
    %v340 = vrot.slane %v300, %v339
    %v341 = vsel %vm136, %v316, %v312
    %v342 = vsel %vm138, %v320, %v341
    %v343 = vsel %vm140, %v324, %v342
    %v344 = vsel %vm136, %v332, %v328
    %v345 = vsel %vm138, %v336, %v344
    %v346 = vsel %vm140, %v340, %v345
    %v349 = vsel %vm69, %v343, 0.0
    %350 = vadd.xlane.f32.xlu0 %v349
    %v351 = vpop.xlane.xlu0 %350
    %v352 = vsel %vm69, %v346, 0.0
    %353 = vadd.xlane.f32.xlu0 %v352
    %v354 = vpop.xlane.xlu0 %353
    %v355 = vmul.f32 %v351, 0.0625
    %v356 = vmul.f32 %v354, 0.0625
    %s357 = scalar_lea.vmem [#allocation6], 4
    %v358 = vld [vmem:[%s357] sm:$0xf]
    %v361 = vlaneseq
    %v362 = vshrl.u32 %v361, 7
    %v363 = vsub.s32 %v103, %v362
    %v364 = vrot.slane %v355, %v363
    %v365 = vlaneseq
    %v366 = vshrl.u32 %v365, 7
    %v367 = vsub.s32 %v103, %v366
    %v368 = vrot.slane %v356, %v367
    %v369 = vsel %vm136, %v368, %v364
    %v370 = vsel %vm167, %v369, 0
    %v373 = vsel %vm170, %v358, 0
    %375 = vmatprep.subr.mxu0 0.0
    %376 = vmatpush1.msra.mxu0 %v373
    %377 = vmatprep.subr.mxu0 0.0
    %378 = vmatpush1.msra.mxu0 0.0
    %379 = vmatprep.subr.mxu0 0.0
    %380 = vmatpush1.msra.mxu0 0.0
    %381 = vmatprep.subr.mxu0 0.0
    %382 = vmatpush1.msra.mxu0 0.0
    %383 = vmatprep.subr.mxu0 0.0
    %384 = vmatpush1.msra.mxu0 0.0
    %385 = vmatprep.subr.mxu0 0.0
    %386 = vmatpush1.msra.mxu0 0.0
    %387 = vmatprep.subr.mxu0 0.0
    %388 = vmatpush1.msra.mxu0 0.0
    %389 = vmatprep.subr.mxu0 0.0
    %390 = vmatpush1.msra.mxu0 0.0
    %391 = vmatprep.subr.mxu0 0.0
    %392 = vmatpush1.msra.mxu0 0.0
    %393 = vmatprep.subr.mxu0 0.0
    %394 = vmatpush1.msra.mxu0 0.0
    %395 = vmatprep.subr.mxu0 0.0
    %396 = vmatpush1.msra.mxu0 0.0
    %397 = vmatprep.subr.mxu0 0.0
    %398 = vmatpush1.msra.mxu0 0.0
    %399 = vmatprep.subr.mxu0 0.0
    %400 = vmatpush1.msra.mxu0 0.0
    %401 = vmatprep.subr.mxu0 0.0
    %402 = vmatpush1.msra.mxu0 0.0
    %403 = vmatprep.subr.mxu0 0.0
    %404 = vmatpush1.msra.mxu0 0.0
    %405 = vmatprep.subr.mxu0 0.0
    %406 = vmatpush1.msra.mxu0 0.0
    %407 = vmatprep.subr.mxu0 0.0
    %408 = vmatpush1.msra.mxu0 0.0
    %409 = vmatprep.subr.mxu0 0.0
    %410 = vmatpush1.msra.mxu0 0.0
    %411 = vmatprep.subr.mxu0 0.0
    %412 = vmatpush1.msra.mxu0 0.0
    %413 = vmatprep.subr.mxu0 0.0
    %414 = vmatpush1.msra.mxu0 0.0
    %415 = vmatprep.subr.mxu0 0.0
    %416 = vmatpush1.msra.mxu0 0.0
    %417 = vmatprep.subr.mxu0 0.0
    %418 = vmatpush1.msra.mxu0 0.0
    %419 = vmatprep.subr.mxu0 0.0
    %420 = vmatpush1.msra.mxu0 0.0
    %421 = vmatprep.subr.mxu0 0.0
    %422 = vmatpush1.msra.mxu0 0.0
    %423 = vmatprep.subr.mxu0 0.0
    %424 = vmatpush1.msra.mxu0 0.0
    %425 = vmatprep.subr.mxu0 0.0
    %426 = vmatpush1.msra.mxu0 0.0
    %427 = vmatprep.subr.mxu0 0.0
    %428 = vmatpush1.msra.mxu0 0.0
    %429 = vmatprep.subr.mxu0 0.0
    %430 = vmatpush1.msra.mxu0 0.0
    %431 = vmatprep.subr.mxu0 0.0
    %432 = vmatpush1.msra.mxu0 0.0
    %433 = vmatprep.subr.mxu0 0.0
    %434 = vmatpush1.msra.mxu0 0.0
    %435 = vmatprep.subr.mxu0 0.0
    %436 = vmatpush1.msra.mxu0 0.0
    %437 = vmatprep.subr.mxu0 0.0
    %438 = vmatpush1.msra.mxu0 0.0
    %439 = vmatprep.mubr.f32.mxu0 0.0
    %440 = vmatmul.mubr.f32.gmra.mrb[0].mxu0 %v370
    %v441 = vpop.f32.mrb[0].mxu0
    %v442 = vadd.f32 0.0, %v441
    %v443 = vpop.f32.mrb[0].mxu0
    %444 = vdwg.mxu0
    %v445 = vadd.f32 %v244, %v442
    %446 = vrot.lane.b32.xlu0 %v61, 120
    %v447 = vpop.permute.xlu0 %446
    %448 = vrot.lane.b32.xlu0 %v62, 120
    %v449 = vpop.permute.xlu0 %448
    %450 = vrot.lane.b32.xlu0 %v63, 120
    %v451 = vpop.permute.xlu0 %450
    %452 = vrot.lane.b32.xlu0 %v64, 120
    %v453 = vpop.permute.xlu0 %452
    %454 = vrot.lane.b32.xlu0 %v65, 120
    %v455 = vpop.permute.xlu0 %454
    %456 = vrot.lane.b32.xlu0 %v66, 120
    %v457 = vpop.permute.xlu0 %456
    %458 = vrot.lane.b32.xlu0 %v67, 120
    %v459 = vpop.permute.xlu0 %458
    %460 = vrot.lane.b32.xlu0 %v68, 120
    %v461 = vpop.permute.xlu0 %460
    %v470 = vsel %vm69, %v447, 0.0
    %471 = vadd.xlane.f32.xlu0 %v470
    %v472 = vpop.xlane.xlu0 %471
    %v473 = vsel %vm69, %v449, 0.0
    %474 = vadd.xlane.f32.xlu0 %v473
    %v475 = vpop.xlane.xlu0 %474
    %v476 = vsel %vm69, %v451, 0.0
    %477 = vadd.xlane.f32.xlu0 %v476
    %v478 = vpop.xlane.xlu0 %477
    %v479 = vsel %vm69, %v453, 0.0
    %480 = vadd.xlane.f32.xlu0 %v479
    %v481 = vpop.xlane.xlu0 %480
    %v482 = vsel %vm69, %v455, 0.0
    %483 = vadd.xlane.f32.xlu0 %v482
    %v484 = vpop.xlane.xlu0 %483
    %v485 = vsel %vm69, %v457, 0.0
    %486 = vadd.xlane.f32.xlu0 %v485
    %v487 = vpop.xlane.xlu0 %486
    %v488 = vsel %vm69, %v459, 0.0
    %489 = vadd.xlane.f32.xlu0 %v488
    %v490 = vpop.xlane.xlu0 %489
    %v491 = vsel %vm69, %v461, 0.0
    %492 = vadd.xlane.f32.xlu0 %v491
    %v493 = vpop.xlane.xlu0 %492
    %v502 = vlaneseq
    %v503 = vshrl.u32 %v502, 7
    %v504 = vsub.s32 %v103, %v503
    %v505 = vrot.slane %v472, %v504
    %v506 = vlaneseq
    %v507 = vshrl.u32 %v506, 7
    %v508 = vsub.s32 %v103, %v507
    %v509 = vrot.slane %v475, %v508
    %v510 = vlaneseq
    %v511 = vshrl.u32 %v510, 7
    %v512 = vsub.s32 %v103, %v511
    %v513 = vrot.slane %v478, %v512
    %v514 = vlaneseq
    %v515 = vshrl.u32 %v514, 7
    %v516 = vsub.s32 %v103, %v515
    %v517 = vrot.slane %v481, %v516
    %v518 = vlaneseq
    %v519 = vshrl.u32 %v518, 7
    %v520 = vsub.s32 %v103, %v519
    %v521 = vrot.slane %v484, %v520
    %v522 = vlaneseq
    %v523 = vshrl.u32 %v522, 7
    %v524 = vsub.s32 %v103, %v523
    %v525 = vrot.slane %v487, %v524
    %v526 = vlaneseq
    %v527 = vshrl.u32 %v526, 7
    %v528 = vsub.s32 %v103, %v527
    %v529 = vrot.slane %v490, %v528
    %v530 = vlaneseq
    %v531 = vshrl.u32 %v530, 7
    %v532 = vsub.s32 %v103, %v531
    %v533 = vrot.slane %v493, %v532
    %v534 = vsel %vm136, %v509, %v505
    %v535 = vsel %vm138, %v513, %v534
    %v536 = vsel %vm140, %v517, %v535
    %v537 = vsel %vm136, %v525, %v521
    %v538 = vsel %vm138, %v529, %v537
    %v539 = vsel %vm140, %v533, %v538
    %v542 = vsel %vm69, %v536, 0.0
    %543 = vadd.xlane.f32.xlu0 %v542
    %v544 = vpop.xlane.xlu0 %543
    %v545 = vsel %vm69, %v539, 0.0
    %546 = vadd.xlane.f32.xlu0 %v545
    %v547 = vpop.xlane.xlu0 %546
    %v548 = vmul.f32 %v544, 0.0625
    %v549 = vmul.f32 %v547, 0.0625
    %s550 = scalar_lea.vmem [#allocation6], 8
    %v551 = vld [vmem:[%s550] sm:$0xf]
    %v554 = vlaneseq
    %v555 = vshrl.u32 %v554, 7
    %v556 = vsub.s32 %v103, %v555
    %v557 = vrot.slane %v548, %v556
    %v558 = vlaneseq
    %v559 = vshrl.u32 %v558, 7
    %v560 = vsub.s32 %v103, %v559
    %v561 = vrot.slane %v549, %v560
    %v562 = vsel %vm136, %v561, %v557
    %v563 = vsel %vm167, %v562, 0
    %v566 = vsel %vm170, %v551, 0
    %568 = vmatprep.subr.mxu0 0.0
    %569 = vmatpush1.msra.mxu0 %v566
    %570 = vmatprep.subr.mxu0 0.0
    %571 = vmatpush1.msra.mxu0 0.0
    %572 = vmatprep.subr.mxu0 0.0
    %573 = vmatpush1.msra.mxu0 0.0
    %574 = vmatprep.subr.mxu0 0.0
    %575 = vmatpush1.msra.mxu0 0.0
    %576 = vmatprep.subr.mxu0 0.0
    %577 = vmatpush1.msra.mxu0 0.0
    %578 = vmatprep.subr.mxu0 0.0
    %579 = vmatpush1.msra.mxu0 0.0
    %580 = vmatprep.subr.mxu0 0.0
    %581 = vmatpush1.msra.mxu0 0.0
    %582 = vmatprep.subr.mxu0 0.0
    %583 = vmatpush1.msra.mxu0 0.0
    %584 = vmatprep.subr.mxu0 0.0
    %585 = vmatpush1.msra.mxu0 0.0
    %586 = vmatprep.subr.mxu0 0.0
    %587 = vmatpush1.msra.mxu0 0.0
    %588 = vmatprep.subr.mxu0 0.0
    %589 = vmatpush1.msra.mxu0 0.0
    %590 = vmatprep.subr.mxu0 0.0
    %591 = vmatpush1.msra.mxu0 0.0
    %592 = vmatprep.subr.mxu0 0.0
    %593 = vmatpush1.msra.mxu0 0.0
    %594 = vmatprep.subr.mxu0 0.0
    %595 = vmatpush1.msra.mxu0 0.0
    %596 = vmatprep.subr.mxu0 0.0
    %597 = vmatpush1.msra.mxu0 0.0
    %598 = vmatprep.subr.mxu0 0.0
    %599 = vmatpush1.msra.mxu0 0.0
    %600 = vmatprep.subr.mxu0 0.0
    %601 = vmatpush1.msra.mxu0 0.0
    %602 = vmatprep.subr.mxu0 0.0
    %603 = vmatpush1.msra.mxu0 0.0
    %604 = vmatprep.subr.mxu0 0.0
    %605 = vmatpush1.msra.mxu0 0.0
    %606 = vmatprep.subr.mxu0 0.0
    %607 = vmatpush1.msra.mxu0 0.0
    %608 = vmatprep.subr.mxu0 0.0
    %609 = vmatpush1.msra.mxu0 0.0
    %610 = vmatprep.subr.mxu0 0.0
    %611 = vmatpush1.msra.mxu0 0.0
    %612 = vmatprep.subr.mxu0 0.0
    %613 = vmatpush1.msra.mxu0 0.0
    %614 = vmatprep.subr.mxu0 0.0
    %615 = vmatpush1.msra.mxu0 0.0
    %616 = vmatprep.subr.mxu0 0.0
    %617 = vmatpush1.msra.mxu0 0.0
    %618 = vmatprep.subr.mxu0 0.0
    %619 = vmatpush1.msra.mxu0 0.0
    %620 = vmatprep.subr.mxu0 0.0
    %621 = vmatpush1.msra.mxu0 0.0
    %622 = vmatprep.subr.mxu0 0.0
    %623 = vmatpush1.msra.mxu0 0.0
    %624 = vmatprep.subr.mxu0 0.0
    %625 = vmatpush1.msra.mxu0 0.0
    %626 = vmatprep.subr.mxu0 0.0
    %627 = vmatpush1.msra.mxu0 0.0
    %628 = vmatprep.subr.mxu0 0.0
    %629 = vmatpush1.msra.mxu0 0.0
    %630 = vmatprep.subr.mxu0 0.0
    %631 = vmatpush1.msra.mxu0 0.0
    %632 = vmatprep.mubr.f32.mxu0 0.0
    %633 = vmatmul.mubr.f32.gmra.mrb[0].mxu0 %v563
    %v634 = vpop.f32.mrb[0].mxu0
    %v635 = vadd.f32 0.0, %v634
    %v636 = vpop.f32.mrb[0].mxu0
    %637 = vdwg.mxu0
    %v638 = vadd.f32 %v445, %v635
    %639 = vrot.lane.b32.xlu0 %v61, 116
    %v640 = vpop.permute.xlu0 %639
    %641 = vrot.lane.b32.xlu0 %v62, 116
    %v642 = vpop.permute.xlu0 %641
    %643 = vrot.lane.b32.xlu0 %v63, 116
    %v644 = vpop.permute.xlu0 %643
    %645 = vrot.lane.b32.xlu0 %v64, 116
    %v646 = vpop.permute.xlu0 %645
    %647 = vrot.lane.b32.xlu0 %v65, 116
    %v648 = vpop.permute.xlu0 %647
    %649 = vrot.lane.b32.xlu0 %v66, 116
    %v650 = vpop.permute.xlu0 %649
    %651 = vrot.lane.b32.xlu0 %v67, 116
    %v652 = vpop.permute.xlu0 %651
    %653 = vrot.lane.b32.xlu0 %v68, 116
    %v654 = vpop.permute.xlu0 %653
    %v663 = vsel %vm69, %v640, 0.0
    %664 = vadd.xlane.f32.xlu0 %v663
    %v665 = vpop.xlane.xlu0 %664
    %v666 = vsel %vm69, %v642, 0.0
    %667 = vadd.xlane.f32.xlu0 %v666
    %v668 = vpop.xlane.xlu0 %667
    %v669 = vsel %vm69, %v644, 0.0
    %670 = vadd.xlane.f32.xlu0 %v669
    %v671 = vpop.xlane.xlu0 %670
    %v672 = vsel %vm69, %v646, 0.0
    %673 = vadd.xlane.f32.xlu0 %v672
    %v674 = vpop.xlane.xlu0 %673
    %v675 = vsel %vm69, %v648, 0.0
    %676 = vadd.xlane.f32.xlu0 %v675
    %v677 = vpop.xlane.xlu0 %676
    %v678 = vsel %vm69, %v650, 0.0
    %679 = vadd.xlane.f32.xlu0 %v678
    %v680 = vpop.xlane.xlu0 %679
    %v681 = vsel %vm69, %v652, 0.0
    %682 = vadd.xlane.f32.xlu0 %v681
    %v683 = vpop.xlane.xlu0 %682
    %v684 = vsel %vm69, %v654, 0.0
    %685 = vadd.xlane.f32.xlu0 %v684
    %v686 = vpop.xlane.xlu0 %685
    %v695 = vlaneseq
    %v696 = vshrl.u32 %v695, 7
    %v697 = vsub.s32 %v103, %v696
    %v698 = vrot.slane %v665, %v697
    %v699 = vlaneseq
    %v700 = vshrl.u32 %v699, 7
    %v701 = vsub.s32 %v103, %v700
    %v702 = vrot.slane %v668, %v701
    %v703 = vlaneseq
    %v704 = vshrl.u32 %v703, 7
    %v705 = vsub.s32 %v103, %v704
    %v706 = vrot.slane %v671, %v705
    %v707 = vlaneseq
    %v708 = vshrl.u32 %v707, 7
    %v709 = vsub.s32 %v103, %v708
    %v710 = vrot.slane %v674, %v709
    %v711 = vlaneseq
    %v712 = vshrl.u32 %v711, 7
    %v713 = vsub.s32 %v103, %v712
    %v714 = vrot.slane %v677, %v713
    %v715 = vlaneseq
    %v716 = vshrl.u32 %v715, 7
    %v717 = vsub.s32 %v103, %v716
    %v718 = vrot.slane %v680, %v717
    %v719 = vlaneseq
    %v720 = vshrl.u32 %v719, 7
    %v721 = vsub.s32 %v103, %v720
    %v722 = vrot.slane %v683, %v721
    %v723 = vlaneseq
    %v724 = vshrl.u32 %v723, 7
    %v725 = vsub.s32 %v103, %v724
    %v726 = vrot.slane %v686, %v725
    %v727 = vsel %vm136, %v702, %v698
    %v728 = vsel %vm138, %v706, %v727
    %v729 = vsel %vm140, %v710, %v728
    %v730 = vsel %vm136, %v718, %v714
    %v731 = vsel %vm138, %v722, %v730
    %v732 = vsel %vm140, %v726, %v731
    %v735 = vsel %vm69, %v729, 0.0
    %736 = vadd.xlane.f32.xlu0 %v735
    %v737 = vpop.xlane.xlu0 %736
    %v738 = vsel %vm69, %v732, 0.0
    %739 = vadd.xlane.f32.xlu0 %v738
    %v740 = vpop.xlane.xlu0 %739
    %v741 = vmul.f32 %v737, 0.0625
    %v742 = vmul.f32 %v740, 0.0625
    %s743 = scalar_lea.vmem [#allocation6], 12
    %v744 = vld [vmem:[%s743] sm:$0xf]
    %v747 = vlaneseq
    %v748 = vshrl.u32 %v747, 7
    %v749 = vsub.s32 %v103, %v748
    %v750 = vrot.slane %v741, %v749
    %v751 = vlaneseq
    %v752 = vshrl.u32 %v751, 7
    %v753 = vsub.s32 %v103, %v752
    %v754 = vrot.slane %v742, %v753
    %v755 = vsel %vm136, %v754, %v750
    %v756 = vsel %vm167, %v755, 0
    %v759 = vsel %vm170, %v744, 0
    %761 = vmatprep.subr.mxu0 0.0
    %762 = vmatpush1.msra.mxu0 %v759
    %763 = vmatprep.subr.mxu0 0.0
    %764 = vmatpush1.msra.mxu0 0.0
    %765 = vmatprep.subr.mxu0 0.0
    %766 = vmatpush1.msra.mxu0 0.0
    %767 = vmatprep.subr.mxu0 0.0
    %768 = vmatpush1.msra.mxu0 0.0
    %769 = vmatprep.subr.mxu0 0.0
    %770 = vmatpush1.msra.mxu0 0.0
    %771 = vmatprep.subr.mxu0 0.0
    %772 = vmatpush1.msra.mxu0 0.0
    %773 = vmatprep.subr.mxu0 0.0
    %774 = vmatpush1.msra.mxu0 0.0
    %775 = vmatprep.subr.mxu0 0.0
    %776 = vmatpush1.msra.mxu0 0.0
    %777 = vmatprep.subr.mxu0 0.0
    %778 = vmatpush1.msra.mxu0 0.0
    %779 = vmatprep.subr.mxu0 0.0
    %780 = vmatpush1.msra.mxu0 0.0
    %781 = vmatprep.subr.mxu0 0.0
    %782 = vmatpush1.msra.mxu0 0.0
    %783 = vmatprep.subr.mxu0 0.0
    %784 = vmatpush1.msra.mxu0 0.0
    %785 = vmatprep.subr.mxu0 0.0
    %786 = vmatpush1.msra.mxu0 0.0
    %787 = vmatprep.subr.mxu0 0.0
    %788 = vmatpush1.msra.mxu0 0.0
    %789 = vmatprep.subr.mxu0 0.0
    %790 = vmatpush1.msra.mxu0 0.0
    %791 = vmatprep.subr.mxu0 0.0
    %792 = vmatpush1.msra.mxu0 0.0
    %793 = vmatprep.subr.mxu0 0.0
    %794 = vmatpush1.msra.mxu0 0.0
    %795 = vmatprep.subr.mxu0 0.0
    %796 = vmatpush1.msra.mxu0 0.0
    %797 = vmatprep.subr.mxu0 0.0
    %798 = vmatpush1.msra.mxu0 0.0
    %799 = vmatprep.subr.mxu0 0.0
    %800 = vmatpush1.msra.mxu0 0.0
    %801 = vmatprep.subr.mxu0 0.0
    %802 = vmatpush1.msra.mxu0 0.0
    %803 = vmatprep.subr.mxu0 0.0
    %804 = vmatpush1.msra.mxu0 0.0
    %805 = vmatprep.subr.mxu0 0.0
    %806 = vmatpush1.msra.mxu0 0.0
    %807 = vmatprep.subr.mxu0 0.0
    %808 = vmatpush1.msra.mxu0 0.0
    %809 = vmatprep.subr.mxu0 0.0
    %810 = vmatpush1.msra.mxu0 0.0
    %811 = vmatprep.subr.mxu0 0.0
    %812 = vmatpush1.msra.mxu0 0.0
    %813 = vmatprep.subr.mxu0 0.0
    %814 = vmatpush1.msra.mxu0 0.0
    %815 = vmatprep.subr.mxu0 0.0
    %816 = vmatpush1.msra.mxu0 0.0
    %817 = vmatprep.subr.mxu0 0.0
    %818 = vmatpush1.msra.mxu0 0.0
    %819 = vmatprep.subr.mxu0 0.0
    %820 = vmatpush1.msra.mxu0 0.0
    %821 = vmatprep.subr.mxu0 0.0
    %822 = vmatpush1.msra.mxu0 0.0
    %823 = vmatprep.subr.mxu0 0.0
    %824 = vmatpush1.msra.mxu0 0.0
    %825 = vmatprep.mubr.f32.mxu0 0.0
    %826 = vmatmul.mubr.f32.gmra.mrb[0].mxu0 %v756
    %v827 = vpop.f32.mrb[0].mxu0
    %v828 = vadd.f32 0.0, %v827
    %v829 = vpop.f32.mrb[0].mxu0
    %830 = vdwg.mxu0
    %v831 = vadd.f32 %v638, %v828
    %v832 = vld [vmem:[#allocation3 + $0x4] sm:$0xf]
    %v833 = vld [vmem:[#allocation3 + $0x14] sm:$0xf]
    %v834 = vld [vmem:[#allocation3 + $0x24] sm:$0xf]
    %v835 = vld [vmem:[#allocation3 + $0x34] sm:$0xf]
    %v836 = vld [vmem:[#allocation3 + $0x44] sm:$0xf]
    %v837 = vld [vmem:[#allocation3 + $0x54] sm:$0xf]
    %v838 = vld [vmem:[#allocation3 + $0x64] sm:$0xf]
    %v839 = vld [vmem:[#allocation3 + $0x74] sm:$0xf]
    %v840 = vsel %vm69, %v832, 0.0
    %841 = vadd.xlane.f32.xlu0 %v840
    %v842 = vpop.xlane.xlu0 %841
    %v843 = vsel %vm69, %v833, 0.0
    %844 = vadd.xlane.f32.xlu0 %v843
    %v845 = vpop.xlane.xlu0 %844
    %v846 = vsel %vm69, %v834, 0.0
    %847 = vadd.xlane.f32.xlu0 %v846
    %v848 = vpop.xlane.xlu0 %847
    %v849 = vsel %vm69, %v835, 0.0
    %850 = vadd.xlane.f32.xlu0 %v849
    %v851 = vpop.xlane.xlu0 %850
    %v852 = vsel %vm69, %v836, 0.0
    %853 = vadd.xlane.f32.xlu0 %v852
    %v854 = vpop.xlane.xlu0 %853
    %v855 = vsel %vm69, %v837, 0.0
    %856 = vadd.xlane.f32.xlu0 %v855
    %v857 = vpop.xlane.xlu0 %856
    %v858 = vsel %vm69, %v838, 0.0
    %859 = vadd.xlane.f32.xlu0 %v858
    %v860 = vpop.xlane.xlu0 %859
    %v861 = vsel %vm69, %v839, 0.0
    %862 = vadd.xlane.f32.xlu0 %v861
    %v863 = vpop.xlane.xlu0 %862
    %v872 = vlaneseq
    %v873 = vshrl.u32 %v872, 7
    %v874 = vsub.s32 %v103, %v873
    %v875 = vrot.slane %v842, %v874
    %v876 = vlaneseq
    %v877 = vshrl.u32 %v876, 7
    %v878 = vsub.s32 %v103, %v877
    %v879 = vrot.slane %v845, %v878
    %v880 = vlaneseq
    %v881 = vshrl.u32 %v880, 7
    %v882 = vsub.s32 %v103, %v881
    %v883 = vrot.slane %v848, %v882
    %v884 = vlaneseq
    %v885 = vshrl.u32 %v884, 7
    %v886 = vsub.s32 %v103, %v885
    %v887 = vrot.slane %v851, %v886
    %v888 = vlaneseq
    %v889 = vshrl.u32 %v888, 7
    %v890 = vsub.s32 %v103, %v889
    %v891 = vrot.slane %v854, %v890
    %v892 = vlaneseq
    %v893 = vshrl.u32 %v892, 7
    %v894 = vsub.s32 %v103, %v893
    %v895 = vrot.slane %v857, %v894
    %v896 = vlaneseq
    %v897 = vshrl.u32 %v896, 7
    %v898 = vsub.s32 %v103, %v897
    %v899 = vrot.slane %v860, %v898
    %v900 = vlaneseq
    %v901 = vshrl.u32 %v900, 7
    %v902 = vsub.s32 %v103, %v901
    %v903 = vrot.slane %v863, %v902
    %v904 = vsel %vm136, %v879, %v875
    %v905 = vsel %vm138, %v883, %v904
    %v906 = vsel %vm140, %v887, %v905
    %v907 = vsel %vm136, %v895, %v891
    %v908 = vsel %vm138, %v899, %v907
    %v909 = vsel %vm140, %v903, %v908
    %v912 = vsel %vm69, %v906, 0.0
    %913 = vadd.xlane.f32.xlu0 %v912
    %v914 = vpop.xlane.xlu0 %913
    %v915 = vsel %vm69, %v909, 0.0
    %916 = vadd.xlane.f32.xlu0 %v915
    %v917 = vpop.xlane.xlu0 %916
    %v918 = vmul.f32 %v914, 0.0625
    %v919 = vmul.f32 %v917, 0.0625
    %s920 = scalar_lea.vmem [#allocation6], 16
    %v921 = vld [vmem:[%s920] sm:$0xf]
    %v924 = vlaneseq
    %v925 = vshrl.u32 %v924, 7
    %v926 = vsub.s32 %v103, %v925
    %v927 = vrot.slane %v918, %v926
    %v928 = vlaneseq
    %v929 = vshrl.u32 %v928, 7
    %v930 = vsub.s32 %v103, %v929
    %v931 = vrot.slane %v919, %v930
    %v932 = vsel %vm136, %v931, %v927
    %v933 = vsel %vm167, %v932, 0
    %v936 = vsel %vm170, %v921, 0
    %938 = vmatprep.subr.mxu0 0.0
    %939 = vmatpush1.msra.mxu0 %v936
    %940 = vmatprep.subr.mxu0 0.0
    %941 = vmatpush1.msra.mxu0 0.0
    %942 = vmatprep.subr.mxu0 0.0
    %943 = vmatpush1.msra.mxu0 0.0
    %944 = vmatprep.subr.mxu0 0.0
    %945 = vmatpush1.msra.mxu0 0.0
    %946 = vmatprep.subr.mxu0 0.0
    %947 = vmatpush1.msra.mxu0 0.0
    %948 = vmatprep.subr.mxu0 0.0
    %949 = vmatpush1.msra.mxu0 0.0
    %950 = vmatprep.subr.mxu0 0.0
    %951 = vmatpush1.msra.mxu0 0.0
    %952 = vmatprep.subr.mxu0 0.0
    %953 = vmatpush1.msra.mxu0 0.0
    %954 = vmatprep.subr.mxu0 0.0
    %955 = vmatpush1.msra.mxu0 0.0
    %956 = vmatprep.subr.mxu0 0.0
    %957 = vmatpush1.msra.mxu0 0.0
    %958 = vmatprep.subr.mxu0 0.0
    %959 = vmatpush1.msra.mxu0 0.0
    %960 = vmatprep.subr.mxu0 0.0
    %961 = vmatpush1.msra.mxu0 0.0
    %962 = vmatprep.subr.mxu0 0.0
    %963 = vmatpush1.msra.mxu0 0.0
    %964 = vmatprep.subr.mxu0 0.0
    %965 = vmatpush1.msra.mxu0 0.0
    %966 = vmatprep.subr.mxu0 0.0
    %967 = vmatpush1.msra.mxu0 0.0
    %968 = vmatprep.subr.mxu0 0.0
    %969 = vmatpush1.msra.mxu0 0.0
    %970 = vmatprep.subr.mxu0 0.0
    %971 = vmatpush1.msra.mxu0 0.0
    %972 = vmatprep.subr.mxu0 0.0
    %973 = vmatpush1.msra.mxu0 0.0
    %974 = vmatprep.subr.mxu0 0.0
    %975 = vmatpush1.msra.mxu0 0.0
    %976 = vmatprep.subr.mxu0 0.0
    %977 = vmatpush1.msra.mxu0 0.0
    %978 = vmatprep.subr.mxu0 0.0
    %979 = vmatpush1.msra.mxu0 0.0
    %980 = vmatprep.subr.mxu0 0.0
    %981 = vmatpush1.msra.mxu0 0.0
    %982 = vmatprep.subr.mxu0 0.0
    %983 = vmatpush1.msra.mxu0 0.0
    %984 = vmatprep.subr.mxu0 0.0
    %985 = vmatpush1.msra.mxu0 0.0
    %986 = vmatprep.subr.mxu0 0.0
    %987 = vmatpush1.msra.mxu0 0.0
    %988 = vmatprep.subr.mxu0 0.0
    %989 = vmatpush1.msra.mxu0 0.0
    %990 = vmatprep.subr.mxu0 0.0
    %991 = vmatpush1.msra.mxu0 0.0
    %992 = vmatprep.subr.mxu0 0.0
    %993 = vmatpush1.msra.mxu0 0.0
    %994 = vmatprep.subr.mxu0 0.0
    %995 = vmatpush1.msra.mxu0 0.0
    %996 = vmatprep.subr.mxu0 0.0
    %997 = vmatpush1.msra.mxu0 0.0
    %998 = vmatprep.subr.mxu0 0.0
    %999 = vmatpush1.msra.mxu0 0.0
    %1000 = vmatprep.subr.mxu0 0.0
    %1001 = vmatpush1.msra.mxu0 0.0
    %1002 = vmatprep.mubr.f32.mxu0 0.0
    %1003 = vmatmul.mubr.f32.gmra.mrb[0].mxu0 %v933
    %v1004 = vpop.f32.mrb[0].mxu0
    %v1005 = vadd.f32 0.0, %v1004
    %v1006 = vpop.f32.mrb[0].mxu0
    %1007 = vdwg.mxu0
    %v1008 = vadd.f32 %v831, %v1005
    %1017 = vrot.lane.b32.xlu0 %v832, 124
    %v1018 = vpop.permute.xlu0 %1017
    %1019 = vrot.lane.b32.xlu0 %v833, 124
    %v1020 = vpop.permute.xlu0 %1019
    %1021 = vrot.lane.b32.xlu0 %v834, 124
    %v1022 = vpop.permute.xlu0 %1021
    %1023 = vrot.lane.b32.xlu0 %v835, 124
    %v1024 = vpop.permute.xlu0 %1023
    %1025 = vrot.lane.b32.xlu0 %v836, 124
    %v1026 = vpop.permute.xlu0 %1025
    %1027 = vrot.lane.b32.xlu0 %v837, 124
    %v1028 = vpop.permute.xlu0 %1027
    %1029 = vrot.lane.b32.xlu0 %v838, 124
    %v1030 = vpop.permute.xlu0 %1029
    %1031 = vrot.lane.b32.xlu0 %v839, 124
    %v1032 = vpop.permute.xlu0 %1031
    %v1041 = vsel %vm69, %v1018, 0.0
    %1042 = vadd.xlane.f32.xlu0 %v1041
    %v1043 = vpop.xlane.xlu0 %1042
    %v1044 = vsel %vm69, %v1020, 0.0
    %1045 = vadd.xlane.f32.xlu0 %v1044
    %v1046 = vpop.xlane.xlu0 %1045
    %v1047 = vsel %vm69, %v1022, 0.0
    %1048 = vadd.xlane.f32.xlu0 %v1047
    %v1049 = vpop.xlane.xlu0 %1048
    %v1050 = vsel %vm69, %v1024, 0.0
    %1051 = vadd.xlane.f32.xlu0 %v1050
    %v1052 = vpop.xlane.xlu0 %1051
    %v1053 = vsel %vm69, %v1026, 0.0
    %1054 = vadd.xlane.f32.xlu0 %v1053
    %v1055 = vpop.xlane.xlu0 %1054
    %v1056 = vsel %vm69, %v1028, 0.0
    %1057 = vadd.xlane.f32.xlu0 %v1056
    %v1058 = vpop.xlane.xlu0 %1057
    %v1059 = vsel %vm69, %v1030, 0.0
    %1060 = vadd.xlane.f32.xlu0 %v1059
    %v1061 = vpop.xlane.xlu0 %1060
    %v1062 = vsel %vm69, %v1032, 0.0
    %1063 = vadd.xlane.f32.xlu0 %v1062
    %v1064 = vpop.xlane.xlu0 %1063
    %v1073 = vlaneseq
    %v1074 = vshrl.u32 %v1073, 7
    %v1075 = vsub.s32 %v103, %v1074
    %v1076 = vrot.slane %v1043, %v1075
    %v1077 = vlaneseq
    %v1078 = vshrl.u32 %v1077, 7
    %v1079 = vsub.s32 %v103, %v1078
    %v1080 = vrot.slane %v1046, %v1079
    %v1081 = vlaneseq
    %v1082 = vshrl.u32 %v1081, 7
    %v1083 = vsub.s32 %v103, %v1082
    %v1084 = vrot.slane %v1049, %v1083
    %v1085 = vlaneseq
    %v1086 = vshrl.u32 %v1085, 7
    %v1087 = vsub.s32 %v103, %v1086
    %v1088 = vrot.slane %v1052, %v1087
    %v1089 = vlaneseq
    %v1090 = vshrl.u32 %v1089, 7
    %v1091 = vsub.s32 %v103, %v1090
    %v1092 = vrot.slane %v1055, %v1091
    %v1093 = vlaneseq
    %v1094 = vshrl.u32 %v1093, 7
    %v1095 = vsub.s32 %v103, %v1094
    %v1096 = vrot.slane %v1058, %v1095
    %v1097 = vlaneseq
    %v1098 = vshrl.u32 %v1097, 7
    %v1099 = vsub.s32 %v103, %v1098
    %v1100 = vrot.slane %v1061, %v1099
    %v1101 = vlaneseq
    %v1102 = vshrl.u32 %v1101, 7
    %v1103 = vsub.s32 %v103, %v1102
    %v1104 = vrot.slane %v1064, %v1103
    %v1105 = vsel %vm136, %v1080, %v1076
    %v1106 = vsel %vm138, %v1084, %v1105
    %v1107 = vsel %vm140, %v1088, %v1106
    %v1108 = vsel %vm136, %v1096, %v1092
    %v1109 = vsel %vm138, %v1100, %v1108
    %v1110 = vsel %vm140, %v1104, %v1109
    %v1113 = vsel %vm69, %v1107, 0.0
    %1114 = vadd.xlane.f32.xlu0 %v1113
    %v1115 = vpop.xlane.xlu0 %1114
    %v1116 = vsel %vm69, %v1110, 0.0
    %1117 = vadd.xlane.f32.xlu0 %v1116
    %v1118 = vpop.xlane.xlu0 %1117
    %v1119 = vmul.f32 %v1115, 0.0625
    %v1120 = vmul.f32 %v1118, 0.0625
    %s1121 = scalar_lea.vmem [#allocation6], 20
    %v1122 = vld [vmem:[%s1121] sm:$0xf]
    %v1125 = vlaneseq
    %v1126 = vshrl.u32 %v1125, 7
    %v1127 = vsub.s32 %v103, %v1126
    %v1128 = vrot.slane %v1119, %v1127
    %v1129 = vlaneseq
    %v1130 = vshrl.u32 %v1129, 7
    %v1131 = vsub.s32 %v103, %v1130
    %v1132 = vrot.slane %v1120, %v1131
    %v1133 = vsel %vm136, %v1132, %v1128
    %v1134 = vsel %vm167, %v1133, 0
    %v1137 = vsel %vm170, %v1122, 0
    %1139 = vmatprep.subr.mxu0 0.0
    %1140 = vmatpush1.msra.mxu0 %v1137
    %1141 = vmatprep.subr.mxu0 0.0
    %1142 = vmatpush1.msra.mxu0 0.0
    %1143 = vmatprep.subr.mxu0 0.0
    %1144 = vmatpush1.msra.mxu0 0.0
    %1145 = vmatprep.subr.mxu0 0.0
    %1146 = vmatpush1.msra.mxu0 0.0
    %1147 = vmatprep.subr.mxu0 0.0
    %1148 = vmatpush1.msra.mxu0 0.0
    %1149 = vmatprep.subr.mxu0 0.0
    %1150 = vmatpush1.msra.mxu0 0.0
    %1151 = vmatprep.subr.mxu0 0.0
    %1152 = vmatpush1.msra.mxu0 0.0
    %1153 = vmatprep.subr.mxu0 0.0
    %1154 = vmatpush1.msra.mxu0 0.0
    %1155 = vmatprep.subr.mxu0 0.0
    %1156 = vmatpush1.msra.mxu0 0.0
    %1157 = vmatprep.subr.mxu0 0.0
    %1158 = vmatpush1.msra.mxu0 0.0
    %1159 = vmatprep.subr.mxu0 0.0
    %1160 = vmatpush1.msra.mxu0 0.0
    %1161 = vmatprep.subr.mxu0 0.0
    %1162 = vmatpush1.msra.mxu0 0.0
    %1163 = vmatprep.subr.mxu0 0.0
    %1164 = vmatpush1.msra.mxu0 0.0
    %1165 = vmatprep.subr.mxu0 0.0
    %1166 = vmatpush1.msra.mxu0 0.0
    %1167 = vmatprep.subr.mxu0 0.0
    %1168 = vmatpush1.msra.mxu0 0.0
    %1169 = vmatprep.subr.mxu0 0.0
    %1170 = vmatpush1.msra.mxu0 0.0
    %1171 = vmatprep.subr.mxu0 0.0
    %1172 = vmatpush1.msra.mxu0 0.0
    %1173 = vmatprep.subr.mxu0 0.0
    %1174 = vmatpush1.msra.mxu0 0.0
    %1175 = vmatprep.subr.mxu0 0.0
    %1176 = vmatpush1.msra.mxu0 0.0
    %1177 = vmatprep.subr.mxu0 0.0
    %1178 = vmatpush1.msra.mxu0 0.0
    %1179 = vmatprep.subr.mxu0 0.0
    %1180 = vmatpush1.msra.mxu0 0.0
    %1181 = vmatprep.subr.mxu0 0.0
    %1182 = vmatpush1.msra.mxu0 0.0
    %1183 = vmatprep.subr.mxu0 0.0
    %1184 = vmatpush1.msra.mxu0 0.0
    %1185 = vmatprep.subr.mxu0 0.0
    %1186 = vmatpush1.msra.mxu0 0.0
    %1187 = vmatprep.subr.mxu0 0.0
    %1188 = vmatpush1.msra.mxu0 0.0
    %1189 = vmatprep.subr.mxu0 0.0
    %1190 = vmatpush1.msra.mxu0 0.0
    %1191 = vmatprep.subr.mxu0 0.0
    %1192 = vmatpush1.msra.mxu0 0.0
    %1193 = vmatprep.subr.mxu0 0.0
    %1194 = vmatpush1.msra.mxu0 0.0
    %1195 = vmatprep.subr.mxu0 0.0
    %1196 = vmatpush1.msra.mxu0 0.0
    %1197 = vmatprep.subr.mxu0 0.0
    %1198 = vmatpush1.msra.mxu0 0.0
    %1199 = vmatprep.subr.mxu0 0.0
    %1200 = vmatpush1.msra.mxu0 0.0
    %1201 = vmatprep.subr.mxu0 0.0
    %1202 = vmatpush1.msra.mxu0 0.0
    %1203 = vmatprep.mubr.f32.mxu0 0.0
    %1204 = vmatmul.mubr.f32.gmra.mrb[0].mxu0 %v1134
    %v1205 = vpop.f32.mrb[0].mxu0
    %v1206 = vadd.f32 0.0, %v1205
    %v1207 = vpop.f32.mrb[0].mxu0
    %1208 = vdwg.mxu0
    %v1209 = vadd.f32 %v1008, %v1206
    %1210 = vrot.lane.b32.xlu0 %v832, 120
    %v1211 = vpop.permute.xlu0 %1210
    %1212 = vrot.lane.b32.xlu0 %v833, 120
    %v1213 = vpop.permute.xlu0 %1212
    %1214 = vrot.lane.b32.xlu0 %v834, 120
    %v1215 = vpop.permute.xlu0 %1214
    %1216 = vrot.lane.b32.xlu0 %v835, 120
    %v1217 = vpop.permute.xlu0 %1216
    %1218 = vrot.lane.b32.xlu0 %v836, 120
    %v1219 = vpop.permute.xlu0 %1218
    %1220 = vrot.lane.b32.xlu0 %v837, 120
    %v1221 = vpop.permute.xlu0 %1220
    %1222 = vrot.lane.b32.xlu0 %v838, 120
    %v1223 = vpop.permute.xlu0 %1222
    %1224 = vrot.lane.b32.xlu0 %v839, 120
    %v1225 = vpop.permute.xlu0 %1224
    %v1234 = vsel %vm69, %v1211, 0.0
    %1235 = vadd.xlane.f32.xlu0 %v1234
    %v1236 = vpop.xlane.xlu0 %1235
    %v1237 = vsel %vm69, %v1213, 0.0
    %1238 = vadd.xlane.f32.xlu0 %v1237
    %v1239 = vpop.xlane.xlu0 %1238
    %v1240 = vsel %vm69, %v1215, 0.0
    %1241 = vadd.xlane.f32.xlu0 %v1240
    %v1242 = vpop.xlane.xlu0 %1241
    %v1243 = vsel %vm69, %v1217, 0.0
    %1244 = vadd.xlane.f32.xlu0 %v1243
    %v1245 = vpop.xlane.xlu0 %1244
    %v1246 = vsel %vm69, %v1219, 0.0
    %1247 = vadd.xlane.f32.xlu0 %v1246
    %v1248 = vpop.xlane.xlu0 %1247
    %v1249 = vsel %vm69, %v1221, 0.0
    %1250 = vadd.xlane.f32.xlu0 %v1249
    %v1251 = vpop.xlane.xlu0 %1250
    %v1252 = vsel %vm69, %v1223, 0.0
    %1253 = vadd.xlane.f32.xlu0 %v1252
    %v1254 = vpop.xlane.xlu0 %1253
    %v1255 = vsel %vm69, %v1225, 0.0
    %1256 = vadd.xlane.f32.xlu0 %v1255
    %v1257 = vpop.xlane.xlu0 %1256
    %v1266 = vlaneseq
    %v1267 = vshrl.u32 %v1266, 7
    %v1268 = vsub.s32 %v103, %v1267
    %v1269 = vrot.slane %v1236, %v1268
    %v1270 = vlaneseq
    %v1271 = vshrl.u32 %v1270, 7
    %v1272 = vsub.s32 %v103, %v1271
    %v1273 = vrot.slane %v1239, %v1272
    %v1274 = vlaneseq
    %v1275 = vshrl.u32 %v1274, 7
    %v1276 = vsub.s32 %v103, %v1275
    %v1277 = vrot.slane %v1242, %v1276
    %v1278 = vlaneseq
    %v1279 = vshrl.u32 %v1278, 7
    %v1280 = vsub.s32 %v103, %v1279
    %v1281 = vrot.slane %v1245, %v1280
    %v1282 = vlaneseq
    %v1283 = vshrl.u32 %v1282, 7
    %v1284 = vsub.s32 %v103, %v1283
    %v1285 = vrot.slane %v1248, %v1284
    %v1286 = vlaneseq
    %v1287 = vshrl.u32 %v1286, 7
    %v1288 = vsub.s32 %v103, %v1287
    %v1289 = vrot.slane %v1251, %v1288
    %v1290 = vlaneseq
    %v1291 = vshrl.u32 %v1290, 7
    %v1292 = vsub.s32 %v103, %v1291
    %v1293 = vrot.slane %v1254, %v1292
    %v1294 = vlaneseq
    %v1295 = vshrl.u32 %v1294, 7
    %v1296 = vsub.s32 %v103, %v1295
    %v1297 = vrot.slane %v1257, %v1296
    %v1298 = vsel %vm136, %v1273, %v1269
    %v1299 = vsel %vm138, %v1277, %v1298
    %v1300 = vsel %vm140, %v1281, %v1299
    %v1301 = vsel %vm136, %v1289, %v1285
    %v1302 = vsel %vm138, %v1293, %v1301
    %v1303 = vsel %vm140, %v1297, %v1302
    %v1306 = vsel %vm69, %v1300, 0.0
    %1307 = vadd.xlane.f32.xlu0 %v1306
    %v1308 = vpop.xlane.xlu0 %1307
    %v1309 = vsel %vm69, %v1303, 0.0
    %1310 = vadd.xlane.f32.xlu0 %v1309
    %v1311 = vpop.xlane.xlu0 %1310
    %v1312 = vmul.f32 %v1308, 0.0625
    %v1313 = vmul.f32 %v1311, 0.0625
    %s1314 = scalar_lea.vmem [#allocation6], 24
    %v1315 = vld [vmem:[%s1314] sm:$0xf]
    %v1318 = vlaneseq
    %v1319 = vshrl.u32 %v1318, 7
    %v1320 = vsub.s32 %v103, %v1319
    %v1321 = vrot.slane %v1312, %v1320
    %v1322 = vlaneseq
    %v1323 = vshrl.u32 %v1322, 7
    %v1324 = vsub.s32 %v103, %v1323
    %v1325 = vrot.slane %v1313, %v1324
    %v1326 = vsel %vm136, %v1325, %v1321
    %v1327 = vsel %vm167, %v1326, 0
    %v1330 = vsel %vm170, %v1315, 0
    %1332 = vmatprep.subr.mxu0 0.0
    %1333 = vmatpush1.msra.mxu0 %v1330
    %1334 = vmatprep.subr.mxu0 0.0
    %1335 = vmatpush1.msra.mxu0 0.0
    %1336 = vmatprep.subr.mxu0 0.0
    %1337 = vmatpush1.msra.mxu0 0.0
    %1338 = vmatprep.subr.mxu0 0.0
    %1339 = vmatpush1.msra.mxu0 0.0
    %1340 = vmatprep.subr.mxu0 0.0
    %1341 = vmatpush1.msra.mxu0 0.0
    %1342 = vmatprep.subr.mxu0 0.0
    %1343 = vmatpush1.msra.mxu0 0.0
    %1344 = vmatprep.subr.mxu0 0.0
    %1345 = vmatpush1.msra.mxu0 0.0
    %1346 = vmatprep.subr.mxu0 0.0
    %1347 = vmatpush1.msra.mxu0 0.0
    %1348 = vmatprep.subr.mxu0 0.0
    %1349 = vmatpush1.msra.mxu0 0.0
    %1350 = vmatprep.subr.mxu0 0.0
    %1351 = vmatpush1.msra.mxu0 0.0
    %1352 = vmatprep.subr.mxu0 0.0
    %1353 = vmatpush1.msra.mxu0 0.0
    %1354 = vmatprep.subr.mxu0 0.0
    %1355 = vmatpush1.msra.mxu0 0.0
    %1356 = vmatprep.subr.mxu0 0.0
    %1357 = vmatpush1.msra.mxu0 0.0
    %1358 = vmatprep.subr.mxu0 0.0
    %1359 = vmatpush1.msra.mxu0 0.0
    %1360 = vmatprep.subr.mxu0 0.0
    %1361 = vmatpush1.msra.mxu0 0.0
    %1362 = vmatprep.subr.mxu0 0.0
    %1363 = vmatpush1.msra.mxu0 0.0
    %1364 = vmatprep.subr.mxu0 0.0
    %1365 = vmatpush1.msra.mxu0 0.0
    %1366 = vmatprep.subr.mxu0 0.0
    %1367 = vmatpush1.msra.mxu0 0.0
    %1368 = vmatprep.subr.mxu0 0.0
    %1369 = vmatpush1.msra.mxu0 0.0
    %1370 = vmatprep.subr.mxu0 0.0
    %1371 = vmatpush1.msra.mxu0 0.0
    %1372 = vmatprep.subr.mxu0 0.0
    %1373 = vmatpush1.msra.mxu0 0.0
    %1374 = vmatprep.subr.mxu0 0.0
    %1375 = vmatpush1.msra.mxu0 0.0
    %1376 = vmatprep.subr.mxu0 0.0
    %1377 = vmatpush1.msra.mxu0 0.0
    %1378 = vmatprep.subr.mxu0 0.0
    %1379 = vmatpush1.msra.mxu0 0.0
    %1380 = vmatprep.subr.mxu0 0.0
    %1381 = vmatpush1.msra.mxu0 0.0
    %1382 = vmatprep.subr.mxu0 0.0
    %1383 = vmatpush1.msra.mxu0 0.0
    %1384 = vmatprep.subr.mxu0 0.0
    %1385 = vmatpush1.msra.mxu0 0.0
    %1386 = vmatprep.subr.mxu0 0.0
    %1387 = vmatpush1.msra.mxu0 0.0
    %1388 = vmatprep.subr.mxu0 0.0
    %1389 = vmatpush1.msra.mxu0 0.0
    %1390 = vmatprep.subr.mxu0 0.0
    %1391 = vmatpush1.msra.mxu0 0.0
    %1392 = vmatprep.subr.mxu0 0.0
    %1393 = vmatpush1.msra.mxu0 0.0
    %1394 = vmatprep.subr.mxu0 0.0
    %1395 = vmatpush1.msra.mxu0 0.0
    %1396 = vmatprep.mubr.f32.mxu0 0.0
    %1397 = vmatmul.mubr.f32.gmra.mrb[0].mxu0 %v1327
    %v1398 = vpop.f32.mrb[0].mxu0
    %v1399 = vadd.f32 0.0, %v1398
    %v1400 = vpop.f32.mrb[0].mxu0
    %1401 = vdwg.mxu0
    %v1402 = vadd.f32 %v1209, %v1399
    %1403 = vrot.lane.b32.xlu0 %v832, 116
    %v1404 = vpop.permute.xlu0 %1403
    %1405 = vrot.lane.b32.xlu0 %v833, 116
    %v1406 = vpop.permute.xlu0 %1405
    %1407 = vrot.lane.b32.xlu0 %v834, 116
    %v1408 = vpop.permute.xlu0 %1407
    %1409 = vrot.lane.b32.xlu0 %v835, 116
    %v1410 = vpop.permute.xlu0 %1409
    %1411 = vrot.lane.b32.xlu0 %v836, 116
    %v1412 = vpop.permute.xlu0 %1411
    %1413 = vrot.lane.b32.xlu0 %v837, 116
    %v1414 = vpop.permute.xlu0 %1413
    %1415 = vrot.lane.b32.xlu0 %v838, 116
    %v1416 = vpop.permute.xlu0 %1415
    %1417 = vrot.lane.b32.xlu0 %v839, 116
    %v1418 = vpop.permute.xlu0 %1417
    %v1427 = vsel %vm69, %v1404, 0.0
    %1428 = vadd.xlane.f32.xlu0 %v1427
    %v1429 = vpop.xlane.xlu0 %1428
    %v1430 = vsel %vm69, %v1406, 0.0
    %1431 = vadd.xlane.f32.xlu0 %v1430
    %v1432 = vpop.xlane.xlu0 %1431
    %v1433 = vsel %vm69, %v1408, 0.0
    %1434 = vadd.xlane.f32.xlu0 %v1433
    %v1435 = vpop.xlane.xlu0 %1434
    %v1436 = vsel %vm69, %v1410, 0.0
    %1437 = vadd.xlane.f32.xlu0 %v1436
    %v1438 = vpop.xlane.xlu0 %1437
    %v1439 = vsel %vm69, %v1412, 0.0
    %1440 = vadd.xlane.f32.xlu0 %v1439
    %v1441 = vpop.xlane.xlu0 %1440
    %v1442 = vsel %vm69, %v1414, 0.0
    %1443 = vadd.xlane.f32.xlu0 %v1442
    %v1444 = vpop.xlane.xlu0 %1443
    %v1445 = vsel %vm69, %v1416, 0.0
    %1446 = vadd.xlane.f32.xlu0 %v1445
    %v1447 = vpop.xlane.xlu0 %1446
    %v1448 = vsel %vm69, %v1418, 0.0
    %1449 = vadd.xlane.f32.xlu0 %v1448
    %v1450 = vpop.xlane.xlu0 %1449
    %v1459 = vlaneseq
    %v1460 = vshrl.u32 %v1459, 7
    %v1461 = vsub.s32 %v103, %v1460
    %v1462 = vrot.slane %v1429, %v1461
    %v1463 = vlaneseq
    %v1464 = vshrl.u32 %v1463, 7
    %v1465 = vsub.s32 %v103, %v1464
    %v1466 = vrot.slane %v1432, %v1465
    %v1467 = vlaneseq
    %v1468 = vshrl.u32 %v1467, 7
    %v1469 = vsub.s32 %v103, %v1468
    %v1470 = vrot.slane %v1435, %v1469
    %v1471 = vlaneseq
    %v1472 = vshrl.u32 %v1471, 7
    %v1473 = vsub.s32 %v103, %v1472
    %v1474 = vrot.slane %v1438, %v1473
    %v1475 = vlaneseq
    %v1476 = vshrl.u32 %v1475, 7
    %v1477 = vsub.s32 %v103, %v1476
    %v1478 = vrot.slane %v1441, %v1477
    %v1479 = vlaneseq
    %v1480 = vshrl.u32 %v1479, 7
    %v1481 = vsub.s32 %v103, %v1480
    %v1482 = vrot.slane %v1444, %v1481
    %v1483 = vlaneseq
    %v1484 = vshrl.u32 %v1483, 7
    %v1485 = vsub.s32 %v103, %v1484
    %v1486 = vrot.slane %v1447, %v1485
    %v1487 = vlaneseq
    %v1488 = vshrl.u32 %v1487, 7
    %v1489 = vsub.s32 %v103, %v1488
    %v1490 = vrot.slane %v1450, %v1489
    %v1491 = vsel %vm136, %v1466, %v1462
    %v1492 = vsel %vm138, %v1470, %v1491
    %v1493 = vsel %vm140, %v1474, %v1492
    %v1494 = vsel %vm136, %v1482, %v1478
    %v1495 = vsel %vm138, %v1486, %v1494
    %v1496 = vsel %vm140, %v1490, %v1495
    %v1499 = vsel %vm69, %v1493, 0.0
    %1500 = vadd.xlane.f32.xlu0 %v1499
    %v1501 = vpop.xlane.xlu0 %1500
    %v1502 = vsel %vm69, %v1496, 0.0
    %1503 = vadd.xlane.f32.xlu0 %v1502
    %v1504 = vpop.xlane.xlu0 %1503
    %v1505 = vmul.f32 %v1501, 0.0625
    %v1506 = vmul.f32 %v1504, 0.0625
    %s1507 = scalar_lea.vmem [#allocation6], 28
    %v1508 = vld [vmem:[%s1507] sm:$0xf]
    %v1511 = vlaneseq
    %v1512 = vshrl.u32 %v1511, 7
    %v1513 = vsub.s32 %v103, %v1512
    %v1514 = vrot.slane %v1505, %v1513
    %v1515 = vlaneseq
    %v1516 = vshrl.u32 %v1515, 7
    %v1517 = vsub.s32 %v103, %v1516
    %v1518 = vrot.slane %v1506, %v1517
    %v1519 = vsel %vm136, %v1518, %v1514
    %v1520 = vsel %vm167, %v1519, 0
    %v1523 = vsel %vm170, %v1508, 0
    %1525 = vmatprep.subr.mxu0 0.0
    %1526 = vmatpush1.msra.mxu0 %v1523
    %1527 = vmatprep.subr.mxu0 0.0
    %1528 = vmatpush1.msra.mxu0 0.0
    %1529 = vmatprep.subr.mxu0 0.0
    %1530 = vmatpush1.msra.mxu0 0.0
    %1531 = vmatprep.subr.mxu0 0.0
    %1532 = vmatpush1.msra.mxu0 0.0
    %1533 = vmatprep.subr.mxu0 0.0
    %1534 = vmatpush1.msra.mxu0 0.0
    %1535 = vmatprep.subr.mxu0 0.0
    %1536 = vmatpush1.msra.mxu0 0.0
    %1537 = vmatprep.subr.mxu0 0.0
    %1538 = vmatpush1.msra.mxu0 0.0
    %1539 = vmatprep.subr.mxu0 0.0
    %1540 = vmatpush1.msra.mxu0 0.0
    %1541 = vmatprep.subr.mxu0 0.0
    %1542 = vmatpush1.msra.mxu0 0.0
    %1543 = vmatprep.subr.mxu0 0.0
    %1544 = vmatpush1.msra.mxu0 0.0
    %1545 = vmatprep.subr.mxu0 0.0
    %1546 = vmatpush1.msra.mxu0 0.0
    %1547 = vmatprep.subr.mxu0 0.0
    %1548 = vmatpush1.msra.mxu0 0.0
    %1549 = vmatprep.subr.mxu0 0.0
    %1550 = vmatpush1.msra.mxu0 0.0
    %1551 = vmatprep.subr.mxu0 0.0
    %1552 = vmatpush1.msra.mxu0 0.0
    %1553 = vmatprep.subr.mxu0 0.0
    %1554 = vmatpush1.msra.mxu0 0.0
    %1555 = vmatprep.subr.mxu0 0.0
    %1556 = vmatpush1.msra.mxu0 0.0
    %1557 = vmatprep.subr.mxu0 0.0
    %1558 = vmatpush1.msra.mxu0 0.0
    %1559 = vmatprep.subr.mxu0 0.0
    %1560 = vmatpush1.msra.mxu0 0.0
    %1561 = vmatprep.subr.mxu0 0.0
    %1562 = vmatpush1.msra.mxu0 0.0
    %1563 = vmatprep.subr.mxu0 0.0
    %1564 = vmatpush1.msra.mxu0 0.0
    %1565 = vmatprep.subr.mxu0 0.0
    %1566 = vmatpush1.msra.mxu0 0.0
    %1567 = vmatprep.subr.mxu0 0.0
    %1568 = vmatpush1.msra.mxu0 0.0
    %1569 = vmatprep.subr.mxu0 0.0
    %1570 = vmatpush1.msra.mxu0 0.0
    %1571 = vmatprep.subr.mxu0 0.0
    %1572 = vmatpush1.msra.mxu0 0.0
    %1573 = vmatprep.subr.mxu0 0.0
    %1574 = vmatpush1.msra.mxu0 0.0
    %1575 = vmatprep.subr.mxu0 0.0
    %1576 = vmatpush1.msra.mxu0 0.0
    %1577 = vmatprep.subr.mxu0 0.0
    %1578 = vmatpush1.msra.mxu0 0.0
    %1579 = vmatprep.subr.mxu0 0.0
    %1580 = vmatpush1.msra.mxu0 0.0
    %1581 = vmatprep.subr.mxu0 0.0
    %1582 = vmatpush1.msra.mxu0 0.0
    %1583 = vmatprep.subr.mxu0 0.0
    %1584 = vmatpush1.msra.mxu0 0.0
    %1585 = vmatprep.subr.mxu0 0.0
    %1586 = vmatpush1.msra.mxu0 0.0
    %1587 = vmatprep.subr.mxu0 0.0
    %1588 = vmatpush1.msra.mxu0 0.0
    %1589 = vmatprep.mubr.f32.mxu0 0.0
    %1590 = vmatmul.mubr.f32.gmra.mrb[0].mxu0 %v1520
    %v1591 = vpop.f32.mrb[0].mxu0
    %v1592 = vadd.f32 0.0, %v1591
    %v1593 = vpop.f32.mrb[0].mxu0
    %1594 = vdwg.mxu0
    %v1595 = vadd.f32 %v1402, %v1592
    %v1596 = vld [vmem:[#allocation3 + $0x8] sm:$0xf]
    %v1597 = vld [vmem:[#allocation3 + $0x18] sm:$0xf]
    %v1598 = vld [vmem:[#allocation3 + $0x28] sm:$0xf]
    %v1599 = vld [vmem:[#allocation3 + $0x38] sm:$0xf]
    %v1600 = vld [vmem:[#allocation3 + $0x48] sm:$0xf]
    %v1601 = vld [vmem:[#allocation3 + $0x58] sm:$0xf]
    %v1602 = vld [vmem:[#allocation3 + $0x68] sm:$0xf]
    %v1603 = vld [vmem:[#allocation3 + $0x78] sm:$0xf]
    %v1604 = vsel %vm69, %v1596, 0.0
    %1605 = vadd.xlane.f32.xlu0 %v1604
    %v1606 = vpop.xlane.xlu0 %1605
    %v1607 = vsel %vm69, %v1597, 0.0
    %1608 = vadd.xlane.f32.xlu0 %v1607
    %v1609 = vpop.xlane.xlu0 %1608
    %v1610 = vsel %vm69, %v1598, 0.0
    %1611 = vadd.xlane.f32.xlu0 %v1610
    %v1612 = vpop.xlane.xlu0 %1611
    %v1613 = vsel %vm69, %v1599, 0.0
    %1614 = vadd.xlane.f32.xlu0 %v1613
    %v1615 = vpop.xlane.xlu0 %1614
    %v1616 = vsel %vm69, %v1600, 0.0
    %1617 = vadd.xlane.f32.xlu0 %v1616
    %v1618 = vpop.xlane.xlu0 %1617
    %v1619 = vsel %vm69, %v1601, 0.0
    %1620 = vadd.xlane.f32.xlu0 %v1619
    %v1621 = vpop.xlane.xlu0 %1620
    %v1622 = vsel %vm69, %v1602, 0.0
    %1623 = vadd.xlane.f32.xlu0 %v1622
    %v1624 = vpop.xlane.xlu0 %1623
    %v1625 = vsel %vm69, %v1603, 0.0
    %1626 = vadd.xlane.f32.xlu0 %v1625
    %v1627 = vpop.xlane.xlu0 %1626
    %v1636 = vlaneseq
    %v1637 = vshrl.u32 %v1636, 7
    %v1638 = vsub.s32 %v103, %v1637
    %v1639 = vrot.slane %v1606, %v1638
    %v1640 = vlaneseq
    %v1641 = vshrl.u32 %v1640, 7
    %v1642 = vsub.s32 %v103, %v1641
    %v1643 = vrot.slane %v1609, %v1642
    %v1644 = vlaneseq
    %v1645 = vshrl.u32 %v1644, 7
    %v1646 = vsub.s32 %v103, %v1645
    %v1647 = vrot.slane %v1612, %v1646
    %v1648 = vlaneseq
    %v1649 = vshrl.u32 %v1648, 7
    %v1650 = vsub.s32 %v103, %v1649
    %v1651 = vrot.slane %v1615, %v1650
    %v1652 = vlaneseq
    %v1653 = vshrl.u32 %v1652, 7
    %v1654 = vsub.s32 %v103, %v1653
    %v1655 = vrot.slane %v1618, %v1654
    %v1656 = vlaneseq
    %v1657 = vshrl.u32 %v1656, 7
    %v1658 = vsub.s32 %v103, %v1657
    %v1659 = vrot.slane %v1621, %v1658
    %v1660 = vlaneseq
    %v1661 = vshrl.u32 %v1660, 7
    %v1662 = vsub.s32 %v103, %v1661
    %v1663 = vrot.slane %v1624, %v1662
    %v1664 = vlaneseq
    %v1665 = vshrl.u32 %v1664, 7
    %v1666 = vsub.s32 %v103, %v1665
    %v1667 = vrot.slane %v1627, %v1666
    %v1668 = vsel %vm136, %v1643, %v1639
    %v1669 = vsel %vm138, %v1647, %v1668
    %v1670 = vsel %vm140, %v1651, %v1669
    %v1671 = vsel %vm136, %v1659, %v1655
    %v1672 = vsel %vm138, %v1663, %v1671
    %v1673 = vsel %vm140, %v1667, %v1672
    %v1676 = vsel %vm69, %v1670, 0.0
    %1677 = vadd.xlane.f32.xlu0 %v1676
    %v1678 = vpop.xlane.xlu0 %1677
    %v1679 = vsel %vm69, %v1673, 0.0
    %1680 = vadd.xlane.f32.xlu0 %v1679
    %v1681 = vpop.xlane.xlu0 %1680
    %v1682 = vmul.f32 %v1678, 0.0625
    %v1683 = vmul.f32 %v1681, 0.0625
    %s1684 = scalar_lea.vmem [#allocation6], 32
    %v1685 = vld [vmem:[%s1684] sm:$0xf]
    %v1688 = vlaneseq
    %v1689 = vshrl.u32 %v1688, 7
    %v1690 = vsub.s32 %v103, %v1689
    %v1691 = vrot.slane %v1682, %v1690
    %v1692 = vlaneseq
    %v1693 = vshrl.u32 %v1692, 7
    %v1694 = vsub.s32 %v103, %v1693
    %v1695 = vrot.slane %v1683, %v1694
    %v1696 = vsel %vm136, %v1695, %v1691
    %v1697 = vsel %vm167, %v1696, 0
    %v1700 = vsel %vm170, %v1685, 0
    %1702 = vmatprep.subr.mxu0 0.0
    %1703 = vmatpush1.msra.mxu0 %v1700
    %1704 = vmatprep.subr.mxu0 0.0
    %1705 = vmatpush1.msra.mxu0 0.0
    %1706 = vmatprep.subr.mxu0 0.0
    %1707 = vmatpush1.msra.mxu0 0.0
    %1708 = vmatprep.subr.mxu0 0.0
    %1709 = vmatpush1.msra.mxu0 0.0
    %1710 = vmatprep.subr.mxu0 0.0
    %1711 = vmatpush1.msra.mxu0 0.0
    %1712 = vmatprep.subr.mxu0 0.0
    %1713 = vmatpush1.msra.mxu0 0.0
    %1714 = vmatprep.subr.mxu0 0.0
    %1715 = vmatpush1.msra.mxu0 0.0
    %1716 = vmatprep.subr.mxu0 0.0
    %1717 = vmatpush1.msra.mxu0 0.0
    %1718 = vmatprep.subr.mxu0 0.0
    %1719 = vmatpush1.msra.mxu0 0.0
    %1720 = vmatprep.subr.mxu0 0.0
    %1721 = vmatpush1.msra.mxu0 0.0
    %1722 = vmatprep.subr.mxu0 0.0
    %1723 = vmatpush1.msra.mxu0 0.0
    %1724 = vmatprep.subr.mxu0 0.0
    %1725 = vmatpush1.msra.mxu0 0.0
    %1726 = vmatprep.subr.mxu0 0.0
    %1727 = vmatpush1.msra.mxu0 0.0
    %1728 = vmatprep.subr.mxu0 0.0
    %1729 = vmatpush1.msra.mxu0 0.0
    %1730 = vmatprep.subr.mxu0 0.0
    %1731 = vmatpush1.msra.mxu0 0.0
    %1732 = vmatprep.subr.mxu0 0.0
    %1733 = vmatpush1.msra.mxu0 0.0
    %1734 = vmatprep.subr.mxu0 0.0
    %1735 = vmatpush1.msra.mxu0 0.0
    %1736 = vmatprep.subr.mxu0 0.0
    %1737 = vmatpush1.msra.mxu0 0.0
    %1738 = vmatprep.subr.mxu0 0.0
    %1739 = vmatpush1.msra.mxu0 0.0
    %1740 = vmatprep.subr.mxu0 0.0
    %1741 = vmatpush1.msra.mxu0 0.0
    %1742 = vmatprep.subr.mxu0 0.0
    %1743 = vmatpush1.msra.mxu0 0.0
    %1744 = vmatprep.subr.mxu0 0.0
    %1745 = vmatpush1.msra.mxu0 0.0
    %1746 = vmatprep.subr.mxu0 0.0
    %1747 = vmatpush1.msra.mxu0 0.0
    %1748 = vmatprep.subr.mxu0 0.0
    %1749 = vmatpush1.msra.mxu0 0.0
    %1750 = vmatprep.subr.mxu0 0.0
    %1751 = vmatpush1.msra.mxu0 0.0
    %1752 = vmatprep.subr.mxu0 0.0
    %1753 = vmatpush1.msra.mxu0 0.0
    %1754 = vmatprep.subr.mxu0 0.0
    %1755 = vmatpush1.msra.mxu0 0.0
    %1756 = vmatprep.subr.mxu0 0.0
    %1757 = vmatpush1.msra.mxu0 0.0
    %1758 = vmatprep.subr.mxu0 0.0
    %1759 = vmatpush1.msra.mxu0 0.0
    %1760 = vmatprep.subr.mxu0 0.0
    %1761 = vmatpush1.msra.mxu0 0.0
    %1762 = vmatprep.subr.mxu0 0.0
    %1763 = vmatpush1.msra.mxu0 0.0
    %1764 = vmatprep.subr.mxu0 0.0
    %1765 = vmatpush1.msra.mxu0 0.0
    %1766 = vmatprep.mubr.f32.mxu0 0.0
    %1767 = vmatmul.mubr.f32.gmra.mrb[0].mxu0 %v1697
    %v1768 = vpop.f32.mrb[0].mxu0
    %v1769 = vadd.f32 0.0, %v1768
    %v1770 = vpop.f32.mrb[0].mxu0
    %1771 = vdwg.mxu0
    %v1772 = vadd.f32 %v1595, %v1769
    %1781 = vrot.lane.b32.xlu0 %v1596, 124
    %v1782 = vpop.permute.xlu0 %1781
    %1783 = vrot.lane.b32.xlu0 %v1597, 124
    %v1784 = vpop.permute.xlu0 %1783
    %1785 = vrot.lane.b32.xlu0 %v1598, 124
    %v1786 = vpop.permute.xlu0 %1785
    %1787 = vrot.lane.b32.xlu0 %v1599, 124
    %v1788 = vpop.permute.xlu0 %1787
    %1789 = vrot.lane.b32.xlu0 %v1600, 124
    %v1790 = vpop.permute.xlu0 %1789
    %1791 = vrot.lane.b32.xlu0 %v1601, 124
    %v1792 = vpop.permute.xlu0 %1791
    %1793 = vrot.lane.b32.xlu0 %v1602, 124
    %v1794 = vpop.permute.xlu0 %1793
    %1795 = vrot.lane.b32.xlu0 %v1603, 124
    %v1796 = vpop.permute.xlu0 %1795
    %v1805 = vsel %vm69, %v1782, 0.0
    %1806 = vadd.xlane.f32.xlu0 %v1805
    %v1807 = vpop.xlane.xlu0 %1806
    %v1808 = vsel %vm69, %v1784, 0.0
    %1809 = vadd.xlane.f32.xlu0 %v1808
    %v1810 = vpop.xlane.xlu0 %1809
    %v1811 = vsel %vm69, %v1786, 0.0
    %1812 = vadd.xlane.f32.xlu0 %v1811
    %v1813 = vpop.xlane.xlu0 %1812
    %v1814 = vsel %vm69, %v1788, 0.0
    %1815 = vadd.xlane.f32.xlu0 %v1814
    %v1816 = vpop.xlane.xlu0 %1815
    %v1817 = vsel %vm69, %v1790, 0.0
    %1818 = vadd.xlane.f32.xlu0 %v1817
    %v1819 = vpop.xlane.xlu0 %1818
    %v1820 = vsel %vm69, %v1792, 0.0
    %1821 = vadd.xlane.f32.xlu0 %v1820
    %v1822 = vpop.xlane.xlu0 %1821
    %v1823 = vsel %vm69, %v1794, 0.0
    %1824 = vadd.xlane.f32.xlu0 %v1823
    %v1825 = vpop.xlane.xlu0 %1824
    %v1826 = vsel %vm69, %v1796, 0.0
    %1827 = vadd.xlane.f32.xlu0 %v1826
    %v1828 = vpop.xlane.xlu0 %1827
    %v1837 = vlaneseq
    %v1838 = vshrl.u32 %v1837, 7
    %v1839 = vsub.s32 %v103, %v1838
    %v1840 = vrot.slane %v1807, %v1839
    %v1841 = vlaneseq
    %v1842 = vshrl.u32 %v1841, 7
    %v1843 = vsub.s32 %v103, %v1842
    %v1844 = vrot.slane %v1810, %v1843
    %v1845 = vlaneseq
    %v1846 = vshrl.u32 %v1845, 7
    %v1847 = vsub.s32 %v103, %v1846
    %v1848 = vrot.slane %v1813, %v1847
    %v1849 = vlaneseq
    %v1850 = vshrl.u32 %v1849, 7
    %v1851 = vsub.s32 %v103, %v1850
    %v1852 = vrot.slane %v1816, %v1851
    %v1853 = vlaneseq
    %v1854 = vshrl.u32 %v1853, 7
    %v1855 = vsub.s32 %v103, %v1854
    %v1856 = vrot.slane %v1819, %v1855
    %v1857 = vlaneseq
    %v1858 = vshrl.u32 %v1857, 7
    %v1859 = vsub.s32 %v103, %v1858
    %v1860 = vrot.slane %v1822, %v1859
    %v1861 = vlaneseq
    %v1862 = vshrl.u32 %v1861, 7
    %v1863 = vsub.s32 %v103, %v1862
    %v1864 = vrot.slane %v1825, %v1863
    %v1865 = vlaneseq
    %v1866 = vshrl.u32 %v1865, 7
    %v1867 = vsub.s32 %v103, %v1866
    %v1868 = vrot.slane %v1828, %v1867
    %v1869 = vsel %vm136, %v1844, %v1840
    %v1870 = vsel %vm138, %v1848, %v1869
    %v1871 = vsel %vm140, %v1852, %v1870
    %v1872 = vsel %vm136, %v1860, %v1856
    %v1873 = vsel %vm138, %v1864, %v1872
    %v1874 = vsel %vm140, %v1868, %v1873
    %v1877 = vsel %vm69, %v1871, 0.0
    %1878 = vadd.xlane.f32.xlu0 %v1877
    %v1879 = vpop.xlane.xlu0 %1878
    %v1880 = vsel %vm69, %v1874, 0.0
    %1881 = vadd.xlane.f32.xlu0 %v1880
    %v1882 = vpop.xlane.xlu0 %1881
    %v1883 = vmul.f32 %v1879, 0.0625
    %v1884 = vmul.f32 %v1882, 0.0625
    %s1885 = scalar_lea.vmem [#allocation6], 36
    %v1886 = vld [vmem:[%s1885] sm:$0xf]
    %v1889 = vlaneseq
    %v1890 = vshrl.u32 %v1889, 7
    %v1891 = vsub.s32 %v103, %v1890
    %v1892 = vrot.slane %v1883, %v1891
    %v1893 = vlaneseq
    %v1894 = vshrl.u32 %v1893, 7
    %v1895 = vsub.s32 %v103, %v1894
    %v1896 = vrot.slane %v1884, %v1895
    %v1897 = vsel %vm136, %v1896, %v1892
    %v1898 = vsel %vm167, %v1897, 0
    %v1901 = vsel %vm170, %v1886, 0
    %1903 = vmatprep.subr.mxu0 0.0
    %1904 = vmatpush1.msra.mxu0 %v1901
    %1905 = vmatprep.subr.mxu0 0.0
    %1906 = vmatpush1.msra.mxu0 0.0
    %1907 = vmatprep.subr.mxu0 0.0
    %1908 = vmatpush1.msra.mxu0 0.0
    %1909 = vmatprep.subr.mxu0 0.0
    %1910 = vmatpush1.msra.mxu0 0.0
    %1911 = vmatprep.subr.mxu0 0.0
    %1912 = vmatpush1.msra.mxu0 0.0
    %1913 = vmatprep.subr.mxu0 0.0
    %1914 = vmatpush1.msra.mxu0 0.0
    %1915 = vmatprep.subr.mxu0 0.0
    %1916 = vmatpush1.msra.mxu0 0.0
    %1917 = vmatprep.subr.mxu0 0.0
    %1918 = vmatpush1.msra.mxu0 0.0
    %1919 = vmatprep.subr.mxu0 0.0
    %1920 = vmatpush1.msra.mxu0 0.0
    %1921 = vmatprep.subr.mxu0 0.0
    %1922 = vmatpush1.msra.mxu0 0.0
    %1923 = vmatprep.subr.mxu0 0.0
    %1924 = vmatpush1.msra.mxu0 0.0
    %1925 = vmatprep.subr.mxu0 0.0
    %1926 = vmatpush1.msra.mxu0 0.0
    %1927 = vmatprep.subr.mxu0 0.0
    %1928 = vmatpush1.msra.mxu0 0.0
    %1929 = vmatprep.subr.mxu0 0.0
    %1930 = vmatpush1.msra.mxu0 0.0
    %1931 = vmatprep.subr.mxu0 0.0
    %1932 = vmatpush1.msra.mxu0 0.0
    %1933 = vmatprep.subr.mxu0 0.0
    %1934 = vmatpush1.msra.mxu0 0.0
    %1935 = vmatprep.subr.mxu0 0.0
    %1936 = vmatpush1.msra.mxu0 0.0
    %1937 = vmatprep.subr.mxu0 0.0
    %1938 = vmatpush1.msra.mxu0 0.0
    %1939 = vmatprep.subr.mxu0 0.0
    %1940 = vmatpush1.msra.mxu0 0.0
    %1941 = vmatprep.subr.mxu0 0.0
    %1942 = vmatpush1.msra.mxu0 0.0
    %1943 = vmatprep.subr.mxu0 0.0
    %1944 = vmatpush1.msra.mxu0 0.0
    %1945 = vmatprep.subr.mxu0 0.0
    %1946 = vmatpush1.msra.mxu0 0.0
    %1947 = vmatprep.subr.mxu0 0.0
    %1948 = vmatpush1.msra.mxu0 0.0
    %1949 = vmatprep.subr.mxu0 0.0
    %1950 = vmatpush1.msra.mxu0 0.0
    %1951 = vmatprep.subr.mxu0 0.0
    %1952 = vmatpush1.msra.mxu0 0.0
    %1953 = vmatprep.subr.mxu0 0.0
    %1954 = vmatpush1.msra.mxu0 0.0
    %1955 = vmatprep.subr.mxu0 0.0
    %1956 = vmatpush1.msra.mxu0 0.0
    %1957 = vmatprep.subr.mxu0 0.0
    %1958 = vmatpush1.msra.mxu0 0.0
    %1959 = vmatprep.subr.mxu0 0.0
    %1960 = vmatpush1.msra.mxu0 0.0
    %1961 = vmatprep.subr.mxu0 0.0
    %1962 = vmatpush1.msra.mxu0 0.0
    %1963 = vmatprep.subr.mxu0 0.0
    %1964 = vmatpush1.msra.mxu0 0.0
    %1965 = vmatprep.subr.mxu0 0.0
    %1966 = vmatpush1.msra.mxu0 0.0
    %1967 = vmatprep.mubr.f32.mxu0 0.0
    %1968 = vmatmul.mubr.f32.gmra.mrb[0].mxu0 %v1898
    %v1969 = vpop.f32.mrb[0].mxu0
    %v1970 = vadd.f32 0.0, %v1969
    %v1971 = vpop.f32.mrb[0].mxu0
    %1972 = vdwg.mxu0
    %v1973 = vadd.f32 %v1772, %v1970
    %1974 = vrot.lane.b32.xlu0 %v1596, 120
    %v1975 = vpop.permute.xlu0 %1974
    %1976 = vrot.lane.b32.xlu0 %v1597, 120
    %v1977 = vpop.permute.xlu0 %1976
    %1978 = vrot.lane.b32.xlu0 %v1598, 120
    %v1979 = vpop.permute.xlu0 %1978
    %1980 = vrot.lane.b32.xlu0 %v1599, 120
    %v1981 = vpop.permute.xlu0 %1980
    %1982 = vrot.lane.b32.xlu0 %v1600, 120
    %v1983 = vpop.permute.xlu0 %1982
    %1984 = vrot.lane.b32.xlu0 %v1601, 120
    %v1985 = vpop.permute.xlu0 %1984
    %1986 = vrot.lane.b32.xlu0 %v1602, 120
    %v1987 = vpop.permute.xlu0 %1986
    %1988 = vrot.lane.b32.xlu0 %v1603, 120
    %v1989 = vpop.permute.xlu0 %1988
    %v1998 = vsel %vm69, %v1975, 0.0
    %1999 = vadd.xlane.f32.xlu0 %v1998
    %v2000 = vpop.xlane.xlu0 %1999
    %v2001 = vsel %vm69, %v1977, 0.0
    %2002 = vadd.xlane.f32.xlu0 %v2001
    %v2003 = vpop.xlane.xlu0 %2002
    %v2004 = vsel %vm69, %v1979, 0.0
    %2005 = vadd.xlane.f32.xlu0 %v2004
    %v2006 = vpop.xlane.xlu0 %2005
    %v2007 = vsel %vm69, %v1981, 0.0
    %2008 = vadd.xlane.f32.xlu0 %v2007
    %v2009 = vpop.xlane.xlu0 %2008
    %v2010 = vsel %vm69, %v1983, 0.0
    %2011 = vadd.xlane.f32.xlu0 %v2010
    %v2012 = vpop.xlane.xlu0 %2011
    %v2013 = vsel %vm69, %v1985, 0.0
    %2014 = vadd.xlane.f32.xlu0 %v2013
    %v2015 = vpop.xlane.xlu0 %2014
    %v2016 = vsel %vm69, %v1987, 0.0
    %2017 = vadd.xlane.f32.xlu0 %v2016
    %v2018 = vpop.xlane.xlu0 %2017
    %v2019 = vsel %vm69, %v1989, 0.0
    %2020 = vadd.xlane.f32.xlu0 %v2019
    %v2021 = vpop.xlane.xlu0 %2020
    %v2030 = vlaneseq
    %v2031 = vshrl.u32 %v2030, 7
    %v2032 = vsub.s32 %v103, %v2031
    %v2033 = vrot.slane %v2000, %v2032
    %v2034 = vlaneseq
    %v2035 = vshrl.u32 %v2034, 7
    %v2036 = vsub.s32 %v103, %v2035
    %v2037 = vrot.slane %v2003, %v2036
    %v2038 = vlaneseq
    %v2039 = vshrl.u32 %v2038, 7
    %v2040 = vsub.s32 %v103, %v2039
    %v2041 = vrot.slane %v2006, %v2040
    %v2042 = vlaneseq
    %v2043 = vshrl.u32 %v2042, 7
    %v2044 = vsub.s32 %v103, %v2043
    %v2045 = vrot.slane %v2009, %v2044
    %v2046 = vlaneseq
    %v2047 = vshrl.u32 %v2046, 7
    %v2048 = vsub.s32 %v103, %v2047
    %v2049 = vrot.slane %v2012, %v2048
    %v2050 = vlaneseq
    %v2051 = vshrl.u32 %v2050, 7
    %v2052 = vsub.s32 %v103, %v2051
    %v2053 = vrot.slane %v2015, %v2052
    %v2054 = vlaneseq
    %v2055 = vshrl.u32 %v2054, 7
    %v2056 = vsub.s32 %v103, %v2055
    %v2057 = vrot.slane %v2018, %v2056
    %v2058 = vlaneseq
    %v2059 = vshrl.u32 %v2058, 7
    %v2060 = vsub.s32 %v103, %v2059
    %v2061 = vrot.slane %v2021, %v2060
    %v2062 = vsel %vm136, %v2037, %v2033
    %v2063 = vsel %vm138, %v2041, %v2062
    %v2064 = vsel %vm140, %v2045, %v2063
    %v2065 = vsel %vm136, %v2053, %v2049
    %v2066 = vsel %vm138, %v2057, %v2065
    %v2067 = vsel %vm140, %v2061, %v2066
    %v2070 = vsel %vm69, %v2064, 0.0
    %2071 = vadd.xlane.f32.xlu0 %v2070
    %v2072 = vpop.xlane.xlu0 %2071
    %v2073 = vsel %vm69, %v2067, 0.0
    %2074 = vadd.xlane.f32.xlu0 %v2073
    %v2075 = vpop.xlane.xlu0 %2074
    %v2076 = vmul.f32 %v2072, 0.0625
    %v2077 = vmul.f32 %v2075, 0.0625
    %s2078 = scalar_lea.vmem [#allocation6], 40
    %v2079 = vld [vmem:[%s2078] sm:$0xf]
    %v2082 = vlaneseq
    %v2083 = vshrl.u32 %v2082, 7
    %v2084 = vsub.s32 %v103, %v2083
    %v2085 = vrot.slane %v2076, %v2084
    %v2086 = vlaneseq
    %v2087 = vshrl.u32 %v2086, 7
    %v2088 = vsub.s32 %v103, %v2087
    %v2089 = vrot.slane %v2077, %v2088
    %v2090 = vsel %vm136, %v2089, %v2085
    %v2091 = vsel %vm167, %v2090, 0
    %v2094 = vsel %vm170, %v2079, 0
    %2096 = vmatprep.subr.mxu0 0.0
    %2097 = vmatpush1.msra.mxu0 %v2094
    %2098 = vmatprep.subr.mxu0 0.0
    %2099 = vmatpush1.msra.mxu0 0.0
    %2100 = vmatprep.subr.mxu0 0.0
    %2101 = vmatpush1.msra.mxu0 0.0
    %2102 = vmatprep.subr.mxu0 0.0
    %2103 = vmatpush1.msra.mxu0 0.0
    %2104 = vmatprep.subr.mxu0 0.0
    %2105 = vmatpush1.msra.mxu0 0.0
    %2106 = vmatprep.subr.mxu0 0.0
    %2107 = vmatpush1.msra.mxu0 0.0
    %2108 = vmatprep.subr.mxu0 0.0
    %2109 = vmatpush1.msra.mxu0 0.0
    %2110 = vmatprep.subr.mxu0 0.0
    %2111 = vmatpush1.msra.mxu0 0.0
    %2112 = vmatprep.subr.mxu0 0.0
    %2113 = vmatpush1.msra.mxu0 0.0
    %2114 = vmatprep.subr.mxu0 0.0
    %2115 = vmatpush1.msra.mxu0 0.0
    %2116 = vmatprep.subr.mxu0 0.0
    %2117 = vmatpush1.msra.mxu0 0.0
    %2118 = vmatprep.subr.mxu0 0.0
    %2119 = vmatpush1.msra.mxu0 0.0
    %2120 = vmatprep.subr.mxu0 0.0
    %2121 = vmatpush1.msra.mxu0 0.0
    %2122 = vmatprep.subr.mxu0 0.0
    %2123 = vmatpush1.msra.mxu0 0.0
    %2124 = vmatprep.subr.mxu0 0.0
    %2125 = vmatpush1.msra.mxu0 0.0
    %2126 = vmatprep.subr.mxu0 0.0
    %2127 = vmatpush1.msra.mxu0 0.0
    %2128 = vmatprep.subr.mxu0 0.0
    %2129 = vmatpush1.msra.mxu0 0.0
    %2130 = vmatprep.subr.mxu0 0.0
    %2131 = vmatpush1.msra.mxu0 0.0
    %2132 = vmatprep.subr.mxu0 0.0
    %2133 = vmatpush1.msra.mxu0 0.0
    %2134 = vmatprep.subr.mxu0 0.0
    %2135 = vmatpush1.msra.mxu0 0.0
    %2136 = vmatprep.subr.mxu0 0.0
    %2137 = vmatpush1.msra.mxu0 0.0
    %2138 = vmatprep.subr.mxu0 0.0
    %2139 = vmatpush1.msra.mxu0 0.0
    %2140 = vmatprep.subr.mxu0 0.0
    %2141 = vmatpush1.msra.mxu0 0.0
    %2142 = vmatprep.subr.mxu0 0.0
    %2143 = vmatpush1.msra.mxu0 0.0
    %2144 = vmatprep.subr.mxu0 0.0
    %2145 = vmatpush1.msra.mxu0 0.0
    %2146 = vmatprep.subr.mxu0 0.0
    %2147 = vmatpush1.msra.mxu0 0.0
    %2148 = vmatprep.subr.mxu0 0.0
    %2149 = vmatpush1.msra.mxu0 0.0
    %2150 = vmatprep.subr.mxu0 0.0
    %2151 = vmatpush1.msra.mxu0 0.0
    %2152 = vmatprep.subr.mxu0 0.0
    %2153 = vmatpush1.msra.mxu0 0.0
    %2154 = vmatprep.subr.mxu0 0.0
    %2155 = vmatpush1.msra.mxu0 0.0
    %2156 = vmatprep.subr.mxu0 0.0
    %2157 = vmatpush1.msra.mxu0 0.0
    %2158 = vmatprep.subr.mxu0 0.0
    %2159 = vmatpush1.msra.mxu0 0.0
    %2160 = vmatprep.mubr.f32.mxu0 0.0
    %2161 = vmatmul.mubr.f32.gmra.mrb[0].mxu0 %v2091
    %v2162 = vpop.f32.mrb[0].mxu0
    %v2163 = vadd.f32 0.0, %v2162
    %v2164 = vpop.f32.mrb[0].mxu0
    %2165 = vdwg.mxu0
    %v2166 = vadd.f32 %v1973, %v2163
    %2167 = vrot.lane.b32.xlu0 %v1596, 116
    %v2168 = vpop.permute.xlu0 %2167
    %2169 = vrot.lane.b32.xlu0 %v1597, 116
    %v2170 = vpop.permute.xlu0 %2169
    %2171 = vrot.lane.b32.xlu0 %v1598, 116
    %v2172 = vpop.permute.xlu0 %2171
    %2173 = vrot.lane.b32.xlu0 %v1599, 116
    %v2174 = vpop.permute.xlu0 %2173
    %2175 = vrot.lane.b32.xlu0 %v1600, 116
    %v2176 = vpop.permute.xlu0 %2175
    %2177 = vrot.lane.b32.xlu0 %v1601, 116
    %v2178 = vpop.permute.xlu0 %2177
    %2179 = vrot.lane.b32.xlu0 %v1602, 116
    %v2180 = vpop.permute.xlu0 %2179
    %2181 = vrot.lane.b32.xlu0 %v1603, 116
    %v2182 = vpop.permute.xlu0 %2181
    %v2191 = vsel %vm69, %v2168, 0.0
    %2192 = vadd.xlane.f32.xlu0 %v2191
    %v2193 = vpop.xlane.xlu0 %2192
    %v2194 = vsel %vm69, %v2170, 0.0
    %2195 = vadd.xlane.f32.xlu0 %v2194
    %v2196 = vpop.xlane.xlu0 %2195
    %v2197 = vsel %vm69, %v2172, 0.0
    %2198 = vadd.xlane.f32.xlu0 %v2197
    %v2199 = vpop.xlane.xlu0 %2198
    %v2200 = vsel %vm69, %v2174, 0.0
    %2201 = vadd.xlane.f32.xlu0 %v2200
    %v2202 = vpop.xlane.xlu0 %2201
    %v2203 = vsel %vm69, %v2176, 0.0
    %2204 = vadd.xlane.f32.xlu0 %v2203
    %v2205 = vpop.xlane.xlu0 %2204
    %v2206 = vsel %vm69, %v2178, 0.0
    %2207 = vadd.xlane.f32.xlu0 %v2206
    %v2208 = vpop.xlane.xlu0 %2207
    %v2209 = vsel %vm69, %v2180, 0.0
    %2210 = vadd.xlane.f32.xlu0 %v2209
    %v2211 = vpop.xlane.xlu0 %2210
    %v2212 = vsel %vm69, %v2182, 0.0
    %2213 = vadd.xlane.f32.xlu0 %v2212
    %v2214 = vpop.xlane.xlu0 %2213
    %v2223 = vlaneseq
    %v2224 = vshrl.u32 %v2223, 7
    %v2225 = vsub.s32 %v103, %v2224
    %v2226 = vrot.slane %v2193, %v2225
    %v2227 = vlaneseq
    %v2228 = vshrl.u32 %v2227, 7
    %v2229 = vsub.s32 %v103, %v2228
    %v2230 = vrot.slane %v2196, %v2229
    %v2231 = vlaneseq
    %v2232 = vshrl.u32 %v2231, 7
    %v2233 = vsub.s32 %v103, %v2232
    %v2234 = vrot.slane %v2199, %v2233
    %v2235 = vlaneseq
    %v2236 = vshrl.u32 %v2235, 7
    %v2237 = vsub.s32 %v103, %v2236
    %v2238 = vrot.slane %v2202, %v2237
    %v2239 = vlaneseq
    %v2240 = vshrl.u32 %v2239, 7
    %v2241 = vsub.s32 %v103, %v2240
    %v2242 = vrot.slane %v2205, %v2241
    %v2243 = vlaneseq
    %v2244 = vshrl.u32 %v2243, 7
    %v2245 = vsub.s32 %v103, %v2244
    %v2246 = vrot.slane %v2208, %v2245
    %v2247 = vlaneseq
    %v2248 = vshrl.u32 %v2247, 7
    %v2249 = vsub.s32 %v103, %v2248
    %v2250 = vrot.slane %v2211, %v2249
    %v2251 = vlaneseq
    %v2252 = vshrl.u32 %v2251, 7
    %v2253 = vsub.s32 %v103, %v2252
    %v2254 = vrot.slane %v2214, %v2253
    %v2255 = vsel %vm136, %v2230, %v2226
    %v2256 = vsel %vm138, %v2234, %v2255
    %v2257 = vsel %vm140, %v2238, %v2256
    %v2258 = vsel %vm136, %v2246, %v2242
    %v2259 = vsel %vm138, %v2250, %v2258
    %v2260 = vsel %vm140, %v2254, %v2259
    %v2263 = vsel %vm69, %v2257, 0.0
    %2264 = vadd.xlane.f32.xlu0 %v2263
    %v2265 = vpop.xlane.xlu0 %2264
    %v2266 = vsel %vm69, %v2260, 0.0
    %2267 = vadd.xlane.f32.xlu0 %v2266
    %v2268 = vpop.xlane.xlu0 %2267
    %v2269 = vmul.f32 %v2265, 0.0625
    %v2270 = vmul.f32 %v2268, 0.0625
    %s2271 = scalar_lea.vmem [#allocation6], 44
    %v2272 = vld [vmem:[%s2271] sm:$0xf]
    %v2275 = vlaneseq
    %v2276 = vshrl.u32 %v2275, 7
    %v2277 = vsub.s32 %v103, %v2276
    %v2278 = vrot.slane %v2269, %v2277
    %v2279 = vlaneseq
    %v2280 = vshrl.u32 %v2279, 7
    %v2281 = vsub.s32 %v103, %v2280
    %v2282 = vrot.slane %v2270, %v2281
    %v2283 = vsel %vm136, %v2282, %v2278
    %v2284 = vsel %vm167, %v2283, 0
    %v2287 = vsel %vm170, %v2272, 0
    %2289 = vmatprep.subr.mxu0 0.0
    %2290 = vmatpush1.msra.mxu0 %v2287
    %2291 = vmatprep.subr.mxu0 0.0
    %2292 = vmatpush1.msra.mxu0 0.0
    %2293 = vmatprep.subr.mxu0 0.0
    %2294 = vmatpush1.msra.mxu0 0.0
    %2295 = vmatprep.subr.mxu0 0.0
    %2296 = vmatpush1.msra.mxu0 0.0
    %2297 = vmatprep.subr.mxu0 0.0
    %2298 = vmatpush1.msra.mxu0 0.0
    %2299 = vmatprep.subr.mxu0 0.0
    %2300 = vmatpush1.msra.mxu0 0.0
    %2301 = vmatprep.subr.mxu0 0.0
    %2302 = vmatpush1.msra.mxu0 0.0
    %2303 = vmatprep.subr.mxu0 0.0
    %2304 = vmatpush1.msra.mxu0 0.0
    %2305 = vmatprep.subr.mxu0 0.0
    %2306 = vmatpush1.msra.mxu0 0.0
    %2307 = vmatprep.subr.mxu0 0.0
    %2308 = vmatpush1.msra.mxu0 0.0
    %2309 = vmatprep.subr.mxu0 0.0
    %2310 = vmatpush1.msra.mxu0 0.0
    %2311 = vmatprep.subr.mxu0 0.0
    %2312 = vmatpush1.msra.mxu0 0.0
    %2313 = vmatprep.subr.mxu0 0.0
    %2314 = vmatpush1.msra.mxu0 0.0
    %2315 = vmatprep.subr.mxu0 0.0
    %2316 = vmatpush1.msra.mxu0 0.0
    %2317 = vmatprep.subr.mxu0 0.0
    %2318 = vmatpush1.msra.mxu0 0.0
    %2319 = vmatprep.subr.mxu0 0.0
    %2320 = vmatpush1.msra.mxu0 0.0
    %2321 = vmatprep.subr.mxu0 0.0
    %2322 = vmatpush1.msra.mxu0 0.0
    %2323 = vmatprep.subr.mxu0 0.0
    %2324 = vmatpush1.msra.mxu0 0.0
    %2325 = vmatprep.subr.mxu0 0.0
    %2326 = vmatpush1.msra.mxu0 0.0
    %2327 = vmatprep.subr.mxu0 0.0
    %2328 = vmatpush1.msra.mxu0 0.0
    %2329 = vmatprep.subr.mxu0 0.0
    %2330 = vmatpush1.msra.mxu0 0.0
    %2331 = vmatprep.subr.mxu0 0.0
    %2332 = vmatpush1.msra.mxu0 0.0
    %2333 = vmatprep.subr.mxu0 0.0
    %2334 = vmatpush1.msra.mxu0 0.0
    %2335 = vmatprep.subr.mxu0 0.0
    %2336 = vmatpush1.msra.mxu0 0.0
    %2337 = vmatprep.subr.mxu0 0.0
    %2338 = vmatpush1.msra.mxu0 0.0
    %2339 = vmatprep.subr.mxu0 0.0
    %2340 = vmatpush1.msra.mxu0 0.0
    %2341 = vmatprep.subr.mxu0 0.0
    %2342 = vmatpush1.msra.mxu0 0.0
    %2343 = vmatprep.subr.mxu0 0.0
    %2344 = vmatpush1.msra.mxu0 0.0
    %2345 = vmatprep.subr.mxu0 0.0
    %2346 = vmatpush1.msra.mxu0 0.0
    %2347 = vmatprep.subr.mxu0 0.0
    %2348 = vmatpush1.msra.mxu0 0.0
    %2349 = vmatprep.subr.mxu0 0.0
    %2350 = vmatpush1.msra.mxu0 0.0
    %2351 = vmatprep.subr.mxu0 0.0
    %2352 = vmatpush1.msra.mxu0 0.0
    %2353 = vmatprep.mubr.f32.mxu0 0.0
    %2354 = vmatmul.mubr.f32.gmra.mrb[0].mxu0 %v2284
    %v2355 = vpop.f32.mrb[0].mxu0
    %v2356 = vadd.f32 0.0, %v2355
    %v2357 = vpop.f32.mrb[0].mxu0
    %2358 = vdwg.mxu0
    %v2359 = vadd.f32 %v2166, %v2356
    %v2360 = vld [vmem:[#allocation3 + $0xc] sm:$0xf]
    %v2361 = vld [vmem:[#allocation3 + $0x1c] sm:$0xf]
    %v2362 = vld [vmem:[#allocation3 + $0x2c] sm:$0xf]
    %v2363 = vld [vmem:[#allocation3 + $0x3c] sm:$0xf]
    %v2364 = vld [vmem:[#allocation3 + $0x4c] sm:$0xf]
    %v2365 = vld [vmem:[#allocation3 + $0x5c] sm:$0xf]
    %v2366 = vld [vmem:[#allocation3 + $0x6c] sm:$0xf]
    %v2367 = vld [vmem:[#allocation3 + $0x7c] sm:$0xf]
    %v2368 = vsel %vm69, %v2360, 0.0
    %2369 = vadd.xlane.f32.xlu0 %v2368
    %v2370 = vpop.xlane.xlu0 %2369
    %v2371 = vsel %vm69, %v2361, 0.0
    %2372 = vadd.xlane.f32.xlu0 %v2371
    %v2373 = vpop.xlane.xlu0 %2372
    %v2374 = vsel %vm69, %v2362, 0.0
    %2375 = vadd.xlane.f32.xlu0 %v2374
    %v2376 = vpop.xlane.xlu0 %2375
    %v2377 = vsel %vm69, %v2363, 0.0
    %2378 = vadd.xlane.f32.xlu0 %v2377
    %v2379 = vpop.xlane.xlu0 %2378
    %v2380 = vsel %vm69, %v2364, 0.0
    %2381 = vadd.xlane.f32.xlu0 %v2380
    %v2382 = vpop.xlane.xlu0 %2381
    %v2383 = vsel %vm69, %v2365, 0.0
    %2384 = vadd.xlane.f32.xlu0 %v2383
    %v2385 = vpop.xlane.xlu0 %2384
    %v2386 = vsel %vm69, %v2366, 0.0
    %2387 = vadd.xlane.f32.xlu0 %v2386
    %v2388 = vpop.xlane.xlu0 %2387
    %v2389 = vsel %vm69, %v2367, 0.0
    %2390 = vadd.xlane.f32.xlu0 %v2389
    %v2391 = vpop.xlane.xlu0 %2390
    %v2400 = vlaneseq
    %v2401 = vshrl.u32 %v2400, 7
    %v2402 = vsub.s32 %v103, %v2401
    %v2403 = vrot.slane %v2370, %v2402
    %v2404 = vlaneseq
    %v2405 = vshrl.u32 %v2404, 7
    %v2406 = vsub.s32 %v103, %v2405
    %v2407 = vrot.slane %v2373, %v2406
    %v2408 = vlaneseq
    %v2409 = vshrl.u32 %v2408, 7
    %v2410 = vsub.s32 %v103, %v2409
    %v2411 = vrot.slane %v2376, %v2410
    %v2412 = vlaneseq
    %v2413 = vshrl.u32 %v2412, 7
    %v2414 = vsub.s32 %v103, %v2413
    %v2415 = vrot.slane %v2379, %v2414
    %v2416 = vlaneseq
    %v2417 = vshrl.u32 %v2416, 7
    %v2418 = vsub.s32 %v103, %v2417
    %v2419 = vrot.slane %v2382, %v2418
    %v2420 = vlaneseq
    %v2421 = vshrl.u32 %v2420, 7
    %v2422 = vsub.s32 %v103, %v2421
    %v2423 = vrot.slane %v2385, %v2422
    %v2424 = vlaneseq
    %v2425 = vshrl.u32 %v2424, 7
    %v2426 = vsub.s32 %v103, %v2425
    %v2427 = vrot.slane %v2388, %v2426
    %v2428 = vlaneseq
    %v2429 = vshrl.u32 %v2428, 7
    %v2430 = vsub.s32 %v103, %v2429
    %v2431 = vrot.slane %v2391, %v2430
    %v2432 = vsel %vm136, %v2407, %v2403
    %v2433 = vsel %vm138, %v2411, %v2432
    %v2434 = vsel %vm140, %v2415, %v2433
    %v2435 = vsel %vm136, %v2423, %v2419
    %v2436 = vsel %vm138, %v2427, %v2435
    %v2437 = vsel %vm140, %v2431, %v2436
    %v2440 = vsel %vm69, %v2434, 0.0
    %2441 = vadd.xlane.f32.xlu0 %v2440
    %v2442 = vpop.xlane.xlu0 %2441
    %v2443 = vsel %vm69, %v2437, 0.0
    %2444 = vadd.xlane.f32.xlu0 %v2443
    %v2445 = vpop.xlane.xlu0 %2444
    %v2446 = vmul.f32 %v2442, 0.0625
    %v2447 = vmul.f32 %v2445, 0.0625
    %s2448 = scalar_lea.vmem [#allocation6], 48
    %v2449 = vld [vmem:[%s2448] sm:$0xf]
    %v2452 = vlaneseq
    %v2453 = vshrl.u32 %v2452, 7
    %v2454 = vsub.s32 %v103, %v2453
    %v2455 = vrot.slane %v2446, %v2454
    %v2456 = vlaneseq
    %v2457 = vshrl.u32 %v2456, 7
    %v2458 = vsub.s32 %v103, %v2457
    %v2459 = vrot.slane %v2447, %v2458
    %v2460 = vsel %vm136, %v2459, %v2455
    %v2461 = vsel %vm167, %v2460, 0
    %v2464 = vsel %vm170, %v2449, 0
    %2466 = vmatprep.subr.mxu0 0.0
    %2467 = vmatpush1.msra.mxu0 %v2464
    %2468 = vmatprep.subr.mxu0 0.0
    %2469 = vmatpush1.msra.mxu0 0.0
    %2470 = vmatprep.subr.mxu0 0.0
    %2471 = vmatpush1.msra.mxu0 0.0
    %2472 = vmatprep.subr.mxu0 0.0
    %2473 = vmatpush1.msra.mxu0 0.0
    %2474 = vmatprep.subr.mxu0 0.0
    %2475 = vmatpush1.msra.mxu0 0.0
    %2476 = vmatprep.subr.mxu0 0.0
    %2477 = vmatpush1.msra.mxu0 0.0
    %2478 = vmatprep.subr.mxu0 0.0
    %2479 = vmatpush1.msra.mxu0 0.0
    %2480 = vmatprep.subr.mxu0 0.0
    %2481 = vmatpush1.msra.mxu0 0.0
    %2482 = vmatprep.subr.mxu0 0.0
    %2483 = vmatpush1.msra.mxu0 0.0
    %2484 = vmatprep.subr.mxu0 0.0
    %2485 = vmatpush1.msra.mxu0 0.0
    %2486 = vmatprep.subr.mxu0 0.0
    %2487 = vmatpush1.msra.mxu0 0.0
    %2488 = vmatprep.subr.mxu0 0.0
    %2489 = vmatpush1.msra.mxu0 0.0
    %2490 = vmatprep.subr.mxu0 0.0
    %2491 = vmatpush1.msra.mxu0 0.0
    %2492 = vmatprep.subr.mxu0 0.0
    %2493 = vmatpush1.msra.mxu0 0.0
    %2494 = vmatprep.subr.mxu0 0.0
    %2495 = vmatpush1.msra.mxu0 0.0
    %2496 = vmatprep.subr.mxu0 0.0
    %2497 = vmatpush1.msra.mxu0 0.0
    %2498 = vmatprep.subr.mxu0 0.0
    %2499 = vmatpush1.msra.mxu0 0.0
    %2500 = vmatprep.subr.mxu0 0.0
    %2501 = vmatpush1.msra.mxu0 0.0
    %2502 = vmatprep.subr.mxu0 0.0
    %2503 = vmatpush1.msra.mxu0 0.0
    %2504 = vmatprep.subr.mxu0 0.0
    %2505 = vmatpush1.msra.mxu0 0.0
    %2506 = vmatprep.subr.mxu0 0.0
    %2507 = vmatpush1.msra.mxu0 0.0
    %2508 = vmatprep.subr.mxu0 0.0
    %2509 = vmatpush1.msra.mxu0 0.0
    %2510 = vmatprep.subr.mxu0 0.0
    %2511 = vmatpush1.msra.mxu0 0.0
    %2512 = vmatprep.subr.mxu0 0.0
    %2513 = vmatpush1.msra.mxu0 0.0
    %2514 = vmatprep.subr.mxu0 0.0
    %2515 = vmatpush1.msra.mxu0 0.0
    %2516 = vmatprep.subr.mxu0 0.0
    %2517 = vmatpush1.msra.mxu0 0.0
    %2518 = vmatprep.subr.mxu0 0.0
    %2519 = vmatpush1.msra.mxu0 0.0
    %2520 = vmatprep.subr.mxu0 0.0
    %2521 = vmatpush1.msra.mxu0 0.0
    %2522 = vmatprep.subr.mxu0 0.0
    %2523 = vmatpush1.msra.mxu0 0.0
    %2524 = vmatprep.subr.mxu0 0.0
    %2525 = vmatpush1.msra.mxu0 0.0
    %2526 = vmatprep.subr.mxu0 0.0
    %2527 = vmatpush1.msra.mxu0 0.0
    %2528 = vmatprep.subr.mxu0 0.0
    %2529 = vmatpush1.msra.mxu0 0.0
    %2530 = vmatprep.mubr.f32.mxu0 0.0
    %2531 = vmatmul.mubr.f32.gmra.mrb[0].mxu0 %v2461
    %v2532 = vpop.f32.mrb[0].mxu0
    %v2533 = vadd.f32 0.0, %v2532
    %v2534 = vpop.f32.mrb[0].mxu0
    %2535 = vdwg.mxu0
    %v2536 = vadd.f32 %v2359, %v2533
    %2545 = vrot.lane.b32.xlu0 %v2360, 124
    %v2546 = vpop.permute.xlu0 %2545
    %2547 = vrot.lane.b32.xlu0 %v2361, 124
    %v2548 = vpop.permute.xlu0 %2547
    %2549 = vrot.lane.b32.xlu0 %v2362, 124
    %v2550 = vpop.permute.xlu0 %2549
    %2551 = vrot.lane.b32.xlu0 %v2363, 124
    %v2552 = vpop.permute.xlu0 %2551
    %2553 = vrot.lane.b32.xlu0 %v2364, 124
    %v2554 = vpop.permute.xlu0 %2553
    %2555 = vrot.lane.b32.xlu0 %v2365, 124
    %v2556 = vpop.permute.xlu0 %2555
    %2557 = vrot.lane.b32.xlu0 %v2366, 124
    %v2558 = vpop.permute.xlu0 %2557
    %2559 = vrot.lane.b32.xlu0 %v2367, 124
    %v2560 = vpop.permute.xlu0 %2559
    %v2569 = vsel %vm69, %v2546, 0.0
    %2570 = vadd.xlane.f32.xlu0 %v2569
    %v2571 = vpop.xlane.xlu0 %2570
    %v2572 = vsel %vm69, %v2548, 0.0
    %2573 = vadd.xlane.f32.xlu0 %v2572
    %v2574 = vpop.xlane.xlu0 %2573
    %v2575 = vsel %vm69, %v2550, 0.0
    %2576 = vadd.xlane.f32.xlu0 %v2575
    %v2577 = vpop.xlane.xlu0 %2576
    %v2578 = vsel %vm69, %v2552, 0.0
    %2579 = vadd.xlane.f32.xlu0 %v2578
    %v2580 = vpop.xlane.xlu0 %2579
    %v2581 = vsel %vm69, %v2554, 0.0
    %2582 = vadd.xlane.f32.xlu0 %v2581
    %v2583 = vpop.xlane.xlu0 %2582
    %v2584 = vsel %vm69, %v2556, 0.0
    %2585 = vadd.xlane.f32.xlu0 %v2584
    %v2586 = vpop.xlane.xlu0 %2585
    %v2587 = vsel %vm69, %v2558, 0.0
    %2588 = vadd.xlane.f32.xlu0 %v2587
    %v2589 = vpop.xlane.xlu0 %2588
    %v2590 = vsel %vm69, %v2560, 0.0
    %2591 = vadd.xlane.f32.xlu0 %v2590
    %v2592 = vpop.xlane.xlu0 %2591
    %v2601 = vlaneseq
    %v2602 = vshrl.u32 %v2601, 7
    %v2603 = vsub.s32 %v103, %v2602
    %v2604 = vrot.slane %v2571, %v2603
    %v2605 = vlaneseq
    %v2606 = vshrl.u32 %v2605, 7
    %v2607 = vsub.s32 %v103, %v2606
    %v2608 = vrot.slane %v2574, %v2607
    %v2609 = vlaneseq
    %v2610 = vshrl.u32 %v2609, 7
    %v2611 = vsub.s32 %v103, %v2610
    %v2612 = vrot.slane %v2577, %v2611
    %v2613 = vlaneseq
    %v2614 = vshrl.u32 %v2613, 7
    %v2615 = vsub.s32 %v103, %v2614
    %v2616 = vrot.slane %v2580, %v2615
    %v2617 = vlaneseq
    %v2618 = vshrl.u32 %v2617, 7
    %v2619 = vsub.s32 %v103, %v2618
    %v2620 = vrot.slane %v2583, %v2619
    %v2621 = vlaneseq
    %v2622 = vshrl.u32 %v2621, 7
    %v2623 = vsub.s32 %v103, %v2622
    %v2624 = vrot.slane %v2586, %v2623
    %v2625 = vlaneseq
    %v2626 = vshrl.u32 %v2625, 7
    %v2627 = vsub.s32 %v103, %v2626
    %v2628 = vrot.slane %v2589, %v2627
    %v2629 = vlaneseq
    %v2630 = vshrl.u32 %v2629, 7
    %v2631 = vsub.s32 %v103, %v2630
    %v2632 = vrot.slane %v2592, %v2631
    %v2633 = vsel %vm136, %v2608, %v2604
    %v2634 = vsel %vm138, %v2612, %v2633
    %v2635 = vsel %vm140, %v2616, %v2634
    %v2636 = vsel %vm136, %v2624, %v2620
    %v2637 = vsel %vm138, %v2628, %v2636
    %v2638 = vsel %vm140, %v2632, %v2637
    %v2641 = vsel %vm69, %v2635, 0.0
    %2642 = vadd.xlane.f32.xlu0 %v2641
    %v2643 = vpop.xlane.xlu0 %2642
    %v2644 = vsel %vm69, %v2638, 0.0
    %2645 = vadd.xlane.f32.xlu0 %v2644
    %v2646 = vpop.xlane.xlu0 %2645
    %v2647 = vmul.f32 %v2643, 0.0625
    %v2648 = vmul.f32 %v2646, 0.0625
    %s2649 = scalar_lea.vmem [#allocation6], 52
    %v2650 = vld [vmem:[%s2649] sm:$0xf]
    %v2653 = vlaneseq
    %v2654 = vshrl.u32 %v2653, 7
    %v2655 = vsub.s32 %v103, %v2654
    %v2656 = vrot.slane %v2647, %v2655
    %v2657 = vlaneseq
    %v2658 = vshrl.u32 %v2657, 7
    %v2659 = vsub.s32 %v103, %v2658
    %v2660 = vrot.slane %v2648, %v2659
    %v2661 = vsel %vm136, %v2660, %v2656
    %v2662 = vsel %vm167, %v2661, 0
    %v2665 = vsel %vm170, %v2650, 0
    %2667 = vmatprep.subr.mxu0 0.0
    %2668 = vmatpush1.msra.mxu0 %v2665
    %2669 = vmatprep.subr.mxu0 0.0
    %2670 = vmatpush1.msra.mxu0 0.0
    %2671 = vmatprep.subr.mxu0 0.0
    %2672 = vmatpush1.msra.mxu0 0.0
    %2673 = vmatprep.subr.mxu0 0.0
    %2674 = vmatpush1.msra.mxu0 0.0
    %2675 = vmatprep.subr.mxu0 0.0
    %2676 = vmatpush1.msra.mxu0 0.0
    %2677 = vmatprep.subr.mxu0 0.0
    %2678 = vmatpush1.msra.mxu0 0.0
    %2679 = vmatprep.subr.mxu0 0.0
    %2680 = vmatpush1.msra.mxu0 0.0
    %2681 = vmatprep.subr.mxu0 0.0
    %2682 = vmatpush1.msra.mxu0 0.0
    %2683 = vmatprep.subr.mxu0 0.0
    %2684 = vmatpush1.msra.mxu0 0.0
    %2685 = vmatprep.subr.mxu0 0.0
    %2686 = vmatpush1.msra.mxu0 0.0
    %2687 = vmatprep.subr.mxu0 0.0
    %2688 = vmatpush1.msra.mxu0 0.0
    %2689 = vmatprep.subr.mxu0 0.0
    %2690 = vmatpush1.msra.mxu0 0.0
    %2691 = vmatprep.subr.mxu0 0.0
    %2692 = vmatpush1.msra.mxu0 0.0
    %2693 = vmatprep.subr.mxu0 0.0
    %2694 = vmatpush1.msra.mxu0 0.0
    %2695 = vmatprep.subr.mxu0 0.0
    %2696 = vmatpush1.msra.mxu0 0.0
    %2697 = vmatprep.subr.mxu0 0.0
    %2698 = vmatpush1.msra.mxu0 0.0
    %2699 = vmatprep.subr.mxu0 0.0
    %2700 = vmatpush1.msra.mxu0 0.0
    %2701 = vmatprep.subr.mxu0 0.0
    %2702 = vmatpush1.msra.mxu0 0.0
    %2703 = vmatprep.subr.mxu0 0.0
    %2704 = vmatpush1.msra.mxu0 0.0
    %2705 = vmatprep.subr.mxu0 0.0
    %2706 = vmatpush1.msra.mxu0 0.0
    %2707 = vmatprep.subr.mxu0 0.0
    %2708 = vmatpush1.msra.mxu0 0.0
    %2709 = vmatprep.subr.mxu0 0.0
    %2710 = vmatpush1.msra.mxu0 0.0
    %2711 = vmatprep.subr.mxu0 0.0
    %2712 = vmatpush1.msra.mxu0 0.0
    %2713 = vmatprep.subr.mxu0 0.0
    %2714 = vmatpush1.msra.mxu0 0.0
    %2715 = vmatprep.subr.mxu0 0.0
    %2716 = vmatpush1.msra.mxu0 0.0
    %2717 = vmatprep.subr.mxu0 0.0
    %2718 = vmatpush1.msra.mxu0 0.0
    %2719 = vmatprep.subr.mxu0 0.0
    %2720 = vmatpush1.msra.mxu0 0.0
    %2721 = vmatprep.subr.mxu0 0.0
    %2722 = vmatpush1.msra.mxu0 0.0
    %2723 = vmatprep.subr.mxu0 0.0
    %2724 = vmatpush1.msra.mxu0 0.0
    %2725 = vmatprep.subr.mxu0 0.0
    %2726 = vmatpush1.msra.mxu0 0.0
    %2727 = vmatprep.subr.mxu0 0.0
    %2728 = vmatpush1.msra.mxu0 0.0
    %2729 = vmatprep.subr.mxu0 0.0
    %2730 = vmatpush1.msra.mxu0 0.0
    %2731 = vmatprep.mubr.f32.mxu0 0.0
    %2732 = vmatmul.mubr.f32.gmra.mrb[0].mxu0 %v2662
    %v2733 = vpop.f32.mrb[0].mxu0
    %v2734 = vadd.f32 0.0, %v2733
    %v2735 = vpop.f32.mrb[0].mxu0
    %2736 = vdwg.mxu0
    %v2737 = vadd.f32 %v2536, %v2734
    %2738 = vrot.lane.b32.xlu0 %v2360, 120
    %v2739 = vpop.permute.xlu0 %2738
    %2740 = vrot.lane.b32.xlu0 %v2361, 120
    %v2741 = vpop.permute.xlu0 %2740
    %2742 = vrot.lane.b32.xlu0 %v2362, 120
    %v2743 = vpop.permute.xlu0 %2742
    %2744 = vrot.lane.b32.xlu0 %v2363, 120
    %v2745 = vpop.permute.xlu0 %2744
    %2746 = vrot.lane.b32.xlu0 %v2364, 120
    %v2747 = vpop.permute.xlu0 %2746
    %2748 = vrot.lane.b32.xlu0 %v2365, 120
    %v2749 = vpop.permute.xlu0 %2748
    %2750 = vrot.lane.b32.xlu0 %v2366, 120
    %v2751 = vpop.permute.xlu0 %2750
    %2752 = vrot.lane.b32.xlu0 %v2367, 120
    %v2753 = vpop.permute.xlu0 %2752
    %v2762 = vsel %vm69, %v2739, 0.0
    %2763 = vadd.xlane.f32.xlu0 %v2762
    %v2764 = vpop.xlane.xlu0 %2763
    %v2765 = vsel %vm69, %v2741, 0.0
    %2766 = vadd.xlane.f32.xlu0 %v2765
    %v2767 = vpop.xlane.xlu0 %2766
    %v2768 = vsel %vm69, %v2743, 0.0
    %2769 = vadd.xlane.f32.xlu0 %v2768
    %v2770 = vpop.xlane.xlu0 %2769
    %v2771 = vsel %vm69, %v2745, 0.0
    %2772 = vadd.xlane.f32.xlu0 %v2771
    %v2773 = vpop.xlane.xlu0 %2772
    %v2774 = vsel %vm69, %v2747, 0.0
    %2775 = vadd.xlane.f32.xlu0 %v2774
    %v2776 = vpop.xlane.xlu0 %2775
    %v2777 = vsel %vm69, %v2749, 0.0
    %2778 = vadd.xlane.f32.xlu0 %v2777
    %v2779 = vpop.xlane.xlu0 %2778
    %v2780 = vsel %vm69, %v2751, 0.0
    %2781 = vadd.xlane.f32.xlu0 %v2780
    %v2782 = vpop.xlane.xlu0 %2781
    %v2783 = vsel %vm69, %v2753, 0.0
    %2784 = vadd.xlane.f32.xlu0 %v2783
    %v2785 = vpop.xlane.xlu0 %2784
    %v2794 = vlaneseq
    %v2795 = vshrl.u32 %v2794, 7
    %v2796 = vsub.s32 %v103, %v2795
    %v2797 = vrot.slane %v2764, %v2796
    %v2798 = vlaneseq
    %v2799 = vshrl.u32 %v2798, 7
    %v2800 = vsub.s32 %v103, %v2799
    %v2801 = vrot.slane %v2767, %v2800
    %v2802 = vlaneseq
    %v2803 = vshrl.u32 %v2802, 7
    %v2804 = vsub.s32 %v103, %v2803
    %v2805 = vrot.slane %v2770, %v2804
    %v2806 = vlaneseq
    %v2807 = vshrl.u32 %v2806, 7
    %v2808 = vsub.s32 %v103, %v2807
    %v2809 = vrot.slane %v2773, %v2808
    %v2810 = vlaneseq
    %v2811 = vshrl.u32 %v2810, 7
    %v2812 = vsub.s32 %v103, %v2811
    %v2813 = vrot.slane %v2776, %v2812
    %v2814 = vlaneseq
    %v2815 = vshrl.u32 %v2814, 7
    %v2816 = vsub.s32 %v103, %v2815
    %v2817 = vrot.slane %v2779, %v2816
    %v2818 = vlaneseq
    %v2819 = vshrl.u32 %v2818, 7
    %v2820 = vsub.s32 %v103, %v2819
    %v2821 = vrot.slane %v2782, %v2820
    %v2822 = vlaneseq
    %v2823 = vshrl.u32 %v2822, 7
    %v2824 = vsub.s32 %v103, %v2823
    %v2825 = vrot.slane %v2785, %v2824
    %v2826 = vsel %vm136, %v2801, %v2797
    %v2827 = vsel %vm138, %v2805, %v2826
    %v2828 = vsel %vm140, %v2809, %v2827
    %v2829 = vsel %vm136, %v2817, %v2813
    %v2830 = vsel %vm138, %v2821, %v2829
    %v2831 = vsel %vm140, %v2825, %v2830
    %v2834 = vsel %vm69, %v2828, 0.0
    %2835 = vadd.xlane.f32.xlu0 %v2834
    %v2836 = vpop.xlane.xlu0 %2835
    %v2837 = vsel %vm69, %v2831, 0.0
    %2838 = vadd.xlane.f32.xlu0 %v2837
    %v2839 = vpop.xlane.xlu0 %2838
    %v2840 = vmul.f32 %v2836, 0.0625
    %v2841 = vmul.f32 %v2839, 0.0625
    %s2842 = scalar_lea.vmem [#allocation6], 56
    %v2843 = vld [vmem:[%s2842] sm:$0xf]
    %v2846 = vlaneseq
    %v2847 = vshrl.u32 %v2846, 7
    %v2848 = vsub.s32 %v103, %v2847
    %v2849 = vrot.slane %v2840, %v2848
    %v2850 = vlaneseq
    %v2851 = vshrl.u32 %v2850, 7
    %v2852 = vsub.s32 %v103, %v2851
    %v2853 = vrot.slane %v2841, %v2852
    %v2854 = vsel %vm136, %v2853, %v2849
    %v2855 = vsel %vm167, %v2854, 0
    %v2858 = vsel %vm170, %v2843, 0
    %2860 = vmatprep.subr.mxu0 0.0
    %2861 = vmatpush1.msra.mxu0 %v2858
    %2862 = vmatprep.subr.mxu0 0.0
    %2863 = vmatpush1.msra.mxu0 0.0
    %2864 = vmatprep.subr.mxu0 0.0
    %2865 = vmatpush1.msra.mxu0 0.0
    %2866 = vmatprep.subr.mxu0 0.0
    %2867 = vmatpush1.msra.mxu0 0.0
    %2868 = vmatprep.subr.mxu0 0.0
    %2869 = vmatpush1.msra.mxu0 0.0
    %2870 = vmatprep.subr.mxu0 0.0
    %2871 = vmatpush1.msra.mxu0 0.0
    %2872 = vmatprep.subr.mxu0 0.0
    %2873 = vmatpush1.msra.mxu0 0.0
    %2874 = vmatprep.subr.mxu0 0.0
    %2875 = vmatpush1.msra.mxu0 0.0
    %2876 = vmatprep.subr.mxu0 0.0
    %2877 = vmatpush1.msra.mxu0 0.0
    %2878 = vmatprep.subr.mxu0 0.0
    %2879 = vmatpush1.msra.mxu0 0.0
    %2880 = vmatprep.subr.mxu0 0.0
    %2881 = vmatpush1.msra.mxu0 0.0
    %2882 = vmatprep.subr.mxu0 0.0
    %2883 = vmatpush1.msra.mxu0 0.0
    %2884 = vmatprep.subr.mxu0 0.0
    %2885 = vmatpush1.msra.mxu0 0.0
    %2886 = vmatprep.subr.mxu0 0.0
    %2887 = vmatpush1.msra.mxu0 0.0
    %2888 = vmatprep.subr.mxu0 0.0
    %2889 = vmatpush1.msra.mxu0 0.0
    %2890 = vmatprep.subr.mxu0 0.0
    %2891 = vmatpush1.msra.mxu0 0.0
    %2892 = vmatprep.subr.mxu0 0.0
    %2893 = vmatpush1.msra.mxu0 0.0
    %2894 = vmatprep.subr.mxu0 0.0
    %2895 = vmatpush1.msra.mxu0 0.0
    %2896 = vmatprep.subr.mxu0 0.0
    %2897 = vmatpush1.msra.mxu0 0.0
    %2898 = vmatprep.subr.mxu0 0.0
    %2899 = vmatpush1.msra.mxu0 0.0
    %2900 = vmatprep.subr.mxu0 0.0
    %2901 = vmatpush1.msra.mxu0 0.0
    %2902 = vmatprep.subr.mxu0 0.0
    %2903 = vmatpush1.msra.mxu0 0.0
    %2904 = vmatprep.subr.mxu0 0.0
    %2905 = vmatpush1.msra.mxu0 0.0
    %2906 = vmatprep.subr.mxu0 0.0
    %2907 = vmatpush1.msra.mxu0 0.0
    %2908 = vmatprep.subr.mxu0 0.0
    %2909 = vmatpush1.msra.mxu0 0.0
    %2910 = vmatprep.subr.mxu0 0.0
    %2911 = vmatpush1.msra.mxu0 0.0
    %2912 = vmatprep.subr.mxu0 0.0
    %2913 = vmatpush1.msra.mxu0 0.0
    %2914 = vmatprep.subr.mxu0 0.0
    %2915 = vmatpush1.msra.mxu0 0.0
    %2916 = vmatprep.subr.mxu0 0.0
    %2917 = vmatpush1.msra.mxu0 0.0
    %2918 = vmatprep.subr.mxu0 0.0
    %2919 = vmatpush1.msra.mxu0 0.0
    %2920 = vmatprep.subr.mxu0 0.0
    %2921 = vmatpush1.msra.mxu0 0.0
    %2922 = vmatprep.subr.mxu0 0.0
    %2923 = vmatpush1.msra.mxu0 0.0
    %2924 = vmatprep.mubr.f32.mxu0 0.0
    %2925 = vmatmul.mubr.f32.gmra.mrb[0].mxu0 %v2855
    %v2926 = vpop.f32.mrb[0].mxu0
    %v2927 = vadd.f32 0.0, %v2926
    %v2928 = vpop.f32.mrb[0].mxu0
    %2929 = vdwg.mxu0
    %v2930 = vadd.f32 %v2737, %v2927
    %2931 = vrot.lane.b32.xlu0 %v2360, 116
    %v2932 = vpop.permute.xlu0 %2931
    %2933 = vrot.lane.b32.xlu0 %v2361, 116
    %v2934 = vpop.permute.xlu0 %2933
    %2935 = vrot.lane.b32.xlu0 %v2362, 116
    %v2936 = vpop.permute.xlu0 %2935
    %2937 = vrot.lane.b32.xlu0 %v2363, 116
    %v2938 = vpop.permute.xlu0 %2937
    %2939 = vrot.lane.b32.xlu0 %v2364, 116
    %v2940 = vpop.permute.xlu0 %2939
    %2941 = vrot.lane.b32.xlu0 %v2365, 116
    %v2942 = vpop.permute.xlu0 %2941
    %2943 = vrot.lane.b32.xlu0 %v2366, 116
    %v2944 = vpop.permute.xlu0 %2943
    %2945 = vrot.lane.b32.xlu0 %v2367, 116
    %v2946 = vpop.permute.xlu0 %2945
    %v2955 = vsel %vm69, %v2932, 0.0
    %2956 = vadd.xlane.f32.xlu0 %v2955
    %v2957 = vpop.xlane.xlu0 %2956
    %v2958 = vsel %vm69, %v2934, 0.0
    %2959 = vadd.xlane.f32.xlu0 %v2958
    %v2960 = vpop.xlane.xlu0 %2959
    %v2961 = vsel %vm69, %v2936, 0.0
    %2962 = vadd.xlane.f32.xlu0 %v2961
    %v2963 = vpop.xlane.xlu0 %2962
    %v2964 = vsel %vm69, %v2938, 0.0
    %2965 = vadd.xlane.f32.xlu0 %v2964
    %v2966 = vpop.xlane.xlu0 %2965
    %v2967 = vsel %vm69, %v2940, 0.0
    %2968 = vadd.xlane.f32.xlu0 %v2967
    %v2969 = vpop.xlane.xlu0 %2968
    %v2970 = vsel %vm69, %v2942, 0.0
    %2971 = vadd.xlane.f32.xlu0 %v2970
    %v2972 = vpop.xlane.xlu0 %2971
    %v2973 = vsel %vm69, %v2944, 0.0
    %2974 = vadd.xlane.f32.xlu0 %v2973
    %v2975 = vpop.xlane.xlu0 %2974
    %v2976 = vsel %vm69, %v2946, 0.0
    %2977 = vadd.xlane.f32.xlu0 %v2976
    %v2978 = vpop.xlane.xlu0 %2977
    %v2987 = vlaneseq
    %v2988 = vshrl.u32 %v2987, 7
    %v2989 = vsub.s32 %v103, %v2988
    %v2990 = vrot.slane %v2957, %v2989
    %v2991 = vlaneseq
    %v2992 = vshrl.u32 %v2991, 7
    %v2993 = vsub.s32 %v103, %v2992
    %v2994 = vrot.slane %v2960, %v2993
    %v2995 = vlaneseq
    %v2996 = vshrl.u32 %v2995, 7
    %v2997 = vsub.s32 %v103, %v2996
    %v2998 = vrot.slane %v2963, %v2997
    %v2999 = vlaneseq
    %v3000 = vshrl.u32 %v2999, 7
    %v3001 = vsub.s32 %v103, %v3000
    %v3002 = vrot.slane %v2966, %v3001
    %v3003 = vlaneseq
    %v3004 = vshrl.u32 %v3003, 7
    %v3005 = vsub.s32 %v103, %v3004
    %v3006 = vrot.slane %v2969, %v3005
    %v3007 = vlaneseq
    %v3008 = vshrl.u32 %v3007, 7
    %v3009 = vsub.s32 %v103, %v3008
    %v3010 = vrot.slane %v2972, %v3009
    %v3011 = vlaneseq
    %v3012 = vshrl.u32 %v3011, 7
    %v3013 = vsub.s32 %v103, %v3012
    %v3014 = vrot.slane %v2975, %v3013
    %v3015 = vlaneseq
    %v3016 = vshrl.u32 %v3015, 7
    %v3017 = vsub.s32 %v103, %v3016
    %v3018 = vrot.slane %v2978, %v3017
    %v3019 = vsel %vm136, %v2994, %v2990
    %v3020 = vsel %vm138, %v2998, %v3019
    %v3021 = vsel %vm140, %v3002, %v3020
    %v3022 = vsel %vm136, %v3010, %v3006
    %v3023 = vsel %vm138, %v3014, %v3022
    %v3024 = vsel %vm140, %v3018, %v3023
    %v3027 = vsel %vm69, %v3021, 0.0
    %3028 = vadd.xlane.f32.xlu0 %v3027
    %v3029 = vpop.xlane.xlu0 %3028
    %v3030 = vsel %vm69, %v3024, 0.0
    %3031 = vadd.xlane.f32.xlu0 %v3030
    %v3032 = vpop.xlane.xlu0 %3031
    %v3033 = vmul.f32 %v3029, 0.0625
    %v3034 = vmul.f32 %v3032, 0.0625
    %s3035 = scalar_lea.vmem [#allocation6], 60
    %v3036 = vld [vmem:[%s3035] sm:$0xf]
    %v3039 = vlaneseq
    %v3040 = vshrl.u32 %v3039, 7
    %v3041 = vsub.s32 %v103, %v3040
    %v3042 = vrot.slane %v3033, %v3041
    %v3043 = vlaneseq
    %v3044 = vshrl.u32 %v3043, 7
    %v3045 = vsub.s32 %v103, %v3044
    %v3046 = vrot.slane %v3034, %v3045
    %v3047 = vsel %vm136, %v3046, %v3042
    %v3048 = vsel %vm167, %v3047, 0
    %v3051 = vsel %vm170, %v3036, 0
    %3053 = vmatprep.subr.mxu0 0.0
    %3054 = vmatpush1.msra.mxu0 %v3051
    %3055 = vmatprep.subr.mxu0 0.0
    %3056 = vmatpush1.msra.mxu0 0.0
    %3057 = vmatprep.subr.mxu0 0.0
    %3058 = vmatpush1.msra.mxu0 0.0
    %3059 = vmatprep.subr.mxu0 0.0
    %3060 = vmatpush1.msra.mxu0 0.0
    %3061 = vmatprep.subr.mxu0 0.0
    %3062 = vmatpush1.msra.mxu0 0.0
    %3063 = vmatprep.subr.mxu0 0.0
    %3064 = vmatpush1.msra.mxu0 0.0
    %3065 = vmatprep.subr.mxu0 0.0
    %3066 = vmatpush1.msra.mxu0 0.0
    %3067 = vmatprep.subr.mxu0 0.0
    %3068 = vmatpush1.msra.mxu0 0.0
    %3069 = vmatprep.subr.mxu0 0.0
    %3070 = vmatpush1.msra.mxu0 0.0
    %3071 = vmatprep.subr.mxu0 0.0
    %3072 = vmatpush1.msra.mxu0 0.0
    %3073 = vmatprep.subr.mxu0 0.0
    %3074 = vmatpush1.msra.mxu0 0.0
    %3075 = vmatprep.subr.mxu0 0.0
    %3076 = vmatpush1.msra.mxu0 0.0
    %3077 = vmatprep.subr.mxu0 0.0
    %3078 = vmatpush1.msra.mxu0 0.0
    %3079 = vmatprep.subr.mxu0 0.0
    %3080 = vmatpush1.msra.mxu0 0.0
    %3081 = vmatprep.subr.mxu0 0.0
    %3082 = vmatpush1.msra.mxu0 0.0
    %3083 = vmatprep.subr.mxu0 0.0
    %3084 = vmatpush1.msra.mxu0 0.0
    %3085 = vmatprep.subr.mxu0 0.0
    %3086 = vmatpush1.msra.mxu0 0.0
    %3087 = vmatprep.subr.mxu0 0.0
    %3088 = vmatpush1.msra.mxu0 0.0
    %3089 = vmatprep.subr.mxu0 0.0
    %3090 = vmatpush1.msra.mxu0 0.0
    %3091 = vmatprep.subr.mxu0 0.0
    %3092 = vmatpush1.msra.mxu0 0.0
    %3093 = vmatprep.subr.mxu0 0.0
    %3094 = vmatpush1.msra.mxu0 0.0
    %3095 = vmatprep.subr.mxu0 0.0
    %3096 = vmatpush1.msra.mxu0 0.0
    %3097 = vmatprep.subr.mxu0 0.0
    %3098 = vmatpush1.msra.mxu0 0.0
    %3099 = vmatprep.subr.mxu0 0.0
    %3100 = vmatpush1.msra.mxu0 0.0
    %3101 = vmatprep.subr.mxu0 0.0
    %3102 = vmatpush1.msra.mxu0 0.0
    %3103 = vmatprep.subr.mxu0 0.0
    %3104 = vmatpush1.msra.mxu0 0.0
    %3105 = vmatprep.subr.mxu0 0.0
    %3106 = vmatpush1.msra.mxu0 0.0
    %3107 = vmatprep.subr.mxu0 0.0
    %3108 = vmatpush1.msra.mxu0 0.0
    %3109 = vmatprep.subr.mxu0 0.0
    %3110 = vmatpush1.msra.mxu0 0.0
    %3111 = vmatprep.subr.mxu0 0.0
    %3112 = vmatpush1.msra.mxu0 0.0
    %3113 = vmatprep.subr.mxu0 0.0
    %3114 = vmatpush1.msra.mxu0 0.0
    %3115 = vmatprep.subr.mxu0 0.0
    %3116 = vmatpush1.msra.mxu0 0.0
    %3117 = vmatprep.mubr.f32.mxu0 0.0
    %3118 = vmatmul.mubr.f32.gmra.mrb[0].mxu0 %v3048
    %v3119 = vpop.f32.mrb[0].mxu0
    %v3120 = vadd.f32 0.0, %v3119
    %v3121 = vpop.f32.mrb[0].mxu0
    %3122 = vdwg.mxu0
    %v3123 = vadd.f32 %v2930, %v3120
    %vm3124 = vcmask 58368
    %3125 = vst.msk [vmem:[#allocation2] sm:$0x3] %vm3124, %v3123
    // Predicated region
    $region30: #{tpu_custom_call.1} parent=1 // pred_check
      %p3126 = pneg %p54
    $region31: #{tpu_custom_call.1} parent=1 // pred_check_branch
      %3128 = sbr.rel (%p3126) target = $region33
    $region32: #{tpu_custom_call.1} parent=1 // pred_region
      %v3129 = vld [vmem:[#allocation2] sm:$0x3]
      %vm3130 = vcmp.gt.f32.partialorder %v3129, 0.0
      %v3131 = vmul.f32 %v3129, 0.1
      %v3132 = vsel %vm3130, %v3129, %v3131
      %v3133 = vld [vmem:[#allocation8] sm:$0xff]
      %vm3134 = vcmask 64512
      %v3136 = vsel %vm3134, %v3132, 0
      %3138 = vmatprep.subr.mxu0 0.0
      %3139 = vmatpush1.msra.mxu0 %v3133
      %3140 = vmatprep.subr.mxu0 0.0
      %3141 = vmatpush1.msra.mxu0 0.0
      %3142 = vmatprep.subr.mxu0 0.0
      %3143 = vmatpush1.msra.mxu0 0.0
      %3144 = vmatprep.subr.mxu0 0.0
      %3145 = vmatpush1.msra.mxu0 0.0
      %3146 = vmatprep.subr.mxu0 0.0
      %3147 = vmatpush1.msra.mxu0 0.0
      %3148 = vmatprep.subr.mxu0 0.0
      %3149 = vmatpush1.msra.mxu0 0.0
      %3150 = vmatprep.subr.mxu0 0.0
      %3151 = vmatpush1.msra.mxu0 0.0
      %3152 = vmatprep.subr.mxu0 0.0
      %3153 = vmatpush1.msra.mxu0 0.0
      %3154 = vmatprep.subr.mxu0 0.0
      %3155 = vmatpush1.msra.mxu0 0.0
      %3156 = vmatprep.subr.mxu0 0.0
      %3157 = vmatpush1.msra.mxu0 0.0
      %3158 = vmatprep.subr.mxu0 0.0
      %3159 = vmatpush1.msra.mxu0 0.0
      %3160 = vmatprep.subr.mxu0 0.0
      %3161 = vmatpush1.msra.mxu0 0.0
      %3162 = vmatprep.subr.mxu0 0.0
      %3163 = vmatpush1.msra.mxu0 0.0
      %3164 = vmatprep.subr.mxu0 0.0
      %3165 = vmatpush1.msra.mxu0 0.0
      %3166 = vmatprep.subr.mxu0 0.0
      %3167 = vmatpush1.msra.mxu0 0.0
      %3168 = vmatprep.subr.mxu0 0.0
      %3169 = vmatpush1.msra.mxu0 0.0
      %3170 = vmatprep.subr.mxu0 0.0
      %3171 = vmatpush1.msra.mxu0 0.0
      %3172 = vmatprep.subr.mxu0 0.0
      %3173 = vmatpush1.msra.mxu0 0.0
      %3174 = vmatprep.subr.mxu0 0.0
      %3175 = vmatpush1.msra.mxu0 0.0
      %3176 = vmatprep.subr.mxu0 0.0
      %3177 = vmatpush1.msra.mxu0 0.0
      %3178 = vmatprep.subr.mxu0 0.0
      %3179 = vmatpush1.msra.mxu0 0.0
      %3180 = vmatprep.subr.mxu0 0.0
      %3181 = vmatpush1.msra.mxu0 0.0
      %3182 = vmatprep.subr.mxu0 0.0
      %3183 = vmatpush1.msra.mxu0 0.0
      %3184 = vmatprep.subr.mxu0 0.0
      %3185 = vmatpush1.msra.mxu0 0.0
      %3186 = vmatprep.subr.mxu0 0.0
      %3187 = vmatpush1.msra.mxu0 0.0
      %3188 = vmatprep.subr.mxu0 0.0
      %3189 = vmatpush1.msra.mxu0 0.0
      %3190 = vmatprep.subr.mxu0 0.0
      %3191 = vmatpush1.msra.mxu0 0.0
      %3192 = vmatprep.subr.mxu0 0.0
      %3193 = vmatpush1.msra.mxu0 0.0
      %3194 = vmatprep.subr.mxu0 0.0
      %3195 = vmatpush1.msra.mxu0 0.0
      %3196 = vmatprep.subr.mxu0 0.0
      %3197 = vmatpush1.msra.mxu0 0.0
      %3198 = vmatprep.subr.mxu0 0.0
      %3199 = vmatpush1.msra.mxu0 0.0
      %3200 = vmatprep.subr.mxu0 0.0
      %3201 = vmatpush1.msra.mxu0 0.0
      %3202 = vmatprep.mubr.f32.mxu0 0.0
      %3203 = vmatmul.mubr.f32.gmra.mrb[0].mxu0 %v3136
      %v3204 = vpop.f32.mrb[0].mxu0
      %v3205 = vadd.f32 0.0, %v3204
      %v3206 = vpop.f32.mrb[0].mxu0
      %3207 = vdwg.mxu0
      %v3208 = vsub.f32 0.0, %v3205
      %v3209 = vmul.f32 %v3208, 1.442695
      %v3210 = vpow.pop %v3209
      %v3211 = vadd.f32 %v3210, 1.0
      %v3212 = vrcp.pop %v3211
      %v3213 = vmul.f32 1.0, %v3212
      %3214 = vst.msk [vmem:[#allocation9] sm:$0x3] %vm3124, %v3213
    $region33: #{tpu_custom_call.1} parent=1 // pred_fallthru
      _
    // Predicated region
    $region34: #{tpu_custom_call.1} parent=1 // pred_check
      _
    $region35: #{tpu_custom_call.1} parent=1 // pred_check_branch
      %3216 = sbr.rel (0) target = $region37
    $region36: #{tpu_custom_call.1} parent=1 // pred_region
      %s3218 = ssub.s32 32, 32
      %3219 = vsyncadd [#allocation5], %s3218
      %s3221 = sshll.u32 [#allocation9], 4
      %s3222 = int_to_ptr.vmem [resolvable:$true] %s3221
      %3224 = dma.vmem_to_hbm [thread:$0]  %s3222, 32, %s3, [#allocation5]
    $region37: #{tpu_custom_call.1} parent=1 // pred_fallthru
      _
    // Predicated region
    $region38: #{tpu_custom_call.1} parent=1 // pred_check
      _
    $region39: #{tpu_custom_call.1} parent=1 // pred_check_branch
      %3226 = sbr.rel (0) target = $region41
    $region40: #{tpu_custom_call.1} parent=1 // pred_region
      %3227 = dma.done [#allocation5], 32
    $region41: #{tpu_custom_call.1} parent=1 // pred_fallthru
      _
    %3228 = vsyncpa [#allocation4], 1
    %3229 = vsyncpa [#allocation7], 1
    %3230 = vsyncpa [#allocation5], 1

</llo_original>
